<compile_context>
chip_gen: v5e
topology: v5e:2x2
jax: 0.10.0
libtpu: 0.0.40
codegen_flags: <defaults>
</compile_context>

<pallas_src>
import functools

import jax
import jax.numpy as jnp
from jax import lax
from jax.experimental import pallas as pl
from jax.experimental.pallas import tpu as pltpu


def _round_up(v, m):
    return (v + m - 1) // m * m


# ----------------------------------------------------------------------------
# Fused Linear -> ReLU -> Linear (node / edge encoders), row-tiled grid
# ----------------------------------------------------------------------------

def _mlp2_kernel(x_ref, w1_ref, b1_ref, w2_ref, b2_ref, o_ref):
    h = jnp.dot(x_ref[...], w1_ref[...], preferred_element_type=jnp.float32)
    h = jnp.maximum(h + b1_ref[...], 0.0)
    o = jnp.dot(h, w2_ref[...], preferred_element_type=jnp.float32) + b2_ref[...]
    o_ref[...] = o.astype(o_ref.dtype)


def mlp2(x, w1, b1, w2, b2, *, row_tile=1024):
    rows, fin = x.shape
    fout = w2.shape[1]
    tr = min(row_tile, _round_up(rows, 8))
    rows_p = _round_up(rows, tr)
    if rows_p != rows:
        x = jnp.pad(x, ((0, rows_p - rows), (0, 0)))
    out = pl.pallas_call(
        _mlp2_kernel,
        out_shape=jax.ShapeDtypeStruct((rows_p, fout), jnp.float32),
        grid=(rows_p // tr,),
        in_specs=[
            pl.BlockSpec((tr, fin), lambda i: (i, 0)),
            pl.BlockSpec(w1.shape, lambda i: (0, 0)),
            pl.BlockSpec(b1.shape, lambda i: (0, 0)),
            pl.BlockSpec(w2.shape, lambda i: (0, 0)),
            pl.BlockSpec(b2.shape, lambda i: (0, 0)),
        ],
        out_specs=pl.BlockSpec((tr, fout), lambda i: (i, 0)),
        compiler_params=pltpu.CompilerParams(dimension_semantics=("parallel",)),
    )(x, w1, b1, w2, b2)
    return out[:rows]


# ----------------------------------------------------------------------------
# One GAT processor layer: single pass over edge tiles, online segment softmax
# ----------------------------------------------------------------------------

def _gat_layer_kernel(x_ref, e_ref, src_oh_ref, dst_oh_ref,
                      w_ref, b_ref, we_ref, be_ref, att_ref,
                      ox_ref, oe_ref,
                      h1s_sc, scol_sc, m_sc, acc_sc):
    t = pl.program_id(0)
    nt = pl.num_programs(0)
    hdim = w_ref.shape[1]
    n = x_ref.shape[0]

    # ---- once per layer: project nodes, build [h | 1 | s], reset running state ----
    @pl.when(t == 0)
    def _init():
        h = jnp.dot(x_ref[...], w_ref[...],
                    preferred_element_type=jnp.float32) + b_ref[...]          # [N,H]
        s_col = jnp.sum(h * att_ref[...], axis=1, keepdims=True)              # [N,1]
        h1s_sc[:, :hdim] = h.astype(jnp.bfloat16)
        h1s_sc[:, hdim:hdim + 1] = jnp.ones((n, 1), jnp.bfloat16)
        h1s_sc[:, hdim + 1:] = s_col.astype(jnp.bfloat16)
        scol_sc[...] = s_col.astype(jnp.bfloat16)
        m_sc[...] = jnp.full(m_sc.shape, -1e30, jnp.bfloat16)
        acc_sc[...] = jnp.zeros(acc_sc.shape, jnp.float32)

    src_oh = src_oh_ref[...]        # [TE,N] bf16 (padded edges = all-zero rows)
    dst_oh = dst_oh_ref[...]        # [TE,N] bf16
    e = e_ref[...]                  # [TE,H] f32
    att = att_ref[...]              # [1,H]  f32

    # edge projection + residual edge update (once per tile in the single pass)
    ep = jnp.dot(e, we_ref[...], preferred_element_type=jnp.float32) + be_ref[...]
    oe_ref[...] = jnp.maximum(e + ep, 0.0).astype(oe_ref.dtype)

    # src-side gather: [h_src | 1 | s_src] in ONE matmul
    g = jnp.dot(src_oh, h1s_sc[...], preferred_element_type=jnp.float32)      # [TE,H+2]
    s_src = g[:, hdim + 1:hdim + 2]                                           # [TE,1]

    # dst-side gather of s (narrow matmul)
    s_dst = jnp.dot(dst_oh, scol_sc[...], preferred_element_type=jnp.float32)  # [TE,1]

    t_e = jnp.sum(ep * att, axis=1, keepdims=True)                            # [TE,1]
    logit = s_src + s_dst + t_e
    logit = jnp.where(logit > 0.0, logit, 0.2 * logit)                        # LeakyReLU(0.2)

    # ---- online per-destination max (tile segment max -> running max update) ----
    lmask = jnp.where(dst_oh > 0, logit, -1e30)                               # [TE,N]
    tmax_row = jnp.max(lmask, axis=0, keepdims=True)                          # [1,N]
    tmax_col = jnp.transpose(jnp.broadcast_to(tmax_row, (8, n)))[:, :1]       # [N,1]

    m_old = m_sc[...].astype(jnp.float32)                                     # [N,1]
    m_new_bf = jnp.maximum(m_old, tmax_col).astype(jnp.bfloat16)              # [N,1] bf16
    m_sc[...] = m_new_bf
    m_new = m_new_bf.astype(jnp.float32)
    alpha = jnp.exp(jnp.maximum(m_old - m_new, -100.0))                       # [N,1], <= 1

    # gather the updated max at dst via an MXU matmul (replaces masked select+reduce)
    m_dst = jnp.dot(dst_oh, m_new_bf, preferred_element_type=jnp.float32)     # [TE,1]

    # exp(logit - m[dst]); padded edges are harmless (all-zero dst_oh rows)
    p = jnp.exp(logit - m_dst)                                                # [TE,1]
    pm = (p * g[:, :hdim + 1]).astype(jnp.bfloat16)                           # [TE,H+1] = [p*h_src | p]

    # fused numerator | denominator segment sum + online rescale of the accumulator
    seg = lax.dot_general(dst_oh, pm, (((0,), (0,)), ((), ())),
                          preferred_element_type=jnp.float32)                 # [N,H+1]
    acc_sc[...] = acc_sc[...] * alpha + seg

    # ---- finalize: residual node update with softmax normalization ----
    @pl.when(t == nt - 1)
    def _finalize():
        acc = acc_sc[...]
        num = acc[:, :hdim]
        den = acc[:, hdim:]
        upd = num * pl.reciprocal(den + 1e-9, approx=True)
        ox_ref[...] = jnp.maximum(x_ref[...] + upd, 0.0).astype(ox_ref.dtype)


def gat_layer(x, e, src_oh, dst_oh, w, b, we, be, att, *, edge_tile,
              vmem_limit_bytes):
    n, hdim = x.shape
    e_pad = e.shape[0]
    nt = e_pad // edge_tile
    return pl.pallas_call(
        _gat_layer_kernel,
        out_shape=(jax.ShapeDtypeStruct((n, hdim), jnp.float32),
                   jax.ShapeDtypeStruct((e_pad, hdim), jnp.float32)),
        grid=(nt,),
        in_specs=[
            pl.BlockSpec((n, hdim), lambda t: (0, 0)),          # x (resident)
            pl.BlockSpec((edge_tile, hdim), lambda t: (t, 0)),  # e tile
            pl.BlockSpec((edge_tile, n), lambda t: (t, 0)),     # src one-hot (bf16)
            pl.BlockSpec((edge_tile, n), lambda t: (t, 0)),     # dst one-hot (bf16)
            pl.BlockSpec((hdim, hdim), lambda t: (0, 0)),       # W
            pl.BlockSpec((1, hdim), lambda t: (0, 0)),          # b
            pl.BlockSpec((hdim, hdim), lambda t: (0, 0)),       # We
            pl.BlockSpec((1, hdim), lambda t: (0, 0)),          # be
            pl.BlockSpec((1, hdim), lambda t: (0, 0)),          # attention vector
        ],
        out_specs=(pl.BlockSpec((n, hdim), lambda t: (0, 0)),
                   pl.BlockSpec((edge_tile, hdim), lambda t: (t, 0))),
        scratch_shapes=[
            pltpu.VMEM((n, hdim + 2), jnp.bfloat16),   # [h | 1 | s]
            pltpu.VMEM((n, 1), jnp.bfloat16),          # s column for dst gather
            pltpu.VMEM((n, 1), jnp.bfloat16),          # per-dst running max
            pltpu.VMEM((n, hdim + 1), jnp.float32),    # [sum p*h_src | sum p]
        ],
        compiler_params=pltpu.CompilerParams(
            dimension_semantics=("arbitrary",),
            vmem_limit_bytes=vmem_limit_bytes),
    )(x, e, src_oh, dst_oh, w, b, we, be, att)


# ----------------------------------------------------------------------------
# Fused ScorePredictor: x[src]@W1a + x[dst]@W1b + e@W1c + b1 -> ReLU -> @w2 + b2
# ----------------------------------------------------------------------------

def _predictor_kernel(src_oh_ref, dst_oh_ref, e_ref, x_ref,
                      w1ab_ref, w1c_ref, b1_ref, w2r_ref, b2_ref,
                      o_ref, xab_sc):
    s = w1c_ref.shape[1]

    @pl.when(pl.program_id(0) == 0)
    def _init():
        # single x @ [w1a | w1b] node projection, sliced for the two gathers
        xab_sc[...] = jnp.dot(x_ref[...], w1ab_ref[...],
                              preferred_element_type=jnp.float32).astype(jnp.bfloat16)

    hidden = (jnp.dot(src_oh_ref[...], xab_sc[:, :s], preferred_element_type=jnp.float32)
              + jnp.dot(dst_oh_ref[...], xab_sc[:, s:], preferred_element_type=jnp.float32)
              + jnp.dot(e_ref[...], w1c_ref[...], preferred_element_type=jnp.float32)
              + b1_ref[...])
    hidden = jnp.maximum(hidden, 0.0)
    # final [*,1] matmul replaced by a lane reduction
    score = jnp.sum(hidden * w2r_ref[...], axis=1, keepdims=True) + b2_ref[...]
    o_ref[...] = score.astype(o_ref.dtype)


def score_predictor(x, e, src_oh, dst_oh, w1, b1, w2, b2, *, edge_tile,
                    vmem_limit_bytes):
    n, hdim = x.shape
    e_pad = e.shape[0]
    s = w1.shape[1]
    nt = e_pad // edge_tile
    w1ab = jnp.concatenate([w1[:hdim], w1[hdim:2 * hdim]], axis=1)   # [H, 2S]
    w1c = w1[2 * hdim:]                                              # [H, S]
    w2r = w2.T                                                       # [1, S]
    out = pl.pallas_call(
        _predictor_kernel,
        out_shape=jax.ShapeDtypeStruct((e_pad, 1), jnp.float32),
        grid=(nt,),
        in_specs=[
            pl.BlockSpec((edge_tile, n), lambda t: (t, 0)),
            pl.BlockSpec((edge_tile, n), lambda t: (t, 0)),
            pl.BlockSpec((edge_tile, hdim), lambda t: (t, 0)),
            pl.BlockSpec((n, hdim), lambda t: (0, 0)),
            pl.BlockSpec((hdim, 2 * s), lambda t: (0, 0)),
            pl.BlockSpec((hdim, s), lambda t: (0, 0)),
            pl.BlockSpec((1, s), lambda t: (0, 0)),
            pl.BlockSpec((1, s), lambda t: (0, 0)),
            pl.BlockSpec((1, 1), lambda t: (0, 0)),
        ],
        out_specs=pl.BlockSpec((edge_tile, 1), lambda t: (t, 0)),
        scratch_shapes=[pltpu.VMEM((n, 2 * s), jnp.bfloat16)],
        compiler_params=pltpu.CompilerParams(
            dimension_semantics=("arbitrary",),
            vmem_limit_bytes=vmem_limit_bytes),
    )(src_oh, dst_oh, e, x, w1ab, w1c, b1, w2r, b2)
    return out


# ----------------------------------------------------------------------------
# Parameter init (deterministic, PyTorch-Linear-style uniform fan-in init)
# ----------------------------------------------------------------------------

def _dense_init(key, fan_in, fan_out):
    kw, kb = jax.random.split(key)
    scale = 1.0 / jnp.sqrt(jnp.float32(fan_in))
    w = jax.random.uniform(kw, (fan_in, fan_out), jnp.float32, -scale, scale)
    b = jax.random.uniform(kb, (1, fan_out), jnp.float32, -scale, scale)
    return w, b


def init_gat_model_params(key, num_node_features, num_edge_features,
                          num_intermediate, num_hidden, num_layers,
                          num_hidden_edge_scores):
    keys = jax.random.split(key, 6 + 3 * num_layers)
    p = {}
    p["l1n_w"], p["l1n_b"] = _dense_init(keys[0], num_node_features, num_intermediate)
    p["l2n_w"], p["l2n_b"] = _dense_init(keys[1], num_intermediate, num_hidden)
    p["l1e_w"], p["l1e_b"] = _dense_init(keys[2], num_edge_features, num_intermediate)
    p["l2e_w"], p["l2e_b"] = _dense_init(keys[3], num_intermediate, num_hidden)
    p["gnn"] = []
    for li in range(num_layers):
        kw, kwe, ka = keys[4 + 3 * li], keys[5 + 3 * li], keys[6 + 3 * li]
        w, b = _dense_init(kw, num_hidden, num_hidden)
        we, be = _dense_init(kwe, num_hidden, num_hidden)
        scale = 1.0 / jnp.sqrt(jnp.float32(num_hidden))
        att = jax.random.uniform(ka, (1, num_hidden), jnp.float32, -scale, scale)
        p["gnn"].append({"w": w, "b": b, "we": we, "be": be, "att": att})
    p["pred1_w"], p["pred1_b"] = _dense_init(keys[-2], num_hidden * 3, num_hidden_edge_scores)
    p["pred2_w"], p["pred2_b"] = _dense_init(keys[-1], num_hidden_edge_scores, 1)
    return p


# ----------------------------------------------------------------------------
# Forward pass (mirrors GATModel.forward)
# ----------------------------------------------------------------------------

def _pick_edge_tile(num_edges, n_pad, requested):
    te = min(requested, _round_up(num_edges, 16))
    # keep double-buffered bf16 one-hot tiles (src+dst x 2 buffers) under ~24 MiB
    budget = 24 * 1024 * 1024
    max_te = max(16, (budget // (8 * n_pad)) // 16 * 16)
    return max(16, min(te, max_te))


def gat_model_forward(params, src, dst, x, e, num_nodes, *, edge_tile=256):
    num_edges = src.shape[0]
    vmem_limit = 64 * 1024 * 1024

    # Node / edge encoders: Linear -> ReLU -> Linear (fused, row-tiled Pallas kernel).
    x = mlp2(x, params["l1n_w"], params["l1n_b"], params["l2n_w"], params["l2n_b"])
    e = mlp2(e, params["l1e_w"], params["l1e_b"], params["l2e_w"], params["l2e_b"])

    # Pad graph to tile-friendly sizes (lane-aligned nodes, bf16-sublane-aligned edges).
    n_pad = _round_up(num_nodes, 128)
    te = _pick_edge_tile(num_edges, n_pad, edge_tile)
    e_pad = _round_up(num_edges, te)

    x = jnp.pad(x, ((0, n_pad - num_nodes), (0, 0)))
    e = jnp.pad(e, ((0, e_pad - num_edges), (0, 0)))
    src_p = jnp.pad(src, (0, e_pad - num_edges), constant_values=-1)
    dst_p = jnp.pad(dst, (0, e_pad - num_edges), constant_values=-1)

    # bf16 incidence matrices (exact 0/1), built once and shared by all layers.
    src_oh = jax.nn.one_hot(src_p, n_pad, dtype=jnp.bfloat16)   # [E_pad, N_pad]
    dst_oh = jax.nn.one_hot(dst_p, n_pad, dtype=jnp.bfloat16)   # [E_pad, N_pad]

    # GAT processor layers (single-pass online segment softmax inside the kernel).
    for lp in params["gnn"]:
        x, e = gat_layer(x, e, src_oh, dst_oh,
                         lp["w"], lp["b"], lp["we"], lp["be"], lp["att"],
                         edge_tile=te, vmem_limit_bytes=vmem_limit)

    # Fused ScorePredictor (no [E, 3H] concat materialized).
    scores = score_predictor(x, e, src_oh, dst_oh,
                             params["pred1_w"], params["pred1_b"],
                             params["pred2_w"], params["pred2_b"],
                             edge_tile=te, vmem_limit_bytes=vmem_limit)
    return scores[:num_edges]


# ----------------------------------------------------------------------------
# Demo
# ----------------------------------------------------------------------------

if __name__ == "__main__":
    N, E = 16, 48
    num_node_features = 8
    num_edge_features = 4
    num_intermediate = 16
    num_hidden = 32
    num_layers = 2
    num_hidden_edge_scores = 16

    key = jax.random.PRNGKey(0)
    k1, k2, k3, k4, kp = jax.random.split(key, 5)
    x = jax.random.normal(k1, (N, num_node_features), jnp.float32)
    e = jax.random.normal(k2, (E, num_edge_features), jnp.float32)
    src = jax.random.randint(k3, (E,), 0, N)
    dst = jax.random.randint(k4, (E,), 0, N)

    params = init_gat_model_params(kp, num_node_features, num_edge_features,
                                   num_intermediate, num_hidden, num_layers,
                                   num_hidden_edge_scores)

    fwd = jax.jit(functools.partial(gat_model_forward, num_nodes=N))
    scores = fwd(params, src, dst, x, e)
    jax.block_until_ready(scores)
    assert scores.shape == (E, 1) and scores.dtype == jnp.float32
    assert bool(jnp.all(jnp.isfinite(scores)))
    print("KERNEL_OK")
</pallas_src>

<mosaic_0001>
module attributes {stable_mosaic.version = 11 : i64} {
  func.func @_mlp2_kernel(%arg0: i32, %arg1: memref<16x8xf32, #tpu.memory_space<vmem>>, %arg2: memref<8x16xf32, #tpu.memory_space<vmem>>, %arg3: memref<1x16xf32, #tpu.memory_space<vmem>>, %arg4: memref<16x32xf32, #tpu.memory_space<vmem>>, %arg5: memref<1x32xf32, #tpu.memory_space<vmem>>, %arg6: memref<16x32xf32, #tpu.memory_space<vmem>>) attributes {dimension_semantics = [#tpu.dimension_semantics<parallel>], iteration_bounds = array<i64: 1>, scalar_prefetch = 0 : i64, scratch_operands = 0 : i64, tpu.core_type = #tpu.core_type<tc>, window_params = [{transform_indices = @transform_0, window_bounds = array<i64: 16, 8>}, {pipeline_mode = #tpu.pipeline_mode<synchronous>, transform_indices = @transform_1, window_bounds = array<i64: 8, 16>}, {pipeline_mode = #tpu.pipeline_mode<synchronous>, transform_indices = @transform_2, window_bounds = array<i64: 1, 16>}, {pipeline_mode = #tpu.pipeline_mode<synchronous>, transform_indices = @transform_3, window_bounds = array<i64: 16, 32>}, {pipeline_mode = #tpu.pipeline_mode<synchronous>, transform_indices = @transform_4, window_bounds = array<i64: 1, 32>}, {transform_indices = @transform_5, window_bounds = array<i64: 16, 32>}]} {
    %c0 = arith.constant 0 : index
    %c0_0 = arith.constant 0 : index
    %0 = vector.load %arg1[%c0, %c0_0] : memref<16x8xf32, #tpu.memory_space<vmem>>, vector<16x8xf32>
    %c0_1 = arith.constant 0 : index
    %c0_2 = arith.constant 0 : index
    %1 = vector.load %arg2[%c0_1, %c0_2] : memref<8x16xf32, #tpu.memory_space<vmem>>, vector<8x16xf32>
    %cst = arith.constant dense<0.000000e+00> : vector<16x16xf32>
    %2 = tpu.matmul %0, %1, %cst {dimension_numbers = #tpu.dot_dimension_numbers<[1], [0], [0], [1], [0, 0, 1, 1], [], []>} : vector<16x8xf32>, vector<8x16xf32>, vector<16x16xf32> -> vector<16x16xf32>
    %c0_3 = arith.constant 0 : index
    %c0_4 = arith.constant 0 : index
    %3 = vector.load %arg3[%c0_3, %c0_4] : memref<1x16xf32, #tpu.memory_space<vmem>>, vector<1x16xf32>
    %4 = vector.broadcast %3 : vector<1x16xf32> to vector<16x16xf32>
    %5 = arith.addf %2, %4 : vector<16x16xf32>
    %cst_5 = arith.constant 0.000000e+00 : f32
    %6 = vector.broadcast %cst_5 : f32 to vector<16x16xf32>
    %7 = arith.maximumf %5, %6 : vector<16x16xf32>
    %c0_6 = arith.constant 0 : index
    %c0_7 = arith.constant 0 : index
    %8 = vector.load %arg4[%c0_6, %c0_7] : memref<16x32xf32, #tpu.memory_space<vmem>>, vector<16x32xf32>
    %cst_8 = arith.constant dense<0.000000e+00> : vector<16x32xf32>
    %9 = tpu.matmul %7, %8, %cst_8 {dimension_numbers = #tpu.dot_dimension_numbers<[1], [0], [0], [1], [0, 0, 1, 1], [], []>} : vector<16x16xf32>, vector<16x32xf32>, vector<16x32xf32> -> vector<16x32xf32>
    %c0_9 = arith.constant 0 : index
    %c0_10 = arith.constant 0 : index
    %10 = vector.load %arg5[%c0_9, %c0_10] : memref<1x32xf32, #tpu.memory_space<vmem>>, vector<1x32xf32>
    %11 = vector.broadcast %10 : vector<1x32xf32> to vector<16x32xf32>
    %12 = arith.addf %9, %11 : vector<16x32xf32>
    %c0_11 = arith.constant 0 : index
    %c0_12 = arith.constant 0 : index
    %13 = vector.load %arg6[%c0_11, %c0_12] : memref<16x32xf32, #tpu.memory_space<vmem>>, vector<16x32xf32>
    tpu.vector_store %arg6[%c0_11, %c0_12], %12 {strides = array<i32>} : memref<16x32xf32, #tpu.memory_space<vmem>>, vector<16x32xf32>,
    return
  }
  func.func @transform_0(%arg0: i32) -> (i32, i32) {
    %c0_i32 = arith.constant 0 : i32
    %c0_i32_0 = arith.constant 0 : i32
    return %arg0, %c0_i32 : i32, i32
  }
  func.func @transform_1(%arg0: i32) -> (i32, i32) {
    %c0_i32 = arith.constant 0 : i32
    %c0_i32_0 = arith.constant 0 : i32
    %c0_i32_1 = arith.constant 0 : i32
    return %c0_i32, %c0_i32_0 : i32, i32
  }
  func.func @transform_2(%arg0: i32) -> (i32, i32) {
    %c0_i32 = arith.constant 0 : i32
    %c0_i32_0 = arith.constant 0 : i32
    %c0_i32_1 = arith.constant 0 : i32
    return %c0_i32, %c0_i32_0 : i32, i32
  }
  func.func @transform_3(%arg0: i32) -> (i32, i32) {
    %c0_i32 = arith.constant 0 : i32
    %c0_i32_0 = arith.constant 0 : i32
    %c0_i32_1 = arith.constant 0 : i32
    return %c0_i32, %c0_i32_0 : i32, i32
  }
  func.func @transform_4(%arg0: i32) -> (i32, i32) {
    %c0_i32 = arith.constant 0 : i32
    %c0_i32_0 = arith.constant 0 : i32
    %c0_i32_1 = arith.constant 0 : i32
    return %c0_i32, %c0_i32_0 : i32, i32
  }
  func.func @transform_5(%arg0: i32) -> (i32, i32) {
    %c0_i32 = arith.constant 0 : i32
    %c0_i32_0 = arith.constant 0 : i32
    return %arg0, %c0_i32 : i32, i32
  }
}

module attributes {stable_mosaic.version = 11 : i64} {
  func.func @_mlp2_kernel(%arg0: i32, %arg1: memref<48x4xf32, #tpu.memory_space<vmem>>, %arg2: memref<4x16xf32, #tpu.memory_space<vmem>>, %arg3: memref<1x16xf32, #tpu.memory_space<vmem>>, %arg4: memref<16x32xf32, #tpu.memory_space<vmem>>, %arg5: memref<1x32xf32, #tpu.memory_space<vmem>>, %arg6: memref<48x32xf32, #tpu.memory_space<vmem>>) attributes {dimension_semantics = [#tpu.dimension_semantics<parallel>], iteration_bounds = array<i64: 1>, scalar_prefetch = 0 : i64, scratch_operands = 0 : i64, tpu.core_type = #tpu.core_type<tc>, window_params = [{transform_indices = @transform_0, window_bounds = array<i64: 48, 4>}, {pipeline_mode = #tpu.pipeline_mode<synchronous>, transform_indices = @transform_1, window_bounds = array<i64: 4, 16>}, {pipeline_mode = #tpu.pipeline_mode<synchronous>, transform_indices = @transform_2, window_bounds = array<i64: 1, 16>}, {pipeline_mode = #tpu.pipeline_mode<synchronous>, transform_indices = @transform_3, window_bounds = array<i64: 16, 32>}, {pipeline_mode = #tpu.pipeline_mode<synchronous>, transform_indices = @transform_4, window_bounds = array<i64: 1, 32>}, {transform_indices = @transform_5, window_bounds = array<i64: 48, 32>}]} {
    %c0 = arith.constant 0 : index
    %c0_0 = arith.constant 0 : index
    %0 = vector.load %arg1[%c0, %c0_0] : memref<48x4xf32, #tpu.memory_space<vmem>>, vector<48x4xf32>
    %c0_1 = arith.constant 0 : index
    %c0_2 = arith.constant 0 : index
    %1 = vector.load %arg2[%c0_1, %c0_2] : memref<4x16xf32, #tpu.memory_space<vmem>>, vector<4x16xf32>
    %cst = arith.constant dense<0.000000e+00> : vector<48x16xf32>
    %2 = tpu.matmul %0, %1, %cst {dimension_numbers = #tpu.dot_dimension_numbers<[1], [0], [0], [1], [0, 0, 1, 1], [], []>} : vector<48x4xf32>, vector<4x16xf32>, vector<48x16xf32> -> vector<48x16xf32>
    %c0_3 = arith.constant 0 : index
    %c0_4 = arith.constant 0 : index
    %3 = vector.load %arg3[%c0_3, %c0_4] : memref<1x16xf32, #tpu.memory_space<vmem>>, vector<1x16xf32>
    %4 = vector.broadcast %3 : vector<1x16xf32> to vector<48x16xf32>
    %5 = arith.addf %2, %4 : vector<48x16xf32>
    %cst_5 = arith.constant 0.000000e+00 : f32
    %6 = vector.broadcast %cst_5 : f32 to vector<48x16xf32>
    %7 = arith.maximumf %5, %6 : vector<48x16xf32>
    %c0_6 = arith.constant 0 : index
    %c0_7 = arith.constant 0 : index
    %8 = vector.load %arg4[%c0_6, %c0_7] : memref<16x32xf32, #tpu.memory_space<vmem>>, vector<16x32xf32>
    %cst_8 = arith.constant dense<0.000000e+00> : vector<48x32xf32>
    %9 = tpu.matmul %7, %8, %cst_8 {dimension_numbers = #tpu.dot_dimension_numbers<[1], [0], [0], [1], [0, 0, 1, 1], [], []>} : vector<48x16xf32>, vector<16x32xf32>, vector<48x32xf32> -> vector<48x32xf32>
    %c0_9 = arith.constant 0 : index
    %c0_10 = arith.constant 0 : index
    %10 = vector.load %arg5[%c0_9, %c0_10] : memref<1x32xf32, #tpu.memory_space<vmem>>, vector<1x32xf32>
    %11 = vector.broadcast %10 : vector<1x32xf32> to vector<48x32xf32>
    %12 = arith.addf %9, %11 : vector<48x32xf32>
    %c0_11 = arith.constant 0 : index
    %c0_12 = arith.constant 0 : index
    %13 = vector.load %arg6[%c0_11, %c0_12] : memref<48x32xf32, #tpu.memory_space<vmem>>, vector<48x32xf32>
    tpu.vector_store %arg6[%c0_11, %c0_12], %12 {strides = array<i32>} : memref<48x32xf32, #tpu.memory_space<vmem>>, vector<48x32xf32>,
    return
  }
  func.func @transform_0(%arg0: i32) -> (i32, i32) {
    %c0_i32 = arith.constant 0 : i32
    %c0_i32_0 = arith.constant 0 : i32
    return %arg0, %c0_i32 : i32, i32
  }
  func.func @transform_1(%arg0: i32) -> (i32, i32) {
    %c0_i32 = arith.constant 0 : i32
    %c0_i32_0 = arith.constant 0 : i32
    %c0_i32_1 = arith.constant 0 : i32
    return %c0_i32, %c0_i32_0 : i32, i32
  }
  func.func @transform_2(%arg0: i32) -> (i32, i32) {
    %c0_i32 = arith.constant 0 : i32
    %c0_i32_0 = arith.constant 0 : i32
    %c0_i32_1 = arith.constant 0 : i32
    return %c0_i32, %c0_i32_0 : i32, i32
  }
  func.func @transform_3(%arg0: i32) -> (i32, i32) {
    %c0_i32 = arith.constant 0 : i32
    %c0_i32_0 = arith.constant 0 : i32
    %c0_i32_1 = arith.constant 0 : i32
    return %c0_i32, %c0_i32_0 : i32, i32
  }
  func.func @transform_4(%arg0: i32) -> (i32, i32) {
    %c0_i32 = arith.constant 0 : i32
    %c0_i32_0 = arith.constant 0 : i32
    %c0_i32_1 = arith.constant 0 : i32
    return %c0_i32, %c0_i32_0 : i32, i32
  }
  func.func @transform_5(%arg0: i32) -> (i32, i32) {
    %c0_i32 = arith.constant 0 : i32
    %c0_i32_0 = arith.constant 0 : i32
    return %arg0, %c0_i32 : i32, i32
  }
}

module attributes {stable_mosaic.version = 11 : i64} {
  func.func @_gat_layer_kernel(%arg0: i32, %arg1: memref<128x32xf32, #tpu.memory_space<vmem>>, %arg2: memref<48x32xf32, #tpu.memory_space<vmem>>, %arg3: memref<48x128xbf16, #tpu.memory_space<vmem>>, %arg4: memref<48x128xbf16, #tpu.memory_space<vmem>>, %arg5: memref<32x32xf32, #tpu.memory_space<vmem>>, %arg6: memref<1x32xf32, #tpu.memory_space<vmem>>, %arg7: memref<32x32xf32, #tpu.memory_space<vmem>>, %arg8: memref<1x32xf32, #tpu.memory_space<vmem>>, %arg9: memref<1x32xf32, #tpu.memory_space<vmem>>, %arg10: memref<128x32xf32, #tpu.memory_space<vmem>>, %arg11: memref<48x32xf32, #tpu.memory_space<vmem>>, %arg12: memref<128x34xbf16, #tpu.memory_space<vmem>>, %arg13: memref<128x1xbf16, #tpu.memory_space<vmem>>, %arg14: memref<128x1xbf16, #tpu.memory_space<vmem>>, %arg15: memref<128x33xf32, #tpu.memory_space<vmem>>) attributes {dimension_semantics = [#tpu.dimension_semantics<arbitrary>], iteration_bounds = array<i64: 1>, scalar_prefetch = 0 : i64, scratch_operands = 4 : i64, tpu.core_type = #tpu.core_type<tc>, window_params = [{pipeline_mode = #tpu.pipeline_mode<synchronous>, transform_indices = @transform_0, window_bounds = array<i64: 128, 32>}, {transform_indices = @transform_1, window_bounds = array<i64: 48, 32>}, {transform_indices = @transform_2, window_bounds = array<i64: 48, 128>}, {transform_indices = @transform_3, window_bounds = array<i64: 48, 128>}, {pipeline_mode = #tpu.pipeline_mode<synchronous>, transform_indices = @transform_4, window_bounds = array<i64: 32, 32>}, {pipeline_mode = #tpu.pipeline_mode<synchronous>, transform_indices = @transform_5, window_bounds = array<i64: 1, 32>}, {pipeline_mode = #tpu.pipeline_mode<synchronous>, transform_indices = @transform_6, window_bounds = array<i64: 32, 32>}, {pipeline_mode = #tpu.pipeline_mode<synchronous>, transform_indices = @transform_7, window_bounds = array<i64: 1, 32>}, {pipeline_mode = #tpu.pipeline_mode<synchronous>, transform_indices = @transform_8, window_bounds = array<i64: 1, 32>}, {pipeline_mode = #tpu.pipeline_mode<synchronous>, transform_indices = @transform_9, window_bounds = array<i64: 128, 32>}, {transform_indices = @transform_10, window_bounds = array<i64: 48, 32>}]} {
    %c0_i32 = arith.constant 0 : i32
    %0 = arith.cmpi eq, %arg0, %c0_i32 : i32
    %1 = arith.extui %0 : i1 to i32
    %c0_i32_0 = arith.constant 0 : i32
    %2 = arith.cmpi ne, %1, %c0_i32_0 : i32
    scf.if %2 {
      %c0_40 = arith.constant 0 : index
      %c0_41 = arith.constant 0 : index
      %70 = vector.load %arg1[%c0_40, %c0_41] : memref<128x32xf32, #tpu.memory_space<vmem>>, vector<128x32xf32>
      %c0_42 = arith.constant 0 : index
      %c0_43 = arith.constant 0 : index
      %71 = vector.load %arg5[%c0_42, %c0_43] : memref<32x32xf32, #tpu.memory_space<vmem>>, vector<32x32xf32>
      %cst_44 = arith.constant dense<0.000000e+00> : vector<128x32xf32>
      %72 = tpu.matmul %70, %71, %cst_44 {dimension_numbers = #tpu.dot_dimension_numbers<[1], [0], [0], [1], [0, 0, 1, 1], [], []>} : vector<128x32xf32>, vector<32x32xf32>, vector<128x32xf32> -> vector<128x32xf32>
      %c0_45 = arith.constant 0 : index
      %c0_46 = arith.constant 0 : index
      %73 = vector.load %arg6[%c0_45, %c0_46] : memref<1x32xf32, #tpu.memory_space<vmem>>, vector<1x32xf32>
      %74 = vector.broadcast %73 : vector<1x32xf32> to vector<128x32xf32>
      %75 = arith.addf %72, %74 : vector<128x32xf32>
      %c0_47 = arith.constant 0 : index
      %c0_48 = arith.constant 0 : index
      %76 = vector.load %arg9[%c0_47, %c0_48] : memref<1x32xf32, #tpu.memory_space<vmem>>, vector<1x32xf32>
      %77 = vector.broadcast %76 : vector<1x32xf32> to vector<128x32xf32>
      %78 = arith.mulf %75, %77 : vector<128x32xf32>
      %cst_49 = arith.constant dense<0.000000e+00> : vector<128xf32>
      %79 = vector.multi_reduction <add>, %78, %cst_49 [1] : vector<128x32xf32> to vector<128xf32>
      %80 = vector.shape_cast %79 : vector<128xf32> to vector<128x1xf32>
      %81 = arith.truncf %75 : vector<128x32xf32> to vector<128x32xbf16>
      %c0_50 = arith.constant 0 : index
      %c0_51 = arith.constant 0 : index
      %82 = vector.load %arg12[%c0_50, %c0_51] : memref<128x34xbf16, #tpu.memory_space<vmem>>, vector<128x32xbf16>
      tpu.vector_store %arg12[%c0_50, %c0_51], %81 {strides = array<i32>} : memref<128x34xbf16, #tpu.memory_space<vmem>>, vector<128x32xbf16>,
      %cst_52 = arith.constant 1.000000e+00 : bf16
      %83 = vector.broadcast %cst_52 : bf16 to vector<128x1xbf16>
      %c0_53 = arith.constant 0 : index
      %c32 = arith.constant 32 : index
      %84 = vector.load %arg12[%c0_53, %c32] : memref<128x34xbf16, #tpu.memory_space<vmem>>, vector<128x1xbf16>
      tpu.vector_store %arg12[%c0_53, %c32], %83 {strides = array<i32>} : memref<128x34xbf16, #tpu.memory_space<vmem>>, vector<128x1xbf16>,
      %85 = arith.truncf %80 : vector<128x1xf32> to vector<128x1xbf16>
      %c0_54 = arith.constant 0 : index
      %c33 = arith.constant 33 : index
      %86 = vector.load %arg12[%c0_54, %c33] : memref<128x34xbf16, #tpu.memory_space<vmem>>, vector<128x1xbf16>
      tpu.vector_store %arg12[%c0_54, %c33], %85 {strides = array<i32>} : memref<128x34xbf16, #tpu.memory_space<vmem>>, vector<128x1xbf16>,
      %87 = arith.truncf %80 : vector<128x1xf32> to vector<128x1xbf16>
      %c0_55 = arith.constant 0 : index
      %c0_56 = arith.constant 0 : index
      %88 = vector.load %arg13[%c0_55, %c0_56] : memref<128x1xbf16, #tpu.memory_space<vmem>>, vector<128x1xbf16>
      tpu.vector_store %arg13[%c0_55, %c0_56], %87 {strides = array<i32>} : memref<128x1xbf16, #tpu.memory_space<vmem>>, vector<128x1xbf16>,
      %cst_57 = arith.constant -1.000260e+30 : bf16
      %89 = vector.broadcast %cst_57 : bf16 to vector<128x1xbf16>
      %c0_58 = arith.constant 0 : index
      %c0_59 = arith.constant 0 : index
      %90 = vector.load %arg14[%c0_58, %c0_59] : memref<128x1xbf16, #tpu.memory_space<vmem>>, vector<128x1xbf16>
      tpu.vector_store %arg14[%c0_58, %c0_59], %89 {strides = array<i32>} : memref<128x1xbf16, #tpu.memory_space<vmem>>, vector<128x1xbf16>,
      %cst_60 = arith.constant 0.000000e+00 : f32
      %91 = vector.broadcast %cst_60 : f32 to vector<128x33xf32>
      %c0_61 = arith.constant 0 : index
      %c0_62 = arith.constant 0 : index
      %92 = vector.load %arg15[%c0_61, %c0_62] : memref<128x33xf32, #tpu.memory_space<vmem>>, vector<128x33xf32>
      tpu.vector_store %arg15[%c0_61, %c0_62], %91 {strides = array<i32>} : memref<128x33xf32, #tpu.memory_space<vmem>>, vector<128x33xf32>,
    } else {
    }
    %c0 = arith.constant 0 : index
    %c0_1 = arith.constant 0 : index
    %3 = vector.load %arg3[%c0, %c0_1] : memref<48x128xbf16, #tpu.memory_space<vmem>>, vector<48x128xbf16>
    %c0_2 = arith.constant 0 : index
    %c0_3 = arith.constant 0 : index
    %4 = vector.load %arg4[%c0_2, %c0_3] : memref<48x128xbf16, #tpu.memory_space<vmem>>, vector<48x128xbf16>
    %c0_4 = arith.constant 0 : index
    %c0_5 = arith.constant 0 : index
    %5 = vector.load %arg2[%c0_4, %c0_5] : memref<48x32xf32, #tpu.memory_space<vmem>>, vector<48x32xf32>
    %c0_6 = arith.constant 0 : index
    %c0_7 = arith.constant 0 : index
    %6 = vector.load %arg9[%c0_6, %c0_7] : memref<1x32xf32, #tpu.memory_space<vmem>>, vector<1x32xf32>
    %c0_8 = arith.constant 0 : index
    %c0_9 = arith.constant 0 : index
    %7 = vector.load %arg7[%c0_8, %c0_9] : memref<32x32xf32, #tpu.memory_space<vmem>>, vector<32x32xf32>
    %cst = arith.constant dense<0.000000e+00> : vector<48x32xf32>
    %8 = tpu.matmul %5, %7, %cst {dimension_numbers = #tpu.dot_dimension_numbers<[1], [0], [0], [1], [0, 0, 1, 1], [], []>} : vector<48x32xf32>, vector<32x32xf32>, vector<48x32xf32> -> vector<48x32xf32>
    %c0_10 = arith.constant 0 : index
    %c0_11 = arith.constant 0 : index
    %9 = vector.load %arg8[%c0_10, %c0_11] : memref<1x32xf32, #tpu.memory_space<vmem>>, vector<1x32xf32>
    %10 = vector.broadcast %9 : vector<1x32xf32> to vector<48x32xf32>
    %11 = arith.addf %8, %10 : vector<48x32xf32>
    %12 = arith.addf %5, %11 : vector<48x32xf32>
    %cst_12 = arith.constant 0.000000e+00 : f32
    %13 = vector.broadcast %cst_12 : f32 to vector<48x32xf32>
    %14 = arith.maximumf %12, %13 : vector<48x32xf32>
    %c0_13 = arith.constant 0 : index
    %c0_14 = arith.constant 0 : index
    %15 = vector.load %arg11[%c0_13, %c0_14] : memref<48x32xf32, #tpu.memory_space<vmem>>, vector<48x32xf32>
    tpu.vector_store %arg11[%c0_13, %c0_14], %14 {strides = array<i32>} : memref<48x32xf32, #tpu.memory_space<vmem>>, vector<48x32xf32>,
    %c0_15 = arith.constant 0 : index
    %c0_16 = arith.constant 0 : index
    %16 = vector.load %arg12[%c0_15, %c0_16] : memref<128x34xbf16, #tpu.memory_space<vmem>>, vector<128x34xbf16>
    %cst_17 = arith.constant dense<0.000000e+00> : vector<48x34xf32>
    %17 = tpu.matmul %3, %16, %cst_17 {dimension_numbers = #tpu.dot_dimension_numbers<[1], [0], [0], [1], [0, 0, 1, 1], [], []>} : vector<48x128xbf16>, vector<128x34xbf16>, vector<48x34xf32> -> vector<48x34xf32>
    %18 = vector.extract_strided_slice %17 {offsets = [0, 33], sizes = [48, 1], strides = [1, 1]} : vector<48x34xf32> to vector<48x1xf32>
    %c0_18 = arith.constant 0 : index
    %c0_19 = arith.constant 0 : index
    %19 = vector.load %arg13[%c0_18, %c0_19] : memref<128x1xbf16, #tpu.memory_space<vmem>>, vector<128x1xbf16>
    %cst_20 = arith.constant dense<0.000000e+00> : vector<48x1xf32>
    %20 = tpu.matmul %4, %19, %cst_20 {dimension_numbers = #tpu.dot_dimension_numbers<[1], [0], [0], [1], [0, 0, 1, 1], [], []>} : vector<48x128xbf16>, vector<128x1xbf16>, vector<48x1xf32> -> vector<48x1xf32>
    %21 = vector.broadcast %6 : vector<1x32xf32> to vector<48x32xf32>
    %22 = arith.mulf %11, %21 : vector<48x32xf32>
    %cst_21 = arith.constant dense<0.000000e+00> : vector<48xf32>
    %23 = vector.multi_reduction <add>, %22, %cst_21 [1] : vector<48x32xf32> to vector<48xf32>
    %24 = vector.shape_cast %23 : vector<48xf32> to vector<48x1xf32>
    %25 = arith.addf %18, %20 : vector<48x1xf32>
    %26 = arith.addf %25, %24 : vector<48x1xf32>
    %cst_22 = arith.constant 0.000000e+00 : f32
    %27 = vector.broadcast %cst_22 : f32 to vector<48x1xf32>
    %28 = arith.cmpf ogt, %26, %27 : vector<48x1xf32>
    %cst_23 = arith.constant 2.000000e-01 : f32
    %29 = vector.broadcast %cst_23 : f32 to vector<48x1xf32>
    %30 = arith.mulf %29, %26 : vector<48x1xf32>
    %31 = arith.select %28, %26, %30 : vector<48x1xi1>, vector<48x1xf32>
    %cst_24 = arith.constant 0.000000e+00 : bf16
    %32 = vector.broadcast %cst_24 : bf16 to vector<48x128xbf16>
    %33 = arith.cmpf ogt, %4, %32 : vector<48x128xbf16>
    %cst_25 = arith.constant -1.000000e+30 : f32
    %34 = vector.shape_cast %31 : vector<48x1xf32> to vector<48x1xf32>
    %35 = vector.broadcast %34 : vector<48x1xf32> to vector<48x128xf32>
    %36 = vector.broadcast %cst_25 : f32 to vector<48x128xf32>
    %37 = arith.select %33, %35, %36 : vector<48x128xi1>, vector<48x128xf32>
    %cst_26 = arith.constant dense<0xFF800000> : vector<128xf32>
    %38 = vector.multi_reduction <maximumf>, %37, %cst_26 [0] : vector<48x128xf32> to vector<128xf32>
    %39 = vector.shape_cast %38 : vector<128xf32> to vector<1x128xf32>
    %40 = vector.shape_cast %39 : vector<1x128xf32> to vector<1x128xf32>
    %41 = vector.broadcast %40 : vector<1x128xf32> to vector<8x128xf32>
    %42 = tpu.transpose %41, [1, 0] : vector<8x128xf32> -> vector<128x8xf32>
    %43 = vector.extract_strided_slice %42 {offsets = [0, 0], sizes = [128, 1], strides = [1, 1]} : vector<128x8xf32> to vector<128x1xf32>
    %c0_27 = arith.constant 0 : index
    %c0_28 = arith.constant 0 : index
    %44 = vector.load %arg14[%c0_27, %c0_28] : memref<128x1xbf16, #tpu.memory_space<vmem>>, vector<128x1xbf16>
    %45 = arith.extf %44 : vector<128x1xbf16> to vector<128x1xf32>
    %46 = arith.maximumf %45, %43 : vector<128x1xf32>
    %47 = arith.truncf %46 : vector<128x1xf32> to vector<128x1xbf16>
    %c0_29 = arith.constant 0 : index
    %c0_30 = arith.constant 0 : index
    %48 = vector.load %arg14[%c0_29, %c0_30] : memref<128x1xbf16, #tpu.memory_space<vmem>>, vector<128x1xbf16>
    tpu.vector_store %arg14[%c0_29, %c0_30], %47 {strides = array<i32>} : memref<128x1xbf16, #tpu.memory_space<vmem>>, vector<128x1xbf16>,
    %49 = arith.extf %47 : vector<128x1xbf16> to vector<128x1xf32>
    %50 = arith.subf %45, %49 : vector<128x1xf32>
    %cst_31 = arith.constant -1.000000e+02 : f32
    %51 = vector.broadcast %cst_31 : f32 to vector<128x1xf32>
    %52 = arith.maximumf %50, %51 : vector<128x1xf32>
    %53 = math.exp %52 : vector<128x1xf32>
    %cst_32 = arith.constant dense<0.000000e+00> : vector<48x1xf32>
    %54 = tpu.matmul %4, %47, %cst_32 {dimension_numbers = #tpu.dot_dimension_numbers<[1], [0], [0], [1], [0, 0, 1, 1], [], []>} : vector<48x128xbf16>, vector<128x1xbf16>, vector<48x1xf32> -> vector<48x1xf32>
    %55 = arith.subf %31, %54 : vector<48x1xf32>
    %56 = math.exp %55 : vector<48x1xf32>
    %57 = vector.extract_strided_slice %17 {offsets = [0, 0], sizes = [48, 33], strides = [1, 1]} : vector<48x34xf32> to vector<48x33xf32>
    %58 = vector.broadcast %56 : vector<48x1xf32> to vector<48x33xf32>
    %59 = arith.mulf %58, %57 : vector<48x33xf32>
    %60 = arith.truncf %59 : vector<48x33xf32> to vector<48x33xbf16>
    %cst_33 = arith.constant dense<0.000000e+00> : vector<128x33xf32>
    %61 = tpu.matmul %4, %60, %cst_33 {dimension_numbers = #tpu.dot_dimension_numbers<[0], [0], [1], [1], [0, 1, 1, 1], [], []>} : vector<48x128xbf16>, vector<48x33xbf16>, vector<128x33xf32> -> vector<128x33xf32>
    %c0_34 = arith.constant 0 : index
    %c0_35 = arith.constant 0 : index
    %62 = vector.load %arg15[%c0_34, %c0_35] : memref<128x33xf32, #tpu.memory_space<vmem>>, vector<128x33xf32>
    %63 = vector.broadcast %53 : vector<128x1xf32> to vector<128x33xf32>
    %64 = arith.mulf %62, %63 : vector<128x33xf32>
    %65 = arith.addf %64, %61 : vector<128x33xf32>
    %c0_36 = arith.constant 0 : index
    %c0_37 = arith.constant 0 : index
    %66 = vector.load %arg15[%c0_36, %c0_37] : memref<128x33xf32, #tpu.memory_space<vmem>>, vector<128x33xf32>
    tpu.vector_store %arg15[%c0_36, %c0_37], %65 {strides = array<i32>} : memref<128x33xf32, #tpu.memory_space<vmem>>, vector<128x33xf32>,
    %c0_i32_38 = arith.constant 0 : i32
    %67 = arith.cmpi eq, %arg0, %c0_i32_38 : i32
    %68 = arith.extui %67 : i1 to i32
    %c0_i32_39 = arith.constant 0 : i32
    %69 = arith.cmpi ne, %68, %c0_i32_39 : i32
    scf.if %69 {
      %c0_40 = arith.constant 0 : index
      %c0_41 = arith.constant 0 : index
      %70 = vector.load %arg15[%c0_40, %c0_41] : memref<128x33xf32, #tpu.memory_space<vmem>>, vector<128x33xf32>
      %71 = vector.extract_strided_slice %70 {offsets = [0, 0], sizes = [128, 32], strides = [1, 1]} : vector<128x33xf32> to vector<128x32xf32>
      %72 = vector.extract_strided_slice %70 {offsets = [0, 32], sizes = [128, 1], strides = [1, 1]} : vector<128x33xf32> to vector<128x1xf32>
      %cst_42 = arith.constant 9.99999971E-10 : f32
      %73 = vector.broadcast %cst_42 : f32 to vector<128x1xf32>
      %74 = arith.addf %72, %73 : vector<128x1xf32>
      %75 = tpu.reciprocal %74 {approx = true} : vector<128x1xf32> -> vector<128x1xf32>
      %76 = vector.broadcast %75 : vector<128x1xf32> to vector<128x32xf32>
      %77 = arith.mulf %71, %76 : vector<128x32xf32>
      %c0_43 = arith.constant 0 : index
      %c0_44 = arith.constant 0 : index
      %78 = vector.load %arg1[%c0_43, %c0_44] : memref<128x32xf32, #tpu.memory_space<vmem>>, vector<128x32xf32>
      %79 = arith.addf %78, %77 : vector<128x32xf32>
      %cst_45 = arith.constant 0.000000e+00 : f32
      %80 = vector.broadcast %cst_45 : f32 to vector<128x32xf32>
      %81 = arith.maximumf %79, %80 : vector<128x32xf32>
      %c0_46 = arith.constant 0 : index
      %c0_47 = arith.constant 0 : index
      %82 = vector.load %arg10[%c0_46, %c0_47] : memref<128x32xf32, #tpu.memory_space<vmem>>, vector<128x32xf32>
      tpu.vector_store %arg10[%c0_46, %c0_47], %81 {strides = array<i32>} : memref<128x32xf32, #tpu.memory_space<vmem>>, vector<128x32xf32>,
    } else {
    }
    return
  }
  func.func @transform_0(%arg0: i32) -> (i32, i32) {
    %c0_i32 = arith.constant 0 : i32
    %c0_i32_0 = arith.constant 0 : i32
    %c0_i32_1 = arith.constant 0 : i32
    return %c0_i32, %c0_i32_0 : i32, i32
  }
  func.func @transform_1(%arg0: i32) -> (i32, i32) {
    %c0_i32 = arith.constant 0 : i32
    %c0_i32_0 = arith.constant 0 : i32
    return %arg0, %c0_i32 : i32, i32
  }
  func.func @transform_2(%arg0: i32) -> (i32, i32) {
    %c0_i32 = arith.constant 0 : i32
    %c0_i32_0 = arith.constant 0 : i32
    return %arg0, %c0_i32 : i32, i32
  }
  func.func @transform_3(%arg0: i32) -> (i32, i32) {
    %c0_i32 = arith.constant 0 : i32
    %c0_i32_0 = arith.constant 0 : i32
    return %arg0, %c0_i32 : i32, i32
  }
  func.func @transform_4(%arg0: i32) -> (i32, i32) {
    %c0_i32 = arith.constant 0 : i32
    %c0_i32_0 = arith.constant 0 : i32
    %c0_i32_1 = arith.constant 0 : i32
    return %c0_i32, %c0_i32_0 : i32, i32
  }
  func.func @transform_5(%arg0: i32) -> (i32, i32) {
    %c0_i32 = arith.constant 0 : i32
    %c0_i32_0 = arith.constant 0 : i32
    %c0_i32_1 = arith.constant 0 : i32
    return %c0_i32, %c0_i32_0 : i32, i32
  }
  func.func @transform_6(%arg0: i32) -> (i32, i32) {
    %c0_i32 = arith.constant 0 : i32
    %c0_i32_0 = arith.constant 0 : i32
    %c0_i32_1 = arith.constant 0 : i32
    return %c0_i32, %c0_i32_0 : i32, i32
  }
  func.func @transform_7(%arg0: i32) -> (i32, i32) {
    %c0_i32 = arith.constant 0 : i32
    %c0_i32_0 = arith.constant 0 : i32
    %c0_i32_1 = arith.constant 0 : i32
    return %c0_i32, %c0_i32_0 : i32, i32
  }
  func.func @transform_8(%arg0: i32) -> (i32, i32) {
    %c0_i32 = arith.constant 0 : i32
    %c0_i32_0 = arith.constant 0 : i32
    %c0_i32_1 = arith.constant 0 : i32
    return %c0_i32, %c0_i32_0 : i32, i32
  }
  func.func @transform_9(%arg0: i32) -> (i32, i32) {
    %c0_i32 = arith.constant 0 : i32
    %c0_i32_0 = arith.constant 0 : i32
    %c0_i32_1 = arith.constant 0 : i32
    return %c0_i32, %c0_i32_0 : i32, i32
  }
  func.func @transform_10(%arg0: i32) -> (i32, i32) {
    %c0_i32 = arith.constant 0 : i32
    %c0_i32_0 = arith.constant 0 : i32
    return %arg0, %c0_i32 : i32, i32
  }
}

module attributes {stable_mosaic.version = 11 : i64} {
  func.func @_predictor_kernel(%arg0: i32, %arg1: memref<48x128xbf16, #tpu.memory_space<vmem>>, %arg2: memref<48x128xbf16, #tpu.memory_space<vmem>>, %arg3: memref<48x32xf32, #tpu.memory_space<vmem>>, %arg4: memref<128x32xf32, #tpu.memory_space<vmem>>, %arg5: memref<32x32xf32, #tpu.memory_space<vmem>>, %arg6: memref<32x16xf32, #tpu.memory_space<vmem>>, %arg7: memref<1x16xf32, #tpu.memory_space<vmem>>, %arg8: memref<1x16xf32, #tpu.memory_space<vmem>>, %arg9: memref<1x1xf32, #tpu.memory_space<vmem>>, %arg10: memref<48x1xf32, #tpu.memory_space<vmem>>, %arg11: memref<128x32xbf16, #tpu.memory_space<vmem>>) attributes {dimension_semantics = [#tpu.dimension_semantics<arbitrary>], iteration_bounds = array<i64: 1>, scalar_prefetch = 0 : i64, scratch_operands = 1 : i64, tpu.core_type = #tpu.core_type<tc>, window_params = [{transform_indices = @transform_0, window_bounds = array<i64: 48, 128>}, {transform_indices = @transform_1, window_bounds = array<i64: 48, 128>}, {transform_indices = @transform_2, window_bounds = array<i64: 48, 32>}, {pipeline_mode = #tpu.pipeline_mode<synchronous>, transform_indices = @transform_3, window_bounds = array<i64: 128, 32>}, {pipeline_mode = #tpu.pipeline_mode<synchronous>, transform_indices = @transform_4, window_bounds = array<i64: 32, 32>}, {pipeline_mode = #tpu.pipeline_mode<synchronous>, transform_indices = @transform_5, window_bounds = array<i64: 32, 16>}, {pipeline_mode = #tpu.pipeline_mode<synchronous>, transform_indices = @transform_6, window_bounds = array<i64: 1, 16>}, {pipeline_mode = #tpu.pipeline_mode<synchronous>, transform_indices = @transform_7, window_bounds = array<i64: 1, 16>}, {pipeline_mode = #tpu.pipeline_mode<synchronous>, transform_indices = @transform_8, window_bounds = array<i64: 1, 1>}, {transform_indices = @transform_9, window_bounds = array<i64: 48, 1>}]} {
    %c0_i32 = arith.constant 0 : i32
    %0 = arith.cmpi eq, %arg0, %c0_i32 : i32
    %1 = arith.extui %0 : i1 to i32
    %c0_i32_0 = arith.constant 0 : i32
    %2 = arith.cmpi ne, %1, %c0_i32_0 : i32
    scf.if %2 {
      %c0_23 = arith.constant 0 : index
      %c0_24 = arith.constant 0 : index
      %28 = vector.load %arg4[%c0_23, %c0_24] : memref<128x32xf32, #tpu.memory_space<vmem>>, vector<128x32xf32>
      %c0_25 = arith.constant 0 : index
      %c0_26 = arith.constant 0 : index
      %29 = vector.load %arg5[%c0_25, %c0_26] : memref<32x32xf32, #tpu.memory_space<vmem>>, vector<32x32xf32>
      %cst_27 = arith.constant dense<0.000000e+00> : vector<128x32xf32>
      %30 = tpu.matmul %28, %29, %cst_27 {dimension_numbers = #tpu.dot_dimension_numbers<[1], [0], [0], [1], [0, 0, 1, 1], [], []>} : vector<128x32xf32>, vector<32x32xf32>, vector<128x32xf32> -> vector<128x32xf32>
      %31 = arith.truncf %30 : vector<128x32xf32> to vector<128x32xbf16>
      %c0_28 = arith.constant 0 : index
      %c0_29 = arith.constant 0 : index
      %32 = vector.load %arg11[%c0_28, %c0_29] : memref<128x32xbf16, #tpu.memory_space<vmem>>, vector<128x32xbf16>
      tpu.vector_store %arg11[%c0_28, %c0_29], %31 {strides = array<i32>} : memref<128x32xbf16, #tpu.memory_space<vmem>>, vector<128x32xbf16>,
    } else {
    }
    %c0 = arith.constant 0 : index
    %c0_1 = arith.constant 0 : index
    %3 = vector.load %arg1[%c0, %c0_1] : memref<48x128xbf16, #tpu.memory_space<vmem>>, vector<48x128xbf16>
    %c0_2 = arith.constant 0 : index
    %c0_3 = arith.constant 0 : index
    %4 = vector.load %arg11[%c0_2, %c0_3] : memref<128x32xbf16, #tpu.memory_space<vmem>>, vector<128x16xbf16>
    %cst = arith.constant dense<0.000000e+00> : vector<48x16xf32>
    %5 = tpu.matmul %3, %4, %cst {dimension_numbers = #tpu.dot_dimension_numbers<[1], [0], [0], [1], [0, 0, 1, 1], [], []>} : vector<48x128xbf16>, vector<128x16xbf16>, vector<48x16xf32> -> vector<48x16xf32>
    %c0_4 = arith.constant 0 : index
    %c0_5 = arith.constant 0 : index
    %6 = vector.load %arg2[%c0_4, %c0_5] : memref<48x128xbf16, #tpu.memory_space<vmem>>, vector<48x128xbf16>
    %c0_6 = arith.constant 0 : index
    %c16 = arith.constant 16 : index
    %7 = vector.load %arg11[%c0_6, %c16] : memref<128x32xbf16, #tpu.memory_space<vmem>>, vector<128x16xbf16>
    %cst_7 = arith.constant dense<0.000000e+00> : vector<48x16xf32>
    %8 = tpu.matmul %6, %7, %cst_7 {dimension_numbers = #tpu.dot_dimension_numbers<[1], [0], [0], [1], [0, 0, 1, 1], [], []>} : vector<48x128xbf16>, vector<128x16xbf16>, vector<48x16xf32> -> vector<48x16xf32>
    %9 = arith.addf %5, %8 : vector<48x16xf32>
    %c0_8 = arith.constant 0 : index
    %c0_9 = arith.constant 0 : index
    %10 = vector.load %arg3[%c0_8, %c0_9] : memref<48x32xf32, #tpu.memory_space<vmem>>, vector<48x32xf32>
    %c0_10 = arith.constant 0 : index
    %c0_11 = arith.constant 0 : index
    %11 = vector.load %arg6[%c0_10, %c0_11] : memref<32x16xf32, #tpu.memory_space<vmem>>, vector<32x16xf32>
    %cst_12 = arith.constant dense<0.000000e+00> : vector<48x16xf32>
    %12 = tpu.matmul %10, %11, %cst_12 {dimension_numbers = #tpu.dot_dimension_numbers<[1], [0], [0], [1], [0, 0, 1, 1], [], []>} : vector<48x32xf32>, vector<32x16xf32>, vector<48x16xf32> -> vector<48x16xf32>
    %13 = arith.addf %9, %12 : vector<48x16xf32>
    %c0_13 = arith.constant 0 : index
    %c0_14 = arith.constant 0 : index
    %14 = vector.load %arg7[%c0_13, %c0_14] : memref<1x16xf32, #tpu.memory_space<vmem>>, vector<1x16xf32>
    %15 = vector.broadcast %14 : vector<1x16xf32> to vector<48x16xf32>
    %16 = arith.addf %13, %15 : vector<48x16xf32>
    %cst_15 = arith.constant 0.000000e+00 : f32
    %17 = vector.broadcast %cst_15 : f32 to vector<48x16xf32>
    %18 = arith.maximumf %16, %17 : vector<48x16xf32>
    %c0_16 = arith.constant 0 : index
    %c0_17 = arith.constant 0 : index
    %19 = vector.load %arg8[%c0_16, %c0_17] : memref<1x16xf32, #tpu.memory_space<vmem>>, vector<1x16xf32>
    %20 = vector.broadcast %19 : vector<1x16xf32> to vector<48x16xf32>
    %21 = arith.mulf %18, %20 : vector<48x16xf32>
    %cst_18 = arith.constant dense<0.000000e+00> : vector<48xf32>
    %22 = vector.multi_reduction <add>, %21, %cst_18 [1] : vector<48x16xf32> to vector<48xf32>
    %23 = vector.shape_cast %22 : vector<48xf32> to vector<48x1xf32>
    %c0_19 = arith.constant 0 : index
    %c0_20 = arith.constant 0 : index
    %24 = vector.load %arg9[%c0_19, %c0_20] : memref<1x1xf32, #tpu.memory_space<vmem>>, vector<1x1xf32>
    %25 = vector.broadcast %24 : vector<1x1xf32> to vector<48x1xf32>
    %26 = arith.addf %23, %25 : vector<48x1xf32>
    %c0_21 = arith.constant 0 : index
    %c0_22 = arith.constant 0 : index
    %27 = vector.load %arg10[%c0_21, %c0_22] : memref<48x1xf32, #tpu.memory_space<vmem>>, vector<48x1xf32>
    tpu.vector_store %arg10[%c0_21, %c0_22], %26 {strides = array<i32>} : memref<48x1xf32, #tpu.memory_space<vmem>>, vector<48x1xf32>,
    return
  }
  func.func @transform_0(%arg0: i32) -> (i32, i32) {
    %c0_i32 = arith.constant 0 : i32
    %c0_i32_0 = arith.constant 0 : i32
    return %arg0, %c0_i32 : i32, i32
  }
  func.func @transform_1(%arg0: i32) -> (i32, i32) {
    %c0_i32 = arith.constant 0 : i32
    %c0_i32_0 = arith.constant 0 : i32
    return %arg0, %c0_i32 : i32, i32
  }
  func.func @transform_2(%arg0: i32) -> (i32, i32) {
    %c0_i32 = arith.constant 0 : i32
    %c0_i32_0 = arith.constant 0 : i32
    return %arg0, %c0_i32 : i32, i32
  }
  func.func @transform_3(%arg0: i32) -> (i32, i32) {
    %c0_i32 = arith.constant 0 : i32
    %c0_i32_0 = arith.constant 0 : i32
    %c0_i32_1 = arith.constant 0 : i32
    return %c0_i32, %c0_i32_0 : i32, i32
  }
  func.func @transform_4(%arg0: i32) -> (i32, i32) {
    %c0_i32 = arith.constant 0 : i32
    %c0_i32_0 = arith.constant 0 : i32
    %c0_i32_1 = arith.constant 0 : i32
    return %c0_i32, %c0_i32_0 : i32, i32
  }
  func.func @transform_5(%arg0: i32) -> (i32, i32) {
    %c0_i32 = arith.constant 0 : i32
    %c0_i32_0 = arith.constant 0 : i32
    %c0_i32_1 = arith.constant 0 : i32
    return %c0_i32, %c0_i32_0 : i32, i32
  }
  func.func @transform_6(%arg0: i32) -> (i32, i32) {
    %c0_i32 = arith.constant 0 : i32
    %c0_i32_0 = arith.constant 0 : i32
    %c0_i32_1 = arith.constant 0 : i32
    return %c0_i32, %c0_i32_0 : i32, i32
  }
  func.func @transform_7(%arg0: i32) -> (i32, i32) {
    %c0_i32 = arith.constant 0 : i32
    %c0_i32_0 = arith.constant 0 : i32
    %c0_i32_1 = arith.constant 0 : i32
    return %c0_i32, %c0_i32_0 : i32, i32
  }
  func.func @transform_8(%arg0: i32) -> (i32, i32) {
    %c0_i32 = arith.constant 0 : i32
    %c0_i32_0 = arith.constant 0 : i32
    %c0_i32_1 = arith.constant 0 : i32
    return %c0_i32, %c0_i32_0 : i32, i32
  }
  func.func @transform_9(%arg0: i32) -> (i32, i32) {
    %c0_i32 = arith.constant 0 : i32
    %c0_i32_0 = arith.constant 0 : i32
    return %arg0, %c0_i32 : i32, i32
  }
}

</mosaic_0001>

<llo_original>
// kernel: gat_model_forward.5
$region0: #{gat_model_forward.5}
  #allocation0 [shape = 'u32[]', space=smem, size = 0x4, offset = 0x4, fixed_abs, tag = 'smem constant byte address 0x4 - core index']
  #allocation1 [shape = 'u32[72,128]{1,0:T(1,128)}', space=vmem, size = 0x9000, scoped, tag = 'internal scratch']
  %s0 = inlined_call_operand.vmem [shape: f32[16,8], index: 0, kind: input, shape index: {}]
  %s1 = inlined_call_operand.vmem [shape: f32[8,16], index: 1, kind: input, shape index: {}]
  %s2 = inlined_call_operand.vmem [shape: f32[1,16], index: 2, kind: input, shape index: {}]
  %s3 = inlined_call_operand.vmem [shape: f32[16,32], index: 3, kind: input, shape index: {}]
  %s4 = inlined_call_operand.vmem [shape: f32[1,32], index: 4, kind: input, shape index: {}]
  %s5 = inlined_call_operand.vmem [shape: f32[16,32], index: 5, kind: output, shape index: {}]
  %s6 = sld [smem:[#allocation0]]
  $region30: #{gat_model_forward.5} parent=0
    _
  %s8 = ssub.s32 1, %s6
  %s9 = scalar_select 0, %s8, %s6
  // Predicated region
  $region2: #{gat_model_forward.5} parent=0 // pred_check
    _
  $region3: #{gat_model_forward.5} parent=0 // pred_check_branch
    %11 = sbr.rel (0) target = $region5
  $region4: #{gat_model_forward.5} parent=0 // pred_region
    _
  $region5: #{gat_model_forward.5} parent=0 // pred_fallthru
    _
  // Predicated region
  $region6: #{gat_model_forward.5} parent=0 // pred_check
    _
  $region7: #{gat_model_forward.5} parent=0 // pred_check_branch
    %13 = sbr.rel (0) target = $region9
  $region8: #{gat_model_forward.5} parent=0 // pred_region
    _
  $region9: #{gat_model_forward.5} parent=0 // pred_fallthru
    _
  // Predicated region
  $region10: #{gat_model_forward.5} parent=0 // pred_check
    _
  $region11: #{gat_model_forward.5} parent=0 // pred_check_branch
    %15 = sbr.rel (0) target = $region13
  $region12: #{gat_model_forward.5} parent=0 // pred_region
    _
  $region13: #{gat_model_forward.5} parent=0 // pred_fallthru
    _
  // Predicated region
  $region14: #{gat_model_forward.5} parent=0 // pred_check
    _
  $region15: #{gat_model_forward.5} parent=0 // pred_check_branch
    %17 = sbr.rel (0) target = $region17
  $region16: #{gat_model_forward.5} parent=0 // pred_region
    _
  $region17: #{gat_model_forward.5} parent=0 // pred_fallthru
    _
  // Predicated region
  $region18: #{gat_model_forward.5} parent=0 // pred_check
    _
  $region19: #{gat_model_forward.5} parent=0 // pred_check_branch
    %19 = sbr.rel (0) target = $region21
  $region20: #{gat_model_forward.5} parent=0 // pred_region
    _
  $region21: #{gat_model_forward.5} parent=0 // pred_fallthru
    _
  %v20 = vld [vmem:[%s0] sm:$0xff]
  %v21 = vld [vmem:[%s0 + $0x8] sm:$0xff]
  %v22 = vld [vmem:[%s1] sm:$0xff]
  %v23 = vld [vmem:[%s2] sm:$0x1]
  %v25 = vperm.slane %v23, 0
  %vm27 = vcmask 64512
  %v29 = vsel %vm27, %v20, 0
  %v32 = vsel %vm27, %v21, 0
  %34 = vmatpush.msra.mxu0 0.0
  %35 = vmatpush.msra.mxu0 0.0
  %36 = vmatpush.msra.mxu0 0.0
  %37 = vmatpush.msra.mxu0 0.0
  %38 = vmatpush.msra.mxu0 0.0
  %39 = vmatpush.msra.mxu0 0.0
  %40 = vmatpush.msra.mxu0 0.0
  %41 = vmatpush.msra.mxu0 0.0
  %42 = vmatpush.msra.mxu0 0.0
  %43 = vmatpush.msra.mxu0 0.0
  %44 = vmatpush.msra.mxu0 0.0
  %45 = vmatpush.msra.mxu0 0.0
  %46 = vmatpush.msra.mxu0 0.0
  %47 = vmatpush.msra.mxu0 0.0
  %48 = vmatpush.msra.mxu0 0.0
  %49 = vmatpush.msra.mxu0 %v22
  %50 = vmatmul.f32.gmra.mxu0 %v29
  %v51 = vpop.f32.mrf.mxu0
  %v52 = vadd.f32 %v25, %v51
  %53 = vmatmul.f32.gmra.mxu0 %v32
  %v54 = vpop.f32.mrf.mxu0
  %v55 = vadd.f32 %v25, %v54
  %56 = vdwg.mxu0
  %v57 = vmax.f32 %v52, 0.0
  %v58 = vmax.f32 %v55, 0.0
  %v59 = vld [vmem:[%s3] sm:$0xff]
  %v60 = vld [vmem:[%s3 + $0x8] sm:$0xff]
  %v61 = vld [vmem:[%s4] sm:$0x1]
  %v63 = vperm.slane %v61, 0
  %vm65 = vcmask 130048
  %v67 = vsel %vm65, %v57, 0
  %v70 = vsel %vm65, %v58, 0
  %72 = vmatpush.msra.mxu0 0.0
  %73 = vmatpush.msra.mxu0 0.0
  %74 = vmatpush.msra.mxu0 0.0
  %75 = vmatpush.msra.mxu0 0.0
  %76 = vmatpush.msra.mxu0 0.0
  %77 = vmatpush.msra.mxu0 0.0
  %78 = vmatpush.msra.mxu0 0.0
  %79 = vmatpush.msra.mxu0 0.0
  %80 = vmatpush.msra.mxu0 0.0
  %81 = vmatpush.msra.mxu0 0.0
  %82 = vmatpush.msra.mxu0 0.0
  %83 = vmatpush.msra.mxu0 0.0
  %84 = vmatpush.msra.mxu0 0.0
  %85 = vmatpush.msra.mxu0 0.0
  %86 = vmatpush.msra.mxu0 %v60
  %87 = vmatpush.msra.mxu0 %v59
  %88 = vmatmul.f32.gmra.mxu0 %v67
  %v89 = vpop.f32.mrf.mxu0
  %v90 = vadd.f32 %v63, %v89
  %91 = vmatmul.f32.gmra.mxu0 %v70
  %v92 = vpop.f32.mrf.mxu0
  %v93 = vadd.f32 %v63, %v92
  %94 = vdwg.mxu0
  %vm95 = vcmask 261120
  %96 = vst.msk [vmem:[%s5] sm:$0xff] %vm95, %v90
  %97 = vst.msk [vmem:[%s5 + $0x8] sm:$0xff] %vm95, %v93
  // Predicated region
  $region22: #{gat_model_forward.5} parent=0 // pred_check
    _
  $region23: #{gat_model_forward.5} parent=0 // pred_check_branch
    %99 = sbr.rel (0) target = $region25
  $region24: #{gat_model_forward.5} parent=0 // pred_region
    _
  $region25: #{gat_model_forward.5} parent=0 // pred_fallthru
    _
  // Predicated region
  $region26: #{gat_model_forward.5} parent=0 // pred_check
    _
  $region27: #{gat_model_forward.5} parent=0 // pred_check_branch
    %101 = sbr.rel (0) target = $region29
  $region28: #{gat_model_forward.5} parent=0 // pred_region
    _
  $region29: #{gat_model_forward.5} parent=0 // pred_fallthru
    _

// kernel: gat_model_forward.6
$region0: #{gat_model_forward.6}
  #allocation0 [shape = 'u32[]', space=smem, size = 0x4, offset = 0x4, fixed_abs, tag = 'smem constant byte address 0x4 - core index']
  #allocation1 [shape = 'u32[72,128]{1,0:T(1,128)}', space=vmem, size = 0x9000, scoped, tag = 'internal scratch']
  %s0 = inlined_call_operand.vmem [shape: f32[48,4], index: 0, kind: input, shape index: {}]
  %s1 = inlined_call_operand.vmem [shape: f32[4,16], index: 1, kind: input, shape index: {}]
  %s2 = inlined_call_operand.vmem [shape: f32[1,16], index: 2, kind: input, shape index: {}]
  %s3 = inlined_call_operand.vmem [shape: f32[16,32], index: 3, kind: input, shape index: {}]
  %s4 = inlined_call_operand.vmem [shape: f32[1,32], index: 4, kind: input, shape index: {}]
  %s5 = inlined_call_operand.vmem [shape: f32[48,32], index: 5, kind: output, shape index: {}]
  %s6 = sld [smem:[#allocation0]]
  $region30: #{gat_model_forward.6} parent=0
    _
  %s8 = ssub.s32 1, %s6
  %s9 = scalar_select 0, %s8, %s6
  // Predicated region
  $region2: #{gat_model_forward.6} parent=0 // pred_check
    _
  $region3: #{gat_model_forward.6} parent=0 // pred_check_branch
    %11 = sbr.rel (0) target = $region5
  $region4: #{gat_model_forward.6} parent=0 // pred_region
    _
  $region5: #{gat_model_forward.6} parent=0 // pred_fallthru
    _
  // Predicated region
  $region6: #{gat_model_forward.6} parent=0 // pred_check
    _
  $region7: #{gat_model_forward.6} parent=0 // pred_check_branch
    %13 = sbr.rel (0) target = $region9
  $region8: #{gat_model_forward.6} parent=0 // pred_region
    _
  $region9: #{gat_model_forward.6} parent=0 // pred_fallthru
    _
  // Predicated region
  $region10: #{gat_model_forward.6} parent=0 // pred_check
    _
  $region11: #{gat_model_forward.6} parent=0 // pred_check_branch
    %15 = sbr.rel (0) target = $region13
  $region12: #{gat_model_forward.6} parent=0 // pred_region
    _
  $region13: #{gat_model_forward.6} parent=0 // pred_fallthru
    _
  // Predicated region
  $region14: #{gat_model_forward.6} parent=0 // pred_check
    _
  $region15: #{gat_model_forward.6} parent=0 // pred_check_branch
    %17 = sbr.rel (0) target = $region17
  $region16: #{gat_model_forward.6} parent=0 // pred_region
    _
  $region17: #{gat_model_forward.6} parent=0 // pred_fallthru
    _
  // Predicated region
  $region18: #{gat_model_forward.6} parent=0 // pred_check
    _
  $region19: #{gat_model_forward.6} parent=0 // pred_check_branch
    %19 = sbr.rel (0) target = $region21
  $region20: #{gat_model_forward.6} parent=0 // pred_region
    _
  $region21: #{gat_model_forward.6} parent=0 // pred_fallthru
    _
  %v20 = vld [vmem:[%s0] sm:$0xff]
  %v21 = vld [vmem:[%s0 + $0x8] sm:$0xff]
  %v22 = vld [vmem:[%s0 + $0x10] sm:$0xff]
  %v23 = vld [vmem:[%s0 + $0x18] sm:$0xff]
  %v24 = vld [vmem:[%s0 + $0x20] sm:$0xff]
  %v25 = vld [vmem:[%s0 + $0x28] sm:$0xff]
  %v26 = vld [vmem:[%s1] sm:$0xf]
  %v27 = vld [vmem:[%s2] sm:$0x1]
  %v29 = vperm.slane %v27, 0
  %vm31 = vcmask 31744
  %v33 = vsel %vm31, %v20, 0
  %v36 = vsel %vm31, %v21, 0
  %v39 = vsel %vm31, %v22, 0
  %v42 = vsel %vm31, %v23, 0
  %v45 = vsel %vm31, %v24, 0
  %v48 = vsel %vm31, %v25, 0
  %vm50 = vcmask 1043456
  %v52 = vsel %vm50, %v26, 0
  %54 = vmatpush.msra.mxu0 0.0
  %55 = vmatpush.msra.mxu0 0.0
  %56 = vmatpush.msra.mxu0 0.0
  %57 = vmatpush.msra.mxu0 0.0
  %58 = vmatpush.msra.mxu0 0.0
  %59 = vmatpush.msra.mxu0 0.0
  %60 = vmatpush.msra.mxu0 0.0
  %61 = vmatpush.msra.mxu0 0.0
  %62 = vmatpush.msra.mxu0 0.0
  %63 = vmatpush.msra.mxu0 0.0
  %64 = vmatpush.msra.mxu0 0.0
  %65 = vmatpush.msra.mxu0 0.0
  %66 = vmatpush.msra.mxu0 0.0
  %67 = vmatpush.msra.mxu0 0.0
  %68 = vmatpush.msra.mxu0 0.0
  %69 = vmatpush.msra.mxu0 %v52
  %70 = vmatmul.f32.gmra.mxu0 %v33
  %v71 = vpop.f32.mrf.mxu0
  %v72 = vadd.f32 %v29, %v71
  %73 = vmatmul.f32.gmra.mxu0 %v36
  %v74 = vpop.f32.mrf.mxu0
  %v75 = vadd.f32 %v29, %v74
  %76 = vmatmul.f32.gmra.mxu0 %v39
  %v77 = vpop.f32.mrf.mxu0
  %v78 = vadd.f32 %v29, %v77
  %79 = vmatmul.f32.gmra.mxu0 %v42
  %v80 = vpop.f32.mrf.mxu0
  %v81 = vadd.f32 %v29, %v80
  %82 = vmatmul.f32.gmra.mxu0 %v45
  %v83 = vpop.f32.mrf.mxu0
  %v84 = vadd.f32 %v29, %v83
  %85 = vmatmul.f32.gmra.mxu0 %v48
  %v86 = vpop.f32.mrf.mxu0
  %v87 = vadd.f32 %v29, %v86
  %88 = vdwg.mxu0
  %v89 = vmax.f32 %v72, 0.0
  %v90 = vmax.f32 %v75, 0.0
  %v91 = vmax.f32 %v78, 0.0
  %v92 = vmax.f32 %v81, 0.0
  %v93 = vmax.f32 %v84, 0.0
  %v94 = vmax.f32 %v87, 0.0
  %v95 = vld [vmem:[%s3] sm:$0xff]
  %v96 = vld [vmem:[%s3 + $0x8] sm:$0xff]
  %v97 = vld [vmem:[%s4] sm:$0x1]
  %v99 = vperm.slane %v97, 0
  %vm101 = vcmask 130048
  %v103 = vsel %vm101, %v89, 0
  %v106 = vsel %vm101, %v90, 0
  %v109 = vsel %vm101, %v91, 0
  %v112 = vsel %vm101, %v92, 0
  %v115 = vsel %vm101, %v93, 0
  %v118 = vsel %vm101, %v94, 0
  %120 = vmatpush.msra.mxu0 0.0
  %121 = vmatpush.msra.mxu0 0.0
  %122 = vmatpush.msra.mxu0 0.0
  %123 = vmatpush.msra.mxu0 0.0
  %124 = vmatpush.msra.mxu0 0.0
  %125 = vmatpush.msra.mxu0 0.0
  %126 = vmatpush.msra.mxu0 0.0
  %127 = vmatpush.msra.mxu0 0.0
  %128 = vmatpush.msra.mxu0 0.0
  %129 = vmatpush.msra.mxu0 0.0
  %130 = vmatpush.msra.mxu0 0.0
  %131 = vmatpush.msra.mxu0 0.0
  %132 = vmatpush.msra.mxu0 0.0
  %133 = vmatpush.msra.mxu0 0.0
  %134 = vmatpush.msra.mxu0 %v96
  %135 = vmatpush.msra.mxu0 %v95
  %136 = vmatmul.f32.gmra.mxu0 %v103
  %v137 = vpop.f32.mrf.mxu0
  %v138 = vadd.f32 %v99, %v137
  %139 = vmatmul.f32.gmra.mxu0 %v106
  %v140 = vpop.f32.mrf.mxu0
  %v141 = vadd.f32 %v99, %v140
  %142 = vmatmul.f32.gmra.mxu0 %v109
  %v143 = vpop.f32.mrf.mxu0
  %v144 = vadd.f32 %v99, %v143
  %145 = vmatmul.f32.gmra.mxu0 %v112
  %v146 = vpop.f32.mrf.mxu0
  %v147 = vadd.f32 %v99, %v146
  %148 = vmatmul.f32.gmra.mxu0 %v115
  %v149 = vpop.f32.mrf.mxu0
  %v150 = vadd.f32 %v99, %v149
  %151 = vmatmul.f32.gmra.mxu0 %v118
  %v152 = vpop.f32.mrf.mxu0
  %v153 = vadd.f32 %v99, %v152
  %154 = vdwg.mxu0
  %vm155 = vcmask 261120
  %156 = vst.msk [vmem:[%s5] sm:$0xff] %vm155, %v138
  %157 = vst.msk [vmem:[%s5 + $0x8] sm:$0xff] %vm155, %v141
  %158 = vst.msk [vmem:[%s5 + $0x10] sm:$0xff] %vm155, %v144
  %159 = vst.msk [vmem:[%s5 + $0x18] sm:$0xff] %vm155, %v147
  %160 = vst.msk [vmem:[%s5 + $0x20] sm:$0xff] %vm155, %v150
  %161 = vst.msk [vmem:[%s5 + $0x28] sm:$0xff] %vm155, %v153
  // Predicated region
  $region22: #{gat_model_forward.6} parent=0 // pred_check
    _
  $region23: #{gat_model_forward.6} parent=0 // pred_check_branch
    %163 = sbr.rel (0) target = $region25
  $region24: #{gat_model_forward.6} parent=0 // pred_region
    _
  $region25: #{gat_model_forward.6} parent=0 // pred_fallthru
    _
  // Predicated region
  $region26: #{gat_model_forward.6} parent=0 // pred_check
    _
  $region27: #{gat_model_forward.6} parent=0 // pred_check_branch
    %165 = sbr.rel (0) target = $region29
  $region28: #{gat_model_forward.6} parent=0 // pred_region
    _
  $region29: #{gat_model_forward.6} parent=0 // pred_fallthru
    _

// kernel: gat_model_forward.9
$region0: #{gat_model_forward.9}
  #allocation0 [shape = 'u32[]', space=smem, size = 0x4, offset = 0x4, fixed_abs, tag = 'smem constant byte address 0x4 - core index']
  #allocation1 [shape = 'u32[72,128]{1,0:T(1,128)}', space=vmem, size = 0x9000, scoped, tag = 'internal scratch']
  #allocation2 [shape = 'bf16[128,32]{1,0:T(8,128)(2,1)}', space=vmem, size = 0x8000, scoped, tag = 'scratch operand']
  #allocation3 [shape = 'f32[1,1]{1,0:T(1,128)S(1)}', space=vmem, size = 0x200, scoped, tag = 'scoped memory for gat_model_forward.9']
  %s0 = inlined_call_operand.vmem [shape: bf16[48,128], index: 0, kind: input, shape index: {}]
  %s1 = inlined_call_operand.vmem [shape: bf16[48,128], index: 1, kind: input, shape index: {}]
  %s2 = inlined_call_operand.vmem [shape: f32[48,32], index: 2, kind: input, shape index: {}]
  %s3 = inlined_call_operand.vmem [shape: f32[128,32], index: 3, kind: input, shape index: {}]
  %s4 = inlined_call_operand.vmem [shape: f32[32,32], index: 4, kind: input, shape index: {}]
  %s5 = inlined_call_operand.vmem [shape: f32[32,16], index: 5, kind: input, shape index: {}]
  %s6 = inlined_call_operand.vmem [shape: f32[1,16], index: 6, kind: input, shape index: {}]
  %s7 = inlined_call_operand.vmem [shape: f32[1,16], index: 7, kind: input, shape index: {}]
  %s8 = inlined_call_operand.<no memory space> [shape: f32[1,1], index: 8, kind: input, shape index: {}]
  %s9 = inlined_call_operand.vmem [shape: f32[48,1], index: 9, kind: output, shape index: {}]
  %s10 = sld [smem:[#allocation0]]
  $region50: #{gat_model_forward.9} parent=0
    _
  %s12 = ssub.s32 1, %s10
  %s13 = scalar_select 0, %s12, %s10
  %v14 = vstv %s8
  %15 = vst [vmem:[#allocation3] sm:$0x1] %v14
  // Predicated region
  $region2: #{gat_model_forward.9} parent=0 // pred_check
    _
  $region3: #{gat_model_forward.9} parent=0 // pred_check_branch
    %17 = sbr.rel (0) target = $region5
  $region4: #{gat_model_forward.9} parent=0 // pred_region
    _
  $region5: #{gat_model_forward.9} parent=0 // pred_fallthru
    _
  // Predicated region
  $region6: #{gat_model_forward.9} parent=0 // pred_check
    _
  $region7: #{gat_model_forward.9} parent=0 // pred_check_branch
    %19 = sbr.rel (0) target = $region9
  $region8: #{gat_model_forward.9} parent=0 // pred_region
    _
  $region9: #{gat_model_forward.9} parent=0 // pred_fallthru
    _
  // Predicated region
  $region10: #{gat_model_forward.9} parent=0 // pred_check
    _
  $region11: #{gat_model_forward.9} parent=0 // pred_check_branch
    %21 = sbr.rel (0) target = $region13
  $region12: #{gat_model_forward.9} parent=0 // pred_region
    _
  $region13: #{gat_model_forward.9} parent=0 // pred_fallthru
    _
  // Predicated region
  $region14: #{gat_model_forward.9} parent=0 // pred_check
    _
  $region15: #{gat_model_forward.9} parent=0 // pred_check_branch
    %23 = sbr.rel (0) target = $region17
  $region16: #{gat_model_forward.9} parent=0 // pred_region
    _
  $region17: #{gat_model_forward.9} parent=0 // pred_fallthru
    _
  // Predicated region
  $region18: #{gat_model_forward.9} parent=0 // pred_check
    _
  $region19: #{gat_model_forward.9} parent=0 // pred_check_branch
    %25 = sbr.rel (0) target = $region21
  $region20: #{gat_model_forward.9} parent=0 // pred_region
    _
  $region21: #{gat_model_forward.9} parent=0 // pred_fallthru
    _
  // Predicated region
  $region22: #{gat_model_forward.9} parent=0 // pred_check
    _
  $region23: #{gat_model_forward.9} parent=0 // pred_check_branch
    %27 = sbr.rel (0) target = $region25
  $region24: #{gat_model_forward.9} parent=0 // pred_region
    _
  $region25: #{gat_model_forward.9} parent=0 // pred_fallthru
    _
  // Predicated region
  $region26: #{gat_model_forward.9} parent=0 // pred_check
    _
  $region27: #{gat_model_forward.9} parent=0 // pred_check_branch
    %29 = sbr.rel (0) target = $region29
  $region28: #{gat_model_forward.9} parent=0 // pred_region
    _
  $region29: #{gat_model_forward.9} parent=0 // pred_fallthru
    _
  // Predicated region
  $region30: #{gat_model_forward.9} parent=0 // pred_check
    _
  $region31: #{gat_model_forward.9} parent=0 // pred_check_branch
    %31 = sbr.rel (0) target = $region33
  $region32: #{gat_model_forward.9} parent=0 // pred_region
    _
  $region33: #{gat_model_forward.9} parent=0 // pred_fallthru
    _
  // Predicated region
  $region34: #{gat_model_forward.9} parent=0 // pred_check
    _
  $region35: #{gat_model_forward.9} parent=0 // pred_check_branch
    %33 = sbr.rel (0) target = $region37
  $region36: #{gat_model_forward.9} parent=0 // pred_region
    _
  $region37: #{gat_model_forward.9} parent=0 // pred_fallthru
    _
  %p34 = scmp.eq.s32.totalorder 0, 0
  // Predicated region
  $region38: #{gat_model_forward.9} parent=0 // pred_check
    %p35 = pneg %p34
  $region39: #{gat_model_forward.9} parent=0 // pred_check_branch
    %37 = sbr.rel (%p35) target = $region41
  $region40: #{gat_model_forward.9} parent=0 // pred_region
    %v38 = vld [vmem:[%s3] sm:$0xff]
    %v39 = vld [vmem:[%s3 + $0x8] sm:$0xff]
    %v40 = vld [vmem:[%s3 + $0x10] sm:$0xff]
    %v41 = vld [vmem:[%s3 + $0x18] sm:$0xff]
    %v42 = vld [vmem:[%s3 + $0x20] sm:$0xff]
    %v43 = vld [vmem:[%s3 + $0x28] sm:$0xff]
    %v44 = vld [vmem:[%s3 + $0x30] sm:$0xff]
    %v45 = vld [vmem:[%s3 + $0x38] sm:$0xff]
    %v46 = vld [vmem:[%s3 + $0x40] sm:$0xff]
    %v47 = vld [vmem:[%s3 + $0x48] sm:$0xff]
    %v48 = vld [vmem:[%s3 + $0x50] sm:$0xff]
    %v49 = vld [vmem:[%s3 + $0x58] sm:$0xff]
    %v50 = vld [vmem:[%s3 + $0x60] sm:$0xff]
    %v51 = vld [vmem:[%s3 + $0x68] sm:$0xff]
    %v52 = vld [vmem:[%s3 + $0x70] sm:$0xff]
    %v53 = vld [vmem:[%s3 + $0x78] sm:$0xff]
    %v54 = vld [vmem:[%s4] sm:$0xff]
    %v55 = vld [vmem:[%s4 + $0x8] sm:$0xff]
    %v56 = vld [vmem:[%s4 + $0x10] sm:$0xff]
    %v57 = vld [vmem:[%s4 + $0x18] sm:$0xff]
    %vm58 = vcmask 261120
    %v60 = vsel %vm58, %v38, 0
    %v63 = vsel %vm58, %v39, 0
    %v66 = vsel %vm58, %v40, 0
    %v69 = vsel %vm58, %v41, 0
    %v72 = vsel %vm58, %v42, 0
    %v75 = vsel %vm58, %v43, 0
    %v78 = vsel %vm58, %v44, 0
    %v81 = vsel %vm58, %v45, 0
    %v84 = vsel %vm58, %v46, 0
    %v87 = vsel %vm58, %v47, 0
    %v90 = vsel %vm58, %v48, 0
    %v93 = vsel %vm58, %v49, 0
    %v96 = vsel %vm58, %v50, 0
    %v99 = vsel %vm58, %v51, 0
    %v102 = vsel %vm58, %v52, 0
    %v105 = vsel %vm58, %v53, 0
    %107 = vmatpush.msra.mxu0 0.0
    %108 = vmatpush.msra.mxu0 0.0
    %109 = vmatpush.msra.mxu0 0.0
    %110 = vmatpush.msra.mxu0 0.0
    %111 = vmatpush.msra.mxu0 0.0
    %112 = vmatpush.msra.mxu0 0.0
    %113 = vmatpush.msra.mxu0 0.0
    %114 = vmatpush.msra.mxu0 0.0
    %115 = vmatpush.msra.mxu0 0.0
    %116 = vmatpush.msra.mxu0 0.0
    %117 = vmatpush.msra.mxu0 0.0
    %118 = vmatpush.msra.mxu0 0.0
    %119 = vmatpush.msra.mxu0 %v57
    %120 = vmatpush.msra.mxu0 %v56
    %121 = vmatpush.msra.mxu0 %v55
    %122 = vmatpush.msra.mxu0 %v54
    %123 = vmatmul.f32.gmra.mxu0 %v60
    %v124 = vpop.f32.mrf.mxu0
    %v125 = vadd.f32 0.0, %v124
    %126 = vmatmul.f32.gmra.mxu0 %v63
    %v127 = vpop.f32.mrf.mxu0
    %v128 = vadd.f32 0.0, %v127
    %129 = vmatmul.f32.gmra.mxu0 %v66
    %v130 = vpop.f32.mrf.mxu0
    %v131 = vadd.f32 0.0, %v130
    %132 = vmatmul.f32.gmra.mxu0 %v69
    %v133 = vpop.f32.mrf.mxu0
    %v134 = vadd.f32 0.0, %v133
    %135 = vmatmul.f32.gmra.mxu0 %v72
    %v136 = vpop.f32.mrf.mxu0
    %v137 = vadd.f32 0.0, %v136
    %138 = vmatmul.f32.gmra.mxu0 %v75
    %v139 = vpop.f32.mrf.mxu0
    %v140 = vadd.f32 0.0, %v139
    %141 = vmatmul.f32.gmra.mxu0 %v78
    %v142 = vpop.f32.mrf.mxu0
    %v143 = vadd.f32 0.0, %v142
    %144 = vmatmul.f32.gmra.mxu0 %v81
    %v145 = vpop.f32.mrf.mxu0
    %v146 = vadd.f32 0.0, %v145
    %147 = vmatmul.f32.gmra.mxu0 %v84
    %v148 = vpop.f32.mrf.mxu0
    %v149 = vadd.f32 0.0, %v148
    %150 = vmatmul.f32.gmra.mxu0 %v87
    %v151 = vpop.f32.mrf.mxu0
    %v152 = vadd.f32 0.0, %v151
    %153 = vmatmul.f32.gmra.mxu0 %v90
    %v154 = vpop.f32.mrf.mxu0
    %v155 = vadd.f32 0.0, %v154
    %156 = vmatmul.f32.gmra.mxu0 %v93
    %v157 = vpop.f32.mrf.mxu0
    %v158 = vadd.f32 0.0, %v157
    %159 = vmatmul.f32.gmra.mxu0 %v96
    %v160 = vpop.f32.mrf.mxu0
    %v161 = vadd.f32 0.0, %v160
    %162 = vmatmul.f32.gmra.mxu0 %v99
    %v163 = vpop.f32.mrf.mxu0
    %v164 = vadd.f32 0.0, %v163
    %165 = vmatmul.f32.gmra.mxu0 %v102
    %v166 = vpop.f32.mrf.mxu0
    %v167 = vadd.f32 0.0, %v166
    %168 = vmatmul.f32.gmra.mxu0 %v105
    %v169 = vpop.f32.mrf.mxu0
    %v170 = vadd.f32 0.0, %v169
    %171 = vdwg.mxu0
    %v172 = vpack.c.bf16 %v125, %v125
    %v173 = vpack.c.bf16 %v128, %v128
    %v174 = vpack.c.bf16 %v131, %v131
    %v175 = vpack.c.bf16 %v134, %v134
    %v176 = vpack.c.bf16 %v137, %v137
    %v177 = vpack.c.bf16 %v140, %v140
    %v178 = vpack.c.bf16 %v143, %v143
    %v179 = vpack.c.bf16 %v146, %v146
    %v180 = vpack.c.bf16 %v149, %v149
    %v181 = vpack.c.bf16 %v152, %v152
    %v182 = vpack.c.bf16 %v155, %v155
    %v183 = vpack.c.bf16 %v158, %v158
    %v184 = vpack.c.bf16 %v161, %v161
    %v185 = vpack.c.bf16 %v164, %v164
    %v186 = vpack.c.bf16 %v167, %v167
    %v187 = vpack.c.bf16 %v170, %v170
    %vm188 = vcmask 257024
    %189 = vst.msk [vmem:[#allocation2] sm:$0xf] %vm188, %v172
    %190 = vst.msk [vmem:[#allocation2 + $0x4] sm:$0xf] %vm188, %v173
    %191 = vst.msk [vmem:[#allocation2 + $0x8] sm:$0xf] %vm188, %v174
    %192 = vst.msk [vmem:[#allocation2 + $0xc] sm:$0xf] %vm188, %v175
    %193 = vst.msk [vmem:[#allocation2 + $0x10] sm:$0xf] %vm188, %v176
    %194 = vst.msk [vmem:[#allocation2 + $0x14] sm:$0xf] %vm188, %v177
    %195 = vst.msk [vmem:[#allocation2 + $0x18] sm:$0xf] %vm188, %v178
    %196 = vst.msk [vmem:[#allocation2 + $0x1c] sm:$0xf] %vm188, %v179
    %197 = vst.msk [vmem:[#allocation2 + $0x20] sm:$0xf] %vm188, %v180
    %198 = vst.msk [vmem:[#allocation2 + $0x24] sm:$0xf] %vm188, %v181
    %199 = vst.msk [vmem:[#allocation2 + $0x28] sm:$0xf] %vm188, %v182
    %200 = vst.msk [vmem:[#allocation2 + $0x2c] sm:$0xf] %vm188, %v183
    %201 = vst.msk [vmem:[#allocation2 + $0x30] sm:$0xf] %vm188, %v184
    %202 = vst.msk [vmem:[#allocation2 + $0x34] sm:$0xf] %vm188, %v185
    %203 = vst.msk [vmem:[#allocation2 + $0x38] sm:$0xf] %vm188, %v186
    %204 = vst.msk [vmem:[#allocation2 + $0x3c] sm:$0xf] %vm188, %v187
  $region41: #{gat_model_forward.9} parent=0 // pred_fallthru
    _
  %v205 = vld [vmem:[%s0] sm:$0xf]
  %v206 = vld [vmem:[%s0 + $0x4] sm:$0xf]
  %v207 = vld [vmem:[%s0 + $0x8] sm:$0xf]
  %v208 = vld [vmem:[%s0 + $0xc] sm:$0xf]
  %v209 = vld [vmem:[%s0 + $0x10] sm:$0xf]
  %v210 = vld [vmem:[%s0 + $0x14] sm:$0xf]
  %v211 = vld [vmem:[#allocation2] sm:$0xf]
  %v212 = vld [vmem:[#allocation2 + $0x4] sm:$0xf]
  %v213 = vld [vmem:[#allocation2 + $0x8] sm:$0xf]
  %v214 = vld [vmem:[#allocation2 + $0xc] sm:$0xf]
  %v215 = vld [vmem:[#allocation2 + $0x10] sm:$0xf]
  %v216 = vld [vmem:[#allocation2 + $0x14] sm:$0xf]
  %v217 = vld [vmem:[#allocation2 + $0x18] sm:$0xf]
  %v218 = vld [vmem:[#allocation2 + $0x1c] sm:$0xf]
  %v219 = vld [vmem:[#allocation2 + $0x20] sm:$0xf]
  %v220 = vld [vmem:[#allocation2 + $0x24] sm:$0xf]
  %v221 = vld [vmem:[#allocation2 + $0x28] sm:$0xf]
  %v222 = vld [vmem:[#allocation2 + $0x2c] sm:$0xf]
  %v223 = vld [vmem:[#allocation2 + $0x30] sm:$0xf]
  %v224 = vld [vmem:[#allocation2 + $0x34] sm:$0xf]
  %v225 = vld [vmem:[#allocation2 + $0x38] sm:$0xf]
  %v226 = vld [vmem:[#allocation2 + $0x3c] sm:$0xf]
  %v227 = vld [vmem:[%s1] sm:$0xf]
  %v228 = vld [vmem:[%s1 + $0x4] sm:$0xf]
  %v229 = vld [vmem:[%s1 + $0x8] sm:$0xf]
  %v230 = vld [vmem:[%s1 + $0xc] sm:$0xf]
  %v231 = vld [vmem:[%s1 + $0x10] sm:$0xf]
  %v232 = vld [vmem:[%s1 + $0x14] sm:$0xf]
  %v239 = vunpack.c.l.b16 %v227
  %v240 = vunpack.c.l.b16 %v228
  %v241 = vunpack.c.l.b16 %v229
  %v242 = vunpack.c.l.b16 %v230
  %v243 = vunpack.c.l.b16 %v231
  %v244 = vunpack.c.l.b16 %v232
  %v245 = vpack.c.b16 %v240, %v239
  %v246 = vpack.c.b16 %v242, %v241
  %v247 = vpack.c.b16 %v244, %v243
  %v267 = vunpack.c.l.b16 %v211
  %v268 = vunpack.c.l.b16 %v212
  %v269 = vunpack.c.l.b16 %v213
  %v270 = vunpack.c.l.b16 %v214
  %v271 = vunpack.c.l.b16 %v215
  %v272 = vunpack.c.l.b16 %v216
  %v273 = vunpack.c.l.b16 %v217
  %v274 = vunpack.c.l.b16 %v218
  %v275 = vunpack.c.l.b16 %v219
  %v276 = vunpack.c.l.b16 %v220
  %v277 = vunpack.c.l.b16 %v221
  %v278 = vunpack.c.l.b16 %v222
  %v279 = vunpack.c.l.b16 %v223
  %v280 = vunpack.c.l.b16 %v224
  %v281 = vunpack.c.l.b16 %v225
  %v282 = vunpack.c.l.b16 %v226
  %v283 = vpack.c.b16 %v268, %v267
  %v284 = vpack.c.b16 %v270, %v269
  %v285 = vpack.c.b16 %v272, %v271
  %v286 = vpack.c.b16 %v274, %v273
  %v287 = vpack.c.b16 %v276, %v275
  %v288 = vpack.c.b16 %v278, %v277
  %v289 = vpack.c.b16 %v280, %v279
  %v290 = vpack.c.b16 %v282, %v281
  %291 = vrot.lane.b32.xlu0 %v283, 112
  %v292 = vpop.permute.xlu0 %291
  %293 = vrot.lane.b32.xlu0 %v284, 112
  %v294 = vpop.permute.xlu0 %293
  %295 = vrot.lane.b32.xlu0 %v285, 112
  %v296 = vpop.permute.xlu0 %295
  %297 = vrot.lane.b32.xlu0 %v286, 112
  %v298 = vpop.permute.xlu0 %297
  %299 = vrot.lane.b32.xlu0 %v287, 112
  %v300 = vpop.permute.xlu0 %299
  %301 = vrot.lane.b32.xlu0 %v288, 112
  %v302 = vpop.permute.xlu0 %301
  %303 = vrot.lane.b32.xlu0 %v289, 112
  %v304 = vpop.permute.xlu0 %303
  %305 = vrot.lane.b32.xlu0 %v290, 112
  %v306 = vpop.permute.xlu0 %305
  %315 = vmatpush.bf16.msra.mxu0 %v306
  %316 = vmatpush.bf16.msra.mxu0 %v304
  %317 = vmatpush.bf16.msra.mxu0 %v302
  %318 = vmatpush.bf16.msra.mxu0 %v300
  %319 = vmatpush.bf16.msra.mxu0 %v298
  %320 = vmatpush.bf16.msra.mxu0 %v296
  %321 = vmatpush.bf16.msra.mxu0 %v294
  %322 = vmatpush.bf16.msra.mxu0 %v292
  %323 = vmatmul.bf16.gmra.mxu0 %v245
  %v324 = vpop.f32.mrf.mxu0
  %v325 = vadd.f32 0.0, %v324
  %v326 = vpop.f32.mrf.mxu0
  %v327 = vadd.f32 0.0, %v326
  %328 = vmatmul.bf16.gmra.mxu0 %v246
  %v329 = vpop.f32.mrf.mxu0
  %v330 = vadd.f32 0.0, %v329
  %v331 = vpop.f32.mrf.mxu0
  %v332 = vadd.f32 0.0, %v331
  %333 = vmatmul.bf16.gmra.mxu0 %v247
  %v334 = vpop.f32.mrf.mxu0
  %v335 = vadd.f32 0.0, %v334
  %v336 = vpop.f32.mrf.mxu0
  %v337 = vadd.f32 0.0, %v336
  %338 = vdwg.mxu0
  %v345 = vunpack.c.l.b16 %v205
  %v346 = vunpack.c.l.b16 %v206
  %v347 = vunpack.c.l.b16 %v207
  %v348 = vunpack.c.l.b16 %v208
  %v349 = vunpack.c.l.b16 %v209
  %v350 = vunpack.c.l.b16 %v210
  %v351 = vpack.c.b16 %v346, %v345
  %v352 = vpack.c.b16 %v348, %v347
  %v353 = vpack.c.b16 %v350, %v349
  %365 = vmatpush.bf16.msra.mxu0 %v290
  %366 = vmatpush.bf16.msra.mxu0 %v289
  %367 = vmatpush.bf16.msra.mxu0 %v288
  %368 = vmatpush.bf16.msra.mxu0 %v287
  %369 = vmatpush.bf16.msra.mxu0 %v286
  %370 = vmatpush.bf16.msra.mxu0 %v285
  %371 = vmatpush.bf16.msra.mxu0 %v284
  %372 = vmatpush.bf16.msra.mxu0 %v283
  %373 = vmatmul.bf16.gmra.mxu0 %v351
  %v374 = vpop.f32.mrf.mxu0
  %v375 = vadd.f32 %v325, %v374
  %v376 = vpop.f32.mrf.mxu0
  %v377 = vadd.f32 %v327, %v376
  %378 = vmatmul.bf16.gmra.mxu0 %v352
  %v379 = vpop.f32.mrf.mxu0
  %v380 = vadd.f32 %v330, %v379
  %v381 = vpop.f32.mrf.mxu0
  %v382 = vadd.f32 %v332, %v381
  %383 = vmatmul.bf16.gmra.mxu0 %v353
  %v384 = vpop.f32.mrf.mxu0
  %v385 = vadd.f32 %v335, %v384
  %v386 = vpop.f32.mrf.mxu0
  %v387 = vadd.f32 %v337, %v386
  %388 = vdwg.mxu0
  %v389 = vld [vmem:[%s2] sm:$0xff]
  %v390 = vld [vmem:[%s2 + $0x8] sm:$0xff]
  %v391 = vld [vmem:[%s2 + $0x10] sm:$0xff]
  %v392 = vld [vmem:[%s2 + $0x18] sm:$0xff]
  %v393 = vld [vmem:[%s2 + $0x20] sm:$0xff]
  %v394 = vld [vmem:[%s2 + $0x28] sm:$0xff]
  %v395 = vld [vmem:[%s5] sm:$0xff]
  %v396 = vld [vmem:[%s5 + $0x8] sm:$0xff]
  %v397 = vld [vmem:[%s5 + $0x10] sm:$0xff]
  %v398 = vld [vmem:[%s5 + $0x18] sm:$0xff]
  %vm399 = vcmask 261120
  %v401 = vsel %vm399, %v389, 0
  %v404 = vsel %vm399, %v390, 0
  %v407 = vsel %vm399, %v391, 0
  %v410 = vsel %vm399, %v392, 0
  %v413 = vsel %vm399, %v393, 0
  %v416 = vsel %vm399, %v394, 0
  %418 = vmatpush.msra.mxu0 0.0
  %419 = vmatpush.msra.mxu0 0.0
  %420 = vmatpush.msra.mxu0 0.0
  %421 = vmatpush.msra.mxu0 0.0
  %422 = vmatpush.msra.mxu0 0.0
  %423 = vmatpush.msra.mxu0 0.0
  %424 = vmatpush.msra.mxu0 0.0
  %425 = vmatpush.msra.mxu0 0.0
  %426 = vmatpush.msra.mxu0 0.0
  %427 = vmatpush.msra.mxu0 0.0
  %428 = vmatpush.msra.mxu0 0.0
  %429 = vmatpush.msra.mxu0 0.0
  %430 = vmatpush.msra.mxu0 %v398
  %431 = vmatpush.msra.mxu0 %v397
  %432 = vmatpush.msra.mxu0 %v396
  %433 = vmatpush.msra.mxu0 %v395
  %434 = vmatmul.f32.gmra.mxu0 %v401
  %v435 = vpop.f32.mrf.mxu0
  %v436 = vadd.f32 0.0, %v435
  %437 = vmatmul.f32.gmra.mxu0 %v404
  %v438 = vpop.f32.mrf.mxu0
  %v439 = vadd.f32 0.0, %v438
  %440 = vmatmul.f32.gmra.mxu0 %v407
  %v441 = vpop.f32.mrf.mxu0
  %v442 = vadd.f32 0.0, %v441
  %443 = vmatmul.f32.gmra.mxu0 %v410
  %v444 = vpop.f32.mrf.mxu0
  %v445 = vadd.f32 0.0, %v444
  %446 = vmatmul.f32.gmra.mxu0 %v413
  %v447 = vpop.f32.mrf.mxu0
  %v448 = vadd.f32 0.0, %v447
  %449 = vmatmul.f32.gmra.mxu0 %v416
  %v450 = vpop.f32.mrf.mxu0
  %v451 = vadd.f32 0.0, %v450
  %452 = vdwg.mxu0
  %v453 = vadd.f32 %v375, %v436
  %v454 = vadd.f32 %v377, %v439
  %v455 = vadd.f32 %v380, %v442
  %v456 = vadd.f32 %v382, %v445
  %v457 = vadd.f32 %v385, %v448
  %v458 = vadd.f32 %v387, %v451
  %v459 = vld [vmem:[%s6] sm:$0x1]
  %v461 = vperm.slane %v459, 0
  %v463 = vadd.f32 %v453, %v461
  %v464 = vadd.f32 %v454, %v461
  %v465 = vadd.f32 %v455, %v461
  %v466 = vadd.f32 %v456, %v461
  %v467 = vadd.f32 %v457, %v461
  %v468 = vadd.f32 %v458, %v461
  %v469 = vmax.f32 %v463, 0.0
  %v470 = vmax.f32 %v464, 0.0
  %v471 = vmax.f32 %v465, 0.0
  %v472 = vmax.f32 %v466, 0.0
  %v473 = vmax.f32 %v467, 0.0
  %v474 = vmax.f32 %v468, 0.0
  %v475 = vld [vmem:[%s7] sm:$0x1]
  %v477 = vperm.slane %v475, 0
  %v479 = vmul.f32 %v469, %v477
  %v480 = vmul.f32 %v470, %v477
  %v481 = vmul.f32 %v471, %v477
  %v482 = vmul.f32 %v472, %v477
  %v483 = vmul.f32 %v473, %v477
  %v484 = vmul.f32 %v474, %v477
  %vm485 = vcmask 130048
  %v486 = vsel %vm485, %v479, 0.0
  %487 = vadd.xlane.f32.xlu0 %v486
  %v488 = vpop.xlane.xlu0 %487
  %v489 = vsel %vm485, %v480, 0.0
  %490 = vadd.xlane.f32.xlu0 %v489
  %v491 = vpop.xlane.xlu0 %490
  %v492 = vsel %vm485, %v481, 0.0
  %493 = vadd.xlane.f32.xlu0 %v492
  %v494 = vpop.xlane.xlu0 %493
  %v495 = vsel %vm485, %v482, 0.0
  %496 = vadd.xlane.f32.xlu0 %v495
  %v497 = vpop.xlane.xlu0 %496
  %v498 = vsel %vm485, %v483, 0.0
  %499 = vadd.xlane.f32.xlu0 %v498
  %v500 = vpop.xlane.xlu0 %499
  %v501 = vsel %vm485, %v484, 0.0
  %502 = vadd.xlane.f32.xlu0 %v501
  %v503 = vpop.xlane.xlu0 %502
  %v504 = vld [vmem:[#allocation3] sm:$0x1]
  %v506 = vperm.slane %v504, 0
  %v508 = vadd.f32 %v488, %v506
  %v509 = vadd.f32 %v491, %v506
  %v510 = vadd.f32 %v494, %v506
  %v511 = vadd.f32 %v497, %v506
  %v512 = vadd.f32 %v500, %v506
  %v513 = vadd.f32 %v503, %v506
  %vm514 = vcmask 7168
  %515 = vst.msk [vmem:[%s9] sm:$0xff] %vm514, %v508
  %516 = vst.msk [vmem:[%s9 + $0x8] sm:$0xff] %vm514, %v509
  %517 = vst.msk [vmem:[%s9 + $0x10] sm:$0xff] %vm514, %v510
  %518 = vst.msk [vmem:[%s9 + $0x18] sm:$0xff] %vm514, %v511
  %519 = vst.msk [vmem:[%s9 + $0x20] sm:$0xff] %vm514, %v512
  %520 = vst.msk [vmem:[%s9 + $0x28] sm:$0xff] %vm514, %v513
  // Predicated region
  $region42: #{gat_model_forward.9} parent=0 // pred_check
    _
  $region43: #{gat_model_forward.9} parent=0 // pred_check_branch
    %522 = sbr.rel (0) target = $region45
  $region44: #{gat_model_forward.9} parent=0 // pred_region
    _
  $region45: #{gat_model_forward.9} parent=0 // pred_fallthru
    _
  // Predicated region
  $region46: #{gat_model_forward.9} parent=0 // pred_check
    _
  $region47: #{gat_model_forward.9} parent=0 // pred_check_branch
    %524 = sbr.rel (0) target = $region49
  $region48: #{gat_model_forward.9} parent=0 // pred_region
    _
  $region49: #{gat_model_forward.9} parent=0 // pred_fallthru
    _

// kernel: gat_model_forward.7
$region0: #{gat_model_forward.7}
  #allocation0 [shape = 'u32[]', space=smem, size = 0x4, offset = 0x4, fixed_abs, tag = 'smem constant byte address 0x4 - core index']
  #allocation1 [shape = 'u32[72,128]{1,0:T(1,128)}', space=vmem, size = 0x9000, scoped, tag = 'internal scratch']
  #allocation2 [shape = 'bf16[128,34]{1,0:T(8,128)(2,1)}', space=vmem, size = 0x8000, scoped, tag = 'scratch operand']
  #allocation3 [shape = 'bf16[128,1]{1,0:T(8,128)(2,1)}', space=vmem, size = 0x8000, scoped, tag = 'scratch operand']
  #allocation4 [shape = 'bf16[128,1]{1,0:T(8,128)(2,1)}', space=vmem, size = 0x8000, scoped, tag = 'scratch operand']
  #allocation5 [shape = 'f32[128,33]{1,0:T(8,128)}', space=vmem, size = 0x10000, scoped, tag = 'scratch operand']
  %s0 = inlined_call_operand.vmem [shape: f32[128,32], index: 0, kind: input, shape index: {}]
  %s1 = inlined_call_operand.vmem [shape: f32[48,32], index: 1, kind: input, shape index: {}]
  %s2 = inlined_call_operand.vmem [shape: bf16[48,128], index: 2, kind: input, shape index: {}]
  %s3 = inlined_call_operand.vmem [shape: bf16[48,128], index: 3, kind: input, shape index: {}]
  %s4 = inlined_call_operand.vmem [shape: f32[32,32], index: 4, kind: input, shape index: {}]
  %s5 = inlined_call_operand.vmem [shape: f32[1,32], index: 5, kind: input, shape index: {}]
  %s6 = inlined_call_operand.vmem [shape: f32[32,32], index: 6, kind: input, shape index: {}]
  %s7 = inlined_call_operand.vmem [shape: f32[1,32], index: 7, kind: input, shape index: {}]
  %s8 = inlined_call_operand.vmem [shape: f32[1,32], index: 8, kind: input, shape index: {}]
  %s9 = inlined_call_operand.vmem [shape: f32[128,32], index: 9, kind: output, shape index: {0}]
  %s10 = inlined_call_operand.vmem [shape: f32[48,32], index: 10, kind: output, shape index: {1}]
  %11 = xla_tuple %s9, %s10
  %s12 = sld [smem:[#allocation0]]
  $region62: #{gat_model_forward.7} parent=0
    _
  %s14 = ssub.s32 1, %s12
  %s15 = scalar_select 0, %s14, %s12
  // Predicated region
  $region2: #{gat_model_forward.7} parent=0 // pred_check
    _
  $region3: #{gat_model_forward.7} parent=0 // pred_check_branch
    %17 = sbr.rel (0) target = $region5
  $region4: #{gat_model_forward.7} parent=0 // pred_region
    _
  $region5: #{gat_model_forward.7} parent=0 // pred_fallthru
    _
  // Predicated region
  $region6: #{gat_model_forward.7} parent=0 // pred_check
    _
  $region7: #{gat_model_forward.7} parent=0 // pred_check_branch
    %19 = sbr.rel (0) target = $region9
  $region8: #{gat_model_forward.7} parent=0 // pred_region
    _
  $region9: #{gat_model_forward.7} parent=0 // pred_fallthru
    _
  // Predicated region
  $region10: #{gat_model_forward.7} parent=0 // pred_check
    _
  $region11: #{gat_model_forward.7} parent=0 // pred_check_branch
    %21 = sbr.rel (0) target = $region13
  $region12: #{gat_model_forward.7} parent=0 // pred_region
    _
  $region13: #{gat_model_forward.7} parent=0 // pred_fallthru
    _
  // Predicated region
  $region14: #{gat_model_forward.7} parent=0 // pred_check
    _
  $region15: #{gat_model_forward.7} parent=0 // pred_check_branch
    %23 = sbr.rel (0) target = $region17
  $region16: #{gat_model_forward.7} parent=0 // pred_region
    _
  $region17: #{gat_model_forward.7} parent=0 // pred_fallthru
    _
  // Predicated region
  $region18: #{gat_model_forward.7} parent=0 // pred_check
    _
  $region19: #{gat_model_forward.7} parent=0 // pred_check_branch
    %25 = sbr.rel (0) target = $region21
  $region20: #{gat_model_forward.7} parent=0 // pred_region
    _
  $region21: #{gat_model_forward.7} parent=0 // pred_fallthru
    _
  // Predicated region
  $region22: #{gat_model_forward.7} parent=0 // pred_check
    _
  $region23: #{gat_model_forward.7} parent=0 // pred_check_branch
    %27 = sbr.rel (0) target = $region25
  $region24: #{gat_model_forward.7} parent=0 // pred_region
    _
  $region25: #{gat_model_forward.7} parent=0 // pred_fallthru
    _
  // Predicated region
  $region26: #{gat_model_forward.7} parent=0 // pred_check
    _
  $region27: #{gat_model_forward.7} parent=0 // pred_check_branch
    %29 = sbr.rel (0) target = $region29
  $region28: #{gat_model_forward.7} parent=0 // pred_region
    _
  $region29: #{gat_model_forward.7} parent=0 // pred_fallthru
    _
  // Predicated region
  $region30: #{gat_model_forward.7} parent=0 // pred_check
    _
  $region31: #{gat_model_forward.7} parent=0 // pred_check_branch
    %31 = sbr.rel (0) target = $region33
  $region32: #{gat_model_forward.7} parent=0 // pred_region
    _
  $region33: #{gat_model_forward.7} parent=0 // pred_fallthru
    _
  // Predicated region
  $region34: #{gat_model_forward.7} parent=0 // pred_check
    _
  $region35: #{gat_model_forward.7} parent=0 // pred_check_branch
    %33 = sbr.rel (0) target = $region37
  $region36: #{gat_model_forward.7} parent=0 // pred_region
    _
  $region37: #{gat_model_forward.7} parent=0 // pred_fallthru
    _
  %p37 = scmp.eq.s32.totalorder 0, 0
  // Predicated region
  $region38: #{gat_model_forward.7} parent=0 // pred_check
    %p38 = pneg %p37
  $region39: #{gat_model_forward.7} parent=0 // pred_check_branch
    %40 = sbr.rel (%p38) target = $region41
  $region40: #{gat_model_forward.7} parent=0 // pred_region
    %v41 = vld [vmem:[%s0] sm:$0xff]
    %v42 = vld [vmem:[%s0 + $0x8] sm:$0xff]
    %v43 = vld [vmem:[%s0 + $0x10] sm:$0xff]
    %v44 = vld [vmem:[%s0 + $0x18] sm:$0xff]
    %v45 = vld [vmem:[%s0 + $0x20] sm:$0xff]
    %v46 = vld [vmem:[%s0 + $0x28] sm:$0xff]
    %v47 = vld [vmem:[%s0 + $0x30] sm:$0xff]
    %v48 = vld [vmem:[%s0 + $0x38] sm:$0xff]
    %v49 = vld [vmem:[%s0 + $0x40] sm:$0xff]
    %v50 = vld [vmem:[%s0 + $0x48] sm:$0xff]
    %v51 = vld [vmem:[%s0 + $0x50] sm:$0xff]
    %v52 = vld [vmem:[%s0 + $0x58] sm:$0xff]
    %v53 = vld [vmem:[%s0 + $0x60] sm:$0xff]
    %v54 = vld [vmem:[%s0 + $0x68] sm:$0xff]
    %v55 = vld [vmem:[%s0 + $0x70] sm:$0xff]
    %v56 = vld [vmem:[%s0 + $0x78] sm:$0xff]
    %v57 = vld [vmem:[%s4] sm:$0xff]
    %v58 = vld [vmem:[%s4 + $0x8] sm:$0xff]
    %v59 = vld [vmem:[%s4 + $0x10] sm:$0xff]
    %v60 = vld [vmem:[%s4 + $0x18] sm:$0xff]
    %v61 = vld [vmem:[%s5] sm:$0x1]
    %v63 = vperm.slane %v61, 0
    %vm65 = vcmask 261120
    %v67 = vsel %vm65, %v41, 0
    %v70 = vsel %vm65, %v42, 0
    %v73 = vsel %vm65, %v43, 0
    %v76 = vsel %vm65, %v44, 0
    %v79 = vsel %vm65, %v45, 0
    %v82 = vsel %vm65, %v46, 0
    %v85 = vsel %vm65, %v47, 0
    %v88 = vsel %vm65, %v48, 0
    %v91 = vsel %vm65, %v49, 0
    %v94 = vsel %vm65, %v50, 0
    %v97 = vsel %vm65, %v51, 0
    %v100 = vsel %vm65, %v52, 0
    %v103 = vsel %vm65, %v53, 0
    %v106 = vsel %vm65, %v54, 0
    %v109 = vsel %vm65, %v55, 0
    %v112 = vsel %vm65, %v56, 0
    %114 = vmatpush.msra.mxu0 0.0
    %115 = vmatpush.msra.mxu0 0.0
    %116 = vmatpush.msra.mxu0 0.0
    %117 = vmatpush.msra.mxu0 0.0
    %118 = vmatpush.msra.mxu0 0.0
    %119 = vmatpush.msra.mxu0 0.0
    %120 = vmatpush.msra.mxu0 0.0
    %121 = vmatpush.msra.mxu0 0.0
    %122 = vmatpush.msra.mxu0 0.0
    %123 = vmatpush.msra.mxu0 0.0
    %124 = vmatpush.msra.mxu0 0.0
    %125 = vmatpush.msra.mxu0 0.0
    %126 = vmatpush.msra.mxu0 %v60
    %127 = vmatpush.msra.mxu0 %v59
    %128 = vmatpush.msra.mxu0 %v58
    %129 = vmatpush.msra.mxu0 %v57
    %130 = vmatmul.f32.gmra.mxu0 %v67
    %v131 = vpop.f32.mrf.mxu0
    %v132 = vadd.f32 %v63, %v131
    %133 = vmatmul.f32.gmra.mxu0 %v70
    %v134 = vpop.f32.mrf.mxu0
    %v135 = vadd.f32 %v63, %v134
    %136 = vmatmul.f32.gmra.mxu0 %v73
    %v137 = vpop.f32.mrf.mxu0
    %v138 = vadd.f32 %v63, %v137
    %139 = vmatmul.f32.gmra.mxu0 %v76
    %v140 = vpop.f32.mrf.mxu0
    %v141 = vadd.f32 %v63, %v140
    %142 = vmatmul.f32.gmra.mxu0 %v79
    %v143 = vpop.f32.mrf.mxu0
    %v144 = vadd.f32 %v63, %v143
    %145 = vmatmul.f32.gmra.mxu0 %v82
    %v146 = vpop.f32.mrf.mxu0
    %v147 = vadd.f32 %v63, %v146
    %148 = vmatmul.f32.gmra.mxu0 %v85
    %v149 = vpop.f32.mrf.mxu0
    %v150 = vadd.f32 %v63, %v149
    %151 = vmatmul.f32.gmra.mxu0 %v88
    %v152 = vpop.f32.mrf.mxu0
    %v153 = vadd.f32 %v63, %v152
    %154 = vmatmul.f32.gmra.mxu0 %v91
    %v155 = vpop.f32.mrf.mxu0
    %v156 = vadd.f32 %v63, %v155
    %157 = vmatmul.f32.gmra.mxu0 %v94
    %v158 = vpop.f32.mrf.mxu0
    %v159 = vadd.f32 %v63, %v158
    %160 = vmatmul.f32.gmra.mxu0 %v97
    %v161 = vpop.f32.mrf.mxu0
    %v162 = vadd.f32 %v63, %v161
    %163 = vmatmul.f32.gmra.mxu0 %v100
    %v164 = vpop.f32.mrf.mxu0
    %v165 = vadd.f32 %v63, %v164
    %166 = vmatmul.f32.gmra.mxu0 %v103
    %v167 = vpop.f32.mrf.mxu0
    %v168 = vadd.f32 %v63, %v167
    %169 = vmatmul.f32.gmra.mxu0 %v106
    %v170 = vpop.f32.mrf.mxu0
    %v171 = vadd.f32 %v63, %v170
    %172 = vmatmul.f32.gmra.mxu0 %v109
    %v173 = vpop.f32.mrf.mxu0
    %v174 = vadd.f32 %v63, %v173
    %175 = vmatmul.f32.gmra.mxu0 %v112
    %v176 = vpop.f32.mrf.mxu0
    %v177 = vadd.f32 %v63, %v176
    %178 = vdwg.mxu0
    %v179 = vld [vmem:[%s8] sm:$0x1]
    %v181 = vperm.slane %v179, 0
    %v183 = vmul.f32 %v132, %v181
    %v184 = vmul.f32 %v135, %v181
    %v185 = vmul.f32 %v138, %v181
    %v186 = vmul.f32 %v141, %v181
    %v187 = vmul.f32 %v144, %v181
    %v188 = vmul.f32 %v147, %v181
    %v189 = vmul.f32 %v150, %v181
    %v190 = vmul.f32 %v153, %v181
    %v191 = vmul.f32 %v156, %v181
    %v192 = vmul.f32 %v159, %v181
    %v193 = vmul.f32 %v162, %v181
    %v194 = vmul.f32 %v165, %v181
    %v195 = vmul.f32 %v168, %v181
    %v196 = vmul.f32 %v171, %v181
    %v197 = vmul.f32 %v174, %v181
    %v198 = vmul.f32 %v177, %v181
    %v199 = vsel %vm65, %v183, 0.0
    %200 = vadd.xlane.f32.xlu0 %v199
    %v201 = vpop.xlane.xlu0 %200
    %v202 = vsel %vm65, %v184, 0.0
    %203 = vadd.xlane.f32.xlu0 %v202
    %v204 = vpop.xlane.xlu0 %203
    %v205 = vsel %vm65, %v185, 0.0
    %206 = vadd.xlane.f32.xlu0 %v205
    %v207 = vpop.xlane.xlu0 %206
    %v208 = vsel %vm65, %v186, 0.0
    %209 = vadd.xlane.f32.xlu0 %v208
    %v210 = vpop.xlane.xlu0 %209
    %v211 = vsel %vm65, %v187, 0.0
    %212 = vadd.xlane.f32.xlu0 %v211
    %v213 = vpop.xlane.xlu0 %212
    %v214 = vsel %vm65, %v188, 0.0
    %215 = vadd.xlane.f32.xlu0 %v214
    %v216 = vpop.xlane.xlu0 %215
    %v217 = vsel %vm65, %v189, 0.0
    %218 = vadd.xlane.f32.xlu0 %v217
    %v219 = vpop.xlane.xlu0 %218
    %v220 = vsel %vm65, %v190, 0.0
    %221 = vadd.xlane.f32.xlu0 %v220
    %v222 = vpop.xlane.xlu0 %221
    %v223 = vsel %vm65, %v191, 0.0
    %224 = vadd.xlane.f32.xlu0 %v223
    %v225 = vpop.xlane.xlu0 %224
    %v226 = vsel %vm65, %v192, 0.0
    %227 = vadd.xlane.f32.xlu0 %v226
    %v228 = vpop.xlane.xlu0 %227
    %v229 = vsel %vm65, %v193, 0.0
    %230 = vadd.xlane.f32.xlu0 %v229
    %v231 = vpop.xlane.xlu0 %230
    %v232 = vsel %vm65, %v194, 0.0
    %233 = vadd.xlane.f32.xlu0 %v232
    %v234 = vpop.xlane.xlu0 %233
    %v235 = vsel %vm65, %v195, 0.0
    %236 = vadd.xlane.f32.xlu0 %v235
    %v237 = vpop.xlane.xlu0 %236
    %v238 = vsel %vm65, %v196, 0.0
    %239 = vadd.xlane.f32.xlu0 %v238
    %v240 = vpop.xlane.xlu0 %239
    %v241 = vsel %vm65, %v197, 0.0
    %242 = vadd.xlane.f32.xlu0 %v241
    %v243 = vpop.xlane.xlu0 %242
    %v244 = vsel %vm65, %v198, 0.0
    %245 = vadd.xlane.f32.xlu0 %v244
    %v246 = vpop.xlane.xlu0 %245
    %v247 = vpack.c.bf16 %v132, %v132
    %v248 = vpack.c.bf16 %v135, %v135
    %v249 = vpack.c.bf16 %v138, %v138
    %v250 = vpack.c.bf16 %v141, %v141
    %v251 = vpack.c.bf16 %v144, %v144
    %v252 = vpack.c.bf16 %v147, %v147
    %v253 = vpack.c.bf16 %v150, %v150
    %v254 = vpack.c.bf16 %v153, %v153
    %v255 = vpack.c.bf16 %v156, %v156
    %v256 = vpack.c.bf16 %v159, %v159
    %v257 = vpack.c.bf16 %v162, %v162
    %v258 = vpack.c.bf16 %v165, %v165
    %v259 = vpack.c.bf16 %v168, %v168
    %v260 = vpack.c.bf16 %v171, %v171
    %v261 = vpack.c.bf16 %v174, %v174
    %v262 = vpack.c.bf16 %v177, %v177
    %vm263 = vcmask 257024
    %264 = vst.msk [vmem:[#allocation2] sm:$0xf] %vm263, %v247
    %265 = vst.msk [vmem:[#allocation2 + $0x4] sm:$0xf] %vm263, %v248
    %266 = vst.msk [vmem:[#allocation2 + $0x8] sm:$0xf] %vm263, %v249
    %267 = vst.msk [vmem:[#allocation2 + $0xc] sm:$0xf] %vm263, %v250
    %268 = vst.msk [vmem:[#allocation2 + $0x10] sm:$0xf] %vm263, %v251
    %269 = vst.msk [vmem:[#allocation2 + $0x14] sm:$0xf] %vm263, %v252
    %270 = vst.msk [vmem:[#allocation2 + $0x18] sm:$0xf] %vm263, %v253
    %271 = vst.msk [vmem:[#allocation2 + $0x1c] sm:$0xf] %vm263, %v254
    %272 = vst.msk [vmem:[#allocation2 + $0x20] sm:$0xf] %vm263, %v255
    %273 = vst.msk [vmem:[#allocation2 + $0x24] sm:$0xf] %vm263, %v256
    %274 = vst.msk [vmem:[#allocation2 + $0x28] sm:$0xf] %vm263, %v257
    %275 = vst.msk [vmem:[#allocation2 + $0x2c] sm:$0xf] %vm263, %v258
    %276 = vst.msk [vmem:[#allocation2 + $0x30] sm:$0xf] %vm263, %v259
    %277 = vst.msk [vmem:[#allocation2 + $0x34] sm:$0xf] %vm263, %v260
    %278 = vst.msk [vmem:[#allocation2 + $0x38] sm:$0xf] %vm263, %v261
    %279 = vst.msk [vmem:[#allocation2 + $0x3c] sm:$0xf] %vm263, %v262
    %vm280 = vcmask 265472
    %281 = vst.msk [vmem:[#allocation2] sm:$0xf] %vm280, 1065369472
    %282 = vst.msk [vmem:[#allocation2 + $0x4] sm:$0xf] %vm280, 1065369472
    %283 = vst.msk [vmem:[#allocation2 + $0x8] sm:$0xf] %vm280, 1065369472
    %284 = vst.msk [vmem:[#allocation2 + $0xc] sm:$0xf] %vm280, 1065369472
    %285 = vst.msk [vmem:[#allocation2 + $0x10] sm:$0xf] %vm280, 1065369472
    %286 = vst.msk [vmem:[#allocation2 + $0x14] sm:$0xf] %vm280, 1065369472
    %287 = vst.msk [vmem:[#allocation2 + $0x18] sm:$0xf] %vm280, 1065369472
    %288 = vst.msk [vmem:[#allocation2 + $0x1c] sm:$0xf] %vm280, 1065369472
    %289 = vst.msk [vmem:[#allocation2 + $0x20] sm:$0xf] %vm280, 1065369472
    %290 = vst.msk [vmem:[#allocation2 + $0x24] sm:$0xf] %vm280, 1065369472
    %291 = vst.msk [vmem:[#allocation2 + $0x28] sm:$0xf] %vm280, 1065369472
    %292 = vst.msk [vmem:[#allocation2 + $0x2c] sm:$0xf] %vm280, 1065369472
    %293 = vst.msk [vmem:[#allocation2 + $0x30] sm:$0xf] %vm280, 1065369472
    %294 = vst.msk [vmem:[#allocation2 + $0x34] sm:$0xf] %vm280, 1065369472
    %295 = vst.msk [vmem:[#allocation2 + $0x38] sm:$0xf] %vm280, 1065369472
    %296 = vst.msk [vmem:[#allocation2 + $0x3c] sm:$0xf] %vm280, 1065369472
    %v297 = vpack.c.bf16 %v201, %v201
    %v298 = vpack.c.bf16 %v204, %v204
    %v299 = vpack.c.bf16 %v207, %v207
    %v300 = vpack.c.bf16 %v210, %v210
    %v301 = vpack.c.bf16 %v213, %v213
    %v302 = vpack.c.bf16 %v216, %v216
    %v303 = vpack.c.bf16 %v219, %v219
    %v304 = vpack.c.bf16 %v222, %v222
    %v305 = vpack.c.bf16 %v225, %v225
    %v306 = vpack.c.bf16 %v228, %v228
    %v307 = vpack.c.bf16 %v231, %v231
    %v308 = vpack.c.bf16 %v234, %v234
    %v309 = vpack.c.bf16 %v237, %v237
    %v310 = vpack.c.bf16 %v240, %v240
    %v311 = vpack.c.bf16 %v243, %v243
    %v312 = vpack.c.bf16 %v246, %v246
    %vm313 = vcmask 273672
    %314 = vst.msk [vmem:[#allocation2] sm:$0xf] %vm313, %v297
    %315 = vst.msk [vmem:[#allocation2 + $0x4] sm:$0xf] %vm313, %v298
    %316 = vst.msk [vmem:[#allocation2 + $0x8] sm:$0xf] %vm313, %v299
    %317 = vst.msk [vmem:[#allocation2 + $0xc] sm:$0xf] %vm313, %v300
    %318 = vst.msk [vmem:[#allocation2 + $0x10] sm:$0xf] %vm313, %v301
    %319 = vst.msk [vmem:[#allocation2 + $0x14] sm:$0xf] %vm313, %v302
    %320 = vst.msk [vmem:[#allocation2 + $0x18] sm:$0xf] %vm313, %v303
    %321 = vst.msk [vmem:[#allocation2 + $0x1c] sm:$0xf] %vm313, %v304
    %322 = vst.msk [vmem:[#allocation2 + $0x20] sm:$0xf] %vm313, %v305
    %323 = vst.msk [vmem:[#allocation2 + $0x24] sm:$0xf] %vm313, %v306
    %324 = vst.msk [vmem:[#allocation2 + $0x28] sm:$0xf] %vm313, %v307
    %325 = vst.msk [vmem:[#allocation2 + $0x2c] sm:$0xf] %vm313, %v308
    %326 = vst.msk [vmem:[#allocation2 + $0x30] sm:$0xf] %vm313, %v309
    %327 = vst.msk [vmem:[#allocation2 + $0x34] sm:$0xf] %vm313, %v310
    %328 = vst.msk [vmem:[#allocation2 + $0x38] sm:$0xf] %vm313, %v311
    %329 = vst.msk [vmem:[#allocation2 + $0x3c] sm:$0xf] %vm313, %v312
    %vm330 = vcmask 3072
    %331 = vst.msk [vmem:[#allocation3] sm:$0xf] %vm330, %v297
    %332 = vst.msk [vmem:[#allocation3 + $0x4] sm:$0xf] %vm330, %v298
    %333 = vst.msk [vmem:[#allocation3 + $0x8] sm:$0xf] %vm330, %v299
    %334 = vst.msk [vmem:[#allocation3 + $0xc] sm:$0xf] %vm330, %v300
    %335 = vst.msk [vmem:[#allocation3 + $0x10] sm:$0xf] %vm330, %v301
    %336 = vst.msk [vmem:[#allocation3 + $0x14] sm:$0xf] %vm330, %v302
    %337 = vst.msk [vmem:[#allocation3 + $0x18] sm:$0xf] %vm330, %v303
    %338 = vst.msk [vmem:[#allocation3 + $0x1c] sm:$0xf] %vm330, %v304
    %339 = vst.msk [vmem:[#allocation3 + $0x20] sm:$0xf] %vm330, %v305
    %340 = vst.msk [vmem:[#allocation3 + $0x24] sm:$0xf] %vm330, %v306
    %341 = vst.msk [vmem:[#allocation3 + $0x28] sm:$0xf] %vm330, %v307
    %342 = vst.msk [vmem:[#allocation3 + $0x2c] sm:$0xf] %vm330, %v308
    %343 = vst.msk [vmem:[#allocation3 + $0x30] sm:$0xf] %vm330, %v309
    %344 = vst.msk [vmem:[#allocation3 + $0x34] sm:$0xf] %vm330, %v310
    %345 = vst.msk [vmem:[#allocation3 + $0x38] sm:$0xf] %vm330, %v311
    %346 = vst.msk [vmem:[#allocation3 + $0x3c] sm:$0xf] %vm330, %v312
    %347 = vst.msk [vmem:[#allocation4] sm:$0xf] %vm330, 4048220490
    %348 = vst.msk [vmem:[#allocation4 + $0x4] sm:$0xf] %vm330, 4048220490
    %349 = vst.msk [vmem:[#allocation4 + $0x8] sm:$0xf] %vm330, 4048220490
    %350 = vst.msk [vmem:[#allocation4 + $0xc] sm:$0xf] %vm330, 4048220490
    %351 = vst.msk [vmem:[#allocation4 + $0x10] sm:$0xf] %vm330, 4048220490
    %352 = vst.msk [vmem:[#allocation4 + $0x14] sm:$0xf] %vm330, 4048220490
    %353 = vst.msk [vmem:[#allocation4 + $0x18] sm:$0xf] %vm330, 4048220490
    %354 = vst.msk [vmem:[#allocation4 + $0x1c] sm:$0xf] %vm330, 4048220490
    %355 = vst.msk [vmem:[#allocation4 + $0x20] sm:$0xf] %vm330, 4048220490
    %356 = vst.msk [vmem:[#allocation4 + $0x24] sm:$0xf] %vm330, 4048220490
    %357 = vst.msk [vmem:[#allocation4 + $0x28] sm:$0xf] %vm330, 4048220490
    %358 = vst.msk [vmem:[#allocation4 + $0x2c] sm:$0xf] %vm330, 4048220490
    %359 = vst.msk [vmem:[#allocation4 + $0x30] sm:$0xf] %vm330, 4048220490
    %360 = vst.msk [vmem:[#allocation4 + $0x34] sm:$0xf] %vm330, 4048220490
    %361 = vst.msk [vmem:[#allocation4 + $0x38] sm:$0xf] %vm330, 4048220490
    %362 = vst.msk [vmem:[#allocation4 + $0x3c] sm:$0xf] %vm330, 4048220490
    %vm363 = vcmask 269312
    %364 = vst.msk [vmem:[#allocation5] sm:$0xff] %vm363, 0.0
    %365 = vst.msk [vmem:[#allocation5 + $0x8] sm:$0xff] %vm363, 0.0
    %366 = vst.msk [vmem:[#allocation5 + $0x10] sm:$0xff] %vm363, 0.0
    %367 = vst.msk [vmem:[#allocation5 + $0x18] sm:$0xff] %vm363, 0.0
    %368 = vst.msk [vmem:[#allocation5 + $0x20] sm:$0xff] %vm363, 0.0
    %369 = vst.msk [vmem:[#allocation5 + $0x28] sm:$0xff] %vm363, 0.0
    %370 = vst.msk [vmem:[#allocation5 + $0x30] sm:$0xff] %vm363, 0.0
    %371 = vst.msk [vmem:[#allocation5 + $0x38] sm:$0xff] %vm363, 0.0
    %372 = vst.msk [vmem:[#allocation5 + $0x40] sm:$0xff] %vm363, 0.0
    %373 = vst.msk [vmem:[#allocation5 + $0x48] sm:$0xff] %vm363, 0.0
    %374 = vst.msk [vmem:[#allocation5 + $0x50] sm:$0xff] %vm363, 0.0
    %375 = vst.msk [vmem:[#allocation5 + $0x58] sm:$0xff] %vm363, 0.0
    %376 = vst.msk [vmem:[#allocation5 + $0x60] sm:$0xff] %vm363, 0.0
    %377 = vst.msk [vmem:[#allocation5 + $0x68] sm:$0xff] %vm363, 0.0
    %378 = vst.msk [vmem:[#allocation5 + $0x70] sm:$0xff] %vm363, 0.0
    %379 = vst.msk [vmem:[#allocation5 + $0x78] sm:$0xff] %vm363, 0.0
  $region41: #{gat_model_forward.7} parent=0 // pred_fallthru
    _
  %v380 = vld [vmem:[%s2] sm:$0xf]
  %v381 = vld [vmem:[%s2 + $0x4] sm:$0xf]
  %v382 = vld [vmem:[%s2 + $0x8] sm:$0xf]
  %v383 = vld [vmem:[%s2 + $0xc] sm:$0xf]
  %v384 = vld [vmem:[%s2 + $0x10] sm:$0xf]
  %v385 = vld [vmem:[%s2 + $0x14] sm:$0xf]
  %v386 = vld [vmem:[%s3] sm:$0xf]
  %v387 = vld [vmem:[%s3 + $0x4] sm:$0xf]
  %v388 = vld [vmem:[%s3 + $0x8] sm:$0xf]
  %v389 = vld [vmem:[%s3 + $0xc] sm:$0xf]
  %v390 = vld [vmem:[%s3 + $0x10] sm:$0xf]
  %v391 = vld [vmem:[%s3 + $0x14] sm:$0xf]
  %v392 = vld [vmem:[%s1] sm:$0xff]
  %v393 = vld [vmem:[%s1 + $0x8] sm:$0xff]
  %v394 = vld [vmem:[%s1 + $0x10] sm:$0xff]
  %v395 = vld [vmem:[%s1 + $0x18] sm:$0xff]
  %v396 = vld [vmem:[%s1 + $0x20] sm:$0xff]
  %v397 = vld [vmem:[%s1 + $0x28] sm:$0xff]
  %v398 = vld [vmem:[%s8] sm:$0x1]
  %v399 = vld [vmem:[%s6] sm:$0xff]
  %v400 = vld [vmem:[%s6 + $0x8] sm:$0xff]
  %v401 = vld [vmem:[%s6 + $0x10] sm:$0xff]
  %v402 = vld [vmem:[%s6 + $0x18] sm:$0xff]
  %v403 = vld [vmem:[%s7] sm:$0x1]
  %v405 = vperm.slane %v403, 0
  %vm407 = vcmask 261120
  %v409 = vsel %vm407, %v392, 0
  %v412 = vsel %vm407, %v393, 0
  %v415 = vsel %vm407, %v394, 0
  %v418 = vsel %vm407, %v395, 0
  %v421 = vsel %vm407, %v396, 0
  %v424 = vsel %vm407, %v397, 0
  %426 = vmatpush.msra.mxu0 0.0
  %427 = vmatpush.msra.mxu0 0.0
  %428 = vmatpush.msra.mxu0 0.0
  %429 = vmatpush.msra.mxu0 0.0
  %430 = vmatpush.msra.mxu0 0.0
  %431 = vmatpush.msra.mxu0 0.0
  %432 = vmatpush.msra.mxu0 0.0
  %433 = vmatpush.msra.mxu0 0.0
  %434 = vmatpush.msra.mxu0 0.0
  %435 = vmatpush.msra.mxu0 0.0
  %436 = vmatpush.msra.mxu0 0.0
  %437 = vmatpush.msra.mxu0 0.0
  %438 = vmatpush.msra.mxu0 %v402
  %439 = vmatpush.msra.mxu0 %v401
  %440 = vmatpush.msra.mxu0 %v400
  %441 = vmatpush.msra.mxu0 %v399
  %442 = vmatmul.f32.gmra.mxu0 %v409
  %v443 = vpop.f32.mrf.mxu0
  %v444 = vadd.f32 %v405, %v443
  %445 = vmatmul.f32.gmra.mxu0 %v412
  %v446 = vpop.f32.mrf.mxu0
  %v447 = vadd.f32 %v405, %v446
  %448 = vmatmul.f32.gmra.mxu0 %v415
  %v449 = vpop.f32.mrf.mxu0
  %v450 = vadd.f32 %v405, %v449
  %451 = vmatmul.f32.gmra.mxu0 %v418
  %v452 = vpop.f32.mrf.mxu0
  %v453 = vadd.f32 %v405, %v452
  %454 = vmatmul.f32.gmra.mxu0 %v421
  %v455 = vpop.f32.mrf.mxu0
  %v456 = vadd.f32 %v405, %v455
  %457 = vmatmul.f32.gmra.mxu0 %v424
  %v458 = vpop.f32.mrf.mxu0
  %v459 = vadd.f32 %v405, %v458
  %460 = vdwg.mxu0
  %v461 = vadd.f32 %v392, %v444
  %v462 = vadd.f32 %v393, %v447
  %v463 = vadd.f32 %v394, %v450
  %v464 = vadd.f32 %v395, %v453
  %v465 = vadd.f32 %v396, %v456
  %v466 = vadd.f32 %v397, %v459
  %v467 = vmax.f32 %v461, 0.0
  %v468 = vmax.f32 %v462, 0.0
  %v469 = vmax.f32 %v463, 0.0
  %v470 = vmax.f32 %v464, 0.0
  %v471 = vmax.f32 %v465, 0.0
  %v472 = vmax.f32 %v466, 0.0
  %473 = vst.msk [vmem:[%s10] sm:$0xff] %vm407, %v467
  %474 = vst.msk [vmem:[%s10 + $0x8] sm:$0xff] %vm407, %v468
  %475 = vst.msk [vmem:[%s10 + $0x10] sm:$0xff] %vm407, %v469
  %476 = vst.msk [vmem:[%s10 + $0x18] sm:$0xff] %vm407, %v470
  %477 = vst.msk [vmem:[%s10 + $0x20] sm:$0xff] %vm407, %v471
  %478 = vst.msk [vmem:[%s10 + $0x28] sm:$0xff] %vm407, %v472
  %v479 = vld [vmem:[#allocation2] sm:$0xf]
  %v480 = vld [vmem:[#allocation2 + $0x4] sm:$0xf]
  %v481 = vld [vmem:[#allocation2 + $0x8] sm:$0xf]
  %v482 = vld [vmem:[#allocation2 + $0xc] sm:$0xf]
  %v483 = vld [vmem:[#allocation2 + $0x10] sm:$0xf]
  %v484 = vld [vmem:[#allocation2 + $0x14] sm:$0xf]
  %v485 = vld [vmem:[#allocation2 + $0x18] sm:$0xf]
  %v486 = vld [vmem:[#allocation2 + $0x1c] sm:$0xf]
  %v487 = vld [vmem:[#allocation2 + $0x20] sm:$0xf]
  %v488 = vld [vmem:[#allocation2 + $0x24] sm:$0xf]
  %v489 = vld [vmem:[#allocation2 + $0x28] sm:$0xf]
  %v490 = vld [vmem:[#allocation2 + $0x2c] sm:$0xf]
  %v491 = vld [vmem:[#allocation2 + $0x30] sm:$0xf]
  %v492 = vld [vmem:[#allocation2 + $0x34] sm:$0xf]
  %v493 = vld [vmem:[#allocation2 + $0x38] sm:$0xf]
  %v494 = vld [vmem:[#allocation2 + $0x3c] sm:$0xf]
  %v501 = vunpack.c.l.b16 %v380
  %v502 = vunpack.c.l.b16 %v381
  %v503 = vunpack.c.l.b16 %v382
  %v504 = vunpack.c.l.b16 %v383
  %v505 = vunpack.c.l.b16 %v384
  %v506 = vunpack.c.l.b16 %v385
  %v507 = vpack.c.b16 %v502, %v501
  %v508 = vpack.c.b16 %v504, %v503
  %v509 = vpack.c.b16 %v506, %v505
  %v529 = vunpack.c.l.b16 %v479
  %v530 = vunpack.c.l.b16 %v480
  %v531 = vunpack.c.l.b16 %v481
  %v532 = vunpack.c.l.b16 %v482
  %v533 = vunpack.c.l.b16 %v483
  %v534 = vunpack.c.l.b16 %v484
  %v535 = vunpack.c.l.b16 %v485
  %v536 = vunpack.c.l.b16 %v486
  %v537 = vunpack.c.l.b16 %v487
  %v538 = vunpack.c.l.b16 %v488
  %v539 = vunpack.c.l.b16 %v489
  %v540 = vunpack.c.l.b16 %v490
  %v541 = vunpack.c.l.b16 %v491
  %v542 = vunpack.c.l.b16 %v492
  %v543 = vunpack.c.l.b16 %v493
  %v544 = vunpack.c.l.b16 %v494
  %v545 = vpack.c.b16 %v530, %v529
  %v546 = vpack.c.b16 %v532, %v531
  %v547 = vpack.c.b16 %v534, %v533
  %v548 = vpack.c.b16 %v536, %v535
  %v549 = vpack.c.b16 %v538, %v537
  %v550 = vpack.c.b16 %v540, %v539
  %v551 = vpack.c.b16 %v542, %v541
  %v552 = vpack.c.b16 %v544, %v543
  %561 = vmatpush.bf16.msra.mxu0 %v552
  %562 = vmatpush.bf16.msra.mxu0 %v551
  %563 = vmatpush.bf16.msra.mxu0 %v550
  %564 = vmatpush.bf16.msra.mxu0 %v549
  %565 = vmatpush.bf16.msra.mxu0 %v548
  %566 = vmatpush.bf16.msra.mxu0 %v547
  %567 = vmatpush.bf16.msra.mxu0 %v546
  %568 = vmatpush.bf16.msra.mxu0 %v545
  %569 = vmatmul.bf16.gmra.mxu0 %v507
  %v570 = vpop.f32.mrf.mxu0
  %v571 = vadd.f32 0.0, %v570
  %v572 = vpop.f32.mrf.mxu0
  %v573 = vadd.f32 0.0, %v572
  %574 = vmatmul.bf16.gmra.mxu0 %v508
  %v575 = vpop.f32.mrf.mxu0
  %v576 = vadd.f32 0.0, %v575
  %v577 = vpop.f32.mrf.mxu0
  %v578 = vadd.f32 0.0, %v577
  %579 = vmatmul.bf16.gmra.mxu0 %v509
  %v580 = vpop.f32.mrf.mxu0
  %v581 = vadd.f32 0.0, %v580
  %v582 = vpop.f32.mrf.mxu0
  %v583 = vadd.f32 0.0, %v582
  %584 = vdwg.mxu0
  %v585 = vld [vmem:[#allocation3] sm:$0xf]
  %v586 = vld [vmem:[#allocation3 + $0x4] sm:$0xf]
  %v587 = vld [vmem:[#allocation3 + $0x8] sm:$0xf]
  %v588 = vld [vmem:[#allocation3 + $0xc] sm:$0xf]
  %v589 = vld [vmem:[#allocation3 + $0x10] sm:$0xf]
  %v590 = vld [vmem:[#allocation3 + $0x14] sm:$0xf]
  %v591 = vld [vmem:[#allocation3 + $0x18] sm:$0xf]
  %v592 = vld [vmem:[#allocation3 + $0x1c] sm:$0xf]
  %v593 = vld [vmem:[#allocation3 + $0x20] sm:$0xf]
  %v594 = vld [vmem:[#allocation3 + $0x24] sm:$0xf]
  %v595 = vld [vmem:[#allocation3 + $0x28] sm:$0xf]
  %v596 = vld [vmem:[#allocation3 + $0x2c] sm:$0xf]
  %v597 = vld [vmem:[#allocation3 + $0x30] sm:$0xf]
  %v598 = vld [vmem:[#allocation3 + $0x34] sm:$0xf]
  %v599 = vld [vmem:[#allocation3 + $0x38] sm:$0xf]
  %v600 = vld [vmem:[#allocation3 + $0x3c] sm:$0xf]
  %v607 = vunpack.c.l.b16 %v386
  %v608 = vunpack.c.l.b16 %v387
  %v609 = vunpack.c.l.b16 %v388
  %v610 = vunpack.c.l.b16 %v389
  %v611 = vunpack.c.l.b16 %v390
  %v612 = vunpack.c.l.b16 %v391
  %v613 = vpack.c.b16 %v608, %v607
  %v614 = vpack.c.b16 %v610, %v609
  %v615 = vpack.c.b16 %v612, %v611
  %v635 = vunpack.c.l.b16 %v585
  %v636 = vunpack.c.l.b16 %v586
  %v637 = vunpack.c.l.b16 %v587
  %v638 = vunpack.c.l.b16 %v588
  %v639 = vunpack.c.l.b16 %v589
  %v640 = vunpack.c.l.b16 %v590
  %v641 = vunpack.c.l.b16 %v591
  %v642 = vunpack.c.l.b16 %v592
  %v643 = vunpack.c.l.b16 %v593
  %v644 = vunpack.c.l.b16 %v594
  %v645 = vunpack.c.l.b16 %v595
  %v646 = vunpack.c.l.b16 %v596
  %v647 = vunpack.c.l.b16 %v597
  %v648 = vunpack.c.l.b16 %v598
  %v649 = vunpack.c.l.b16 %v599
  %v650 = vunpack.c.l.b16 %v600
  %v651 = vpack.c.b16 %v636, %v635
  %v652 = vpack.c.b16 %v638, %v637
  %v653 = vpack.c.b16 %v640, %v639
  %v654 = vpack.c.b16 %v642, %v641
  %v655 = vpack.c.b16 %v644, %v643
  %v656 = vpack.c.b16 %v646, %v645
  %v657 = vpack.c.b16 %v648, %v647
  %v658 = vpack.c.b16 %v650, %v649
  %667 = vmatpush.bf16.msra.mxu0 %v658
  %668 = vmatpush.bf16.msra.mxu0 %v657
  %669 = vmatpush.bf16.msra.mxu0 %v656
  %670 = vmatpush.bf16.msra.mxu0 %v655
  %671 = vmatpush.bf16.msra.mxu0 %v654
  %672 = vmatpush.bf16.msra.mxu0 %v653
  %673 = vmatpush.bf16.msra.mxu0 %v652
  %674 = vmatpush.bf16.msra.mxu0 %v651
  %675 = vmatmul.bf16.gmra.mxu0 %v613
  %v676 = vpop.f32.mrf.mxu0
  %v677 = vadd.f32 0.0, %v676
  %v678 = vpop.f32.mrf.mxu0
  %v679 = vadd.f32 0.0, %v678
  %680 = vmatmul.bf16.gmra.mxu0 %v614
  %v681 = vpop.f32.mrf.mxu0
  %v682 = vadd.f32 0.0, %v681
  %v683 = vpop.f32.mrf.mxu0
  %v684 = vadd.f32 0.0, %v683
  %685 = vmatmul.bf16.gmra.mxu0 %v615
  %v686 = vpop.f32.mrf.mxu0
  %v687 = vadd.f32 0.0, %v686
  %v688 = vpop.f32.mrf.mxu0
  %v689 = vadd.f32 0.0, %v688
  %690 = vdwg.mxu0
  %v692 = vperm.slane %v398, 0
  %v694 = vmul.f32 %v444, %v692
  %v695 = vmul.f32 %v447, %v692
  %v696 = vmul.f32 %v450, %v692
  %v697 = vmul.f32 %v453, %v692
  %v698 = vmul.f32 %v456, %v692
  %v699 = vmul.f32 %v459, %v692
  %v700 = vsel %vm407, %v694, 0.0
  %701 = vadd.xlane.f32.xlu0 %v700
  %v702 = vpop.xlane.xlu0 %701
  %v703 = vsel %vm407, %v695, 0.0
  %704 = vadd.xlane.f32.xlu0 %v703
  %v705 = vpop.xlane.xlu0 %704
  %v706 = vsel %vm407, %v696, 0.0
  %707 = vadd.xlane.f32.xlu0 %v706
  %v708 = vpop.xlane.xlu0 %707
  %v709 = vsel %vm407, %v697, 0.0
  %710 = vadd.xlane.f32.xlu0 %v709
  %v711 = vpop.xlane.xlu0 %710
  %v712 = vsel %vm407, %v698, 0.0
  %713 = vadd.xlane.f32.xlu0 %v712
  %v714 = vpop.xlane.xlu0 %713
  %v715 = vsel %vm407, %v699, 0.0
  %716 = vadd.xlane.f32.xlu0 %v715
  %v717 = vpop.xlane.xlu0 %716
  %724 = vrot.lane.b32.xlu0 %v677, 33
  %v725 = vpop.permute.xlu0 %724
  %726 = vrot.lane.b32.xlu0 %v679, 33
  %v727 = vpop.permute.xlu0 %726
  %728 = vrot.lane.b32.xlu0 %v682, 33
  %v729 = vpop.permute.xlu0 %728
  %730 = vrot.lane.b32.xlu0 %v684, 33
  %v731 = vpop.permute.xlu0 %730
  %732 = vrot.lane.b32.xlu0 %v687, 33
  %v733 = vpop.permute.xlu0 %732
  %734 = vrot.lane.b32.xlu0 %v689, 33
  %v735 = vpop.permute.xlu0 %734
  %v742 = vadd.f32 %v571, %v725
  %v743 = vadd.f32 %v573, %v727
  %v744 = vadd.f32 %v576, %v729
  %v745 = vadd.f32 %v578, %v731
  %v746 = vadd.f32 %v581, %v733
  %v747 = vadd.f32 %v583, %v735
  %v748 = vadd.f32 %v742, %v702
  %v749 = vadd.f32 %v743, %v705
  %v750 = vadd.f32 %v744, %v708
  %v751 = vadd.f32 %v745, %v711
  %v752 = vadd.f32 %v746, %v714
  %v753 = vadd.f32 %v747, %v717
  %vm754 = vcmp.gt.f32.partialorder %v748, 0.0
  %vm755 = vcmp.gt.f32.partialorder %v749, 0.0
  %vm756 = vcmp.gt.f32.partialorder %v750, 0.0
  %vm757 = vcmp.gt.f32.partialorder %v751, 0.0
  %vm758 = vcmp.gt.f32.partialorder %v752, 0.0
  %vm759 = vcmp.gt.f32.partialorder %v753, 0.0
  %v760 = vmul.f32 %v748, 0.2
  %v761 = vmul.f32 %v749, 0.2
  %v762 = vmul.f32 %v750, 0.2
  %v763 = vmul.f32 %v751, 0.2
  %v764 = vmul.f32 %v752, 0.2
  %v765 = vmul.f32 %v753, 0.2
  %v766 = vsel %vm754, %v748, %v760
  %v767 = vsel %vm755, %v749, %v761
  %v768 = vsel %vm756, %v750, %v762
  %v769 = vsel %vm757, %v751, %v763
  %v770 = vsel %vm758, %v752, %v764
  %v771 = vsel %vm759, %v753, %v765
  %v772 = vunpack.c.l.bf16 %v386
  %v773 = vunpack.c.l.bf16 %v387
  %v774 = vunpack.c.l.bf16 %v388
  %v775 = vunpack.c.l.bf16 %v389
  %v776 = vunpack.c.l.bf16 %v390
  %v777 = vunpack.c.l.bf16 %v391
  %vm778 = vcmp.gt.f32.partialorder %v772, 0.0
  %vm779 = vcmp.gt.f32.partialorder %v773, 0.0
  %vm780 = vcmp.gt.f32.partialorder %v774, 0.0
  %vm781 = vcmp.gt.f32.partialorder %v775, 0.0
  %vm782 = vcmp.gt.f32.partialorder %v776, 0.0
  %vm783 = vcmp.gt.f32.partialorder %v777, 0.0
  %785 = vset.pattern.permute.xlu0 33
  %786 = vperm.xlu0 %785, %v766
  %v787 = vpop.permute.xlu0 %786
  %790 = vset.pattern.permute.xlu0 33
  %791 = vperm.xlu0 %790, %v767
  %v792 = vpop.permute.xlu0 %791
  %795 = vset.pattern.permute.xlu0 33
  %796 = vperm.xlu0 %795, %v768
  %v797 = vpop.permute.xlu0 %796
  %800 = vset.pattern.permute.xlu0 33
  %801 = vperm.xlu0 %800, %v769
  %v802 = vpop.permute.xlu0 %801
  %805 = vset.pattern.permute.xlu0 33
  %806 = vperm.xlu0 %805, %v770
  %v807 = vpop.permute.xlu0 %806
  %810 = vset.pattern.permute.xlu0 33
  %811 = vperm.xlu0 %810, %v771
  %v812 = vpop.permute.xlu0 %811
  %v814 = vsel %vm778, %v787, -1e+30
  %v815 = vsel %vm779, %v792, -1e+30
  %v816 = vsel %vm780, %v797, -1e+30
  %v817 = vsel %vm781, %v802, -1e+30
  %v818 = vsel %vm782, %v807, -1e+30
  %v819 = vsel %vm783, %v812, -1e+30
  %v820 = vmax.f32 %v814, %v818
  %v821 = vmax.f32 %v815, %v819
  %v822 = vmax.f32 %v820, %v821
  %v823 = vmax.f32 %v816, %v817
  %v824 = vmax.f32 %v822, %v823
  %v825 = vrot.slane %v824, 4
  %v826 = vmax.f32 %v824, %v825
  %v827 = vrot.slane %v826, 2
  %v828 = vmax.f32 %v826, %v827
  %v829 = vrot.slane %v828, 1
  %v830 = vmax.f32 %v828, %v829
  %831 = vxpose.xlu0.b32.start [1/16] %v830, 128
  %832 = vxpose.xlu0.b32.cont [2/16] 0.0, 128
  %833 = vxpose.xlu0.b32.cont [3/16] 0.0, 128
  %834 = vxpose.xlu0.b32.cont [4/16] 0.0, 128
  %835 = vxpose.xlu0.b32.cont [5/16] 0.0, 128
  %836 = vxpose.xlu0.b32.cont [6/16] 0.0, 128
  %837 = vxpose.xlu0.b32.cont [7/16] 0.0, 128
  %838 = vxpose.xlu0.b32.cont [8/16] 0.0, 128
  %839 = vxpose.xlu0.b32.cont [9/16] 0.0, 128
  %840 = vxpose.xlu0.b32.cont [10/16] 0.0, 128
  %841 = vxpose.xlu0.b32.cont [11/16] 0.0, 128
  %842 = vxpose.xlu0.b32.cont [12/16] 0.0, 128
  %843 = vxpose.xlu0.b32.cont [13/16] 0.0, 128
  %844 = vxpose.xlu0.b32.cont [14/16] 0.0, 128
  %845 = vxpose.xlu0.b32.cont [15/16] 0.0, 128
  %846 = vxpose.xlu0.b32.end [16/16] 0.0, 128
  %v847 = vpop.trf.xlu0
  %v848 = vpop.trf.xlu0
  %v849 = vpop.trf.xlu0
  %v850 = vpop.trf.xlu0
  %v851 = vpop.trf.xlu0
  %v852 = vpop.trf.xlu0
  %v853 = vpop.trf.xlu0
  %v854 = vpop.trf.xlu0
  %v855 = vpop.trf.xlu0
  %v856 = vpop.trf.xlu0
  %v857 = vpop.trf.xlu0
  %v858 = vpop.trf.xlu0
  %v859 = vpop.trf.xlu0
  %v860 = vpop.trf.xlu0
  %v861 = vpop.trf.xlu0
  %v862 = vpop.trf.xlu0
  %v863 = vld [vmem:[#allocation4] sm:$0xf]
  %v864 = vld [vmem:[#allocation4 + $0x4] sm:$0xf]
  %v865 = vld [vmem:[#allocation4 + $0x8] sm:$0xf]
  %v866 = vld [vmem:[#allocation4 + $0xc] sm:$0xf]
  %v867 = vld [vmem:[#allocation4 + $0x10] sm:$0xf]
  %v868 = vld [vmem:[#allocation4 + $0x14] sm:$0xf]
  %v869 = vld [vmem:[#allocation4 + $0x18] sm:$0xf]
  %v870 = vld [vmem:[#allocation4 + $0x1c] sm:$0xf]
  %v871 = vld [vmem:[#allocation4 + $0x20] sm:$0xf]
  %v872 = vld [vmem:[#allocation4 + $0x24] sm:$0xf]
  %v873 = vld [vmem:[#allocation4 + $0x28] sm:$0xf]
  %v874 = vld [vmem:[#allocation4 + $0x2c] sm:$0xf]
  %v875 = vld [vmem:[#allocation4 + $0x30] sm:$0xf]
  %v876 = vld [vmem:[#allocation4 + $0x34] sm:$0xf]
  %v877 = vld [vmem:[#allocation4 + $0x38] sm:$0xf]
  %v878 = vld [vmem:[#allocation4 + $0x3c] sm:$0xf]
  %v879 = vunpack.c.l.bf16 %v863
  %v880 = vunpack.c.l.bf16 %v864
  %v881 = vunpack.c.l.bf16 %v865
  %v882 = vunpack.c.l.bf16 %v866
  %v883 = vunpack.c.l.bf16 %v867
  %v884 = vunpack.c.l.bf16 %v868
  %v885 = vunpack.c.l.bf16 %v869
  %v886 = vunpack.c.l.bf16 %v870
  %v887 = vunpack.c.l.bf16 %v871
  %v888 = vunpack.c.l.bf16 %v872
  %v889 = vunpack.c.l.bf16 %v873
  %v890 = vunpack.c.l.bf16 %v874
  %v891 = vunpack.c.l.bf16 %v875
  %v892 = vunpack.c.l.bf16 %v876
  %v893 = vunpack.c.l.bf16 %v877
  %v894 = vunpack.c.l.bf16 %v878
  %v895 = vmax.f32 %v879, %v847
  %v896 = vmax.f32 %v880, %v848
  %v897 = vmax.f32 %v881, %v849
  %v898 = vmax.f32 %v882, %v850
  %v899 = vmax.f32 %v883, %v851
  %v900 = vmax.f32 %v884, %v852
  %v901 = vmax.f32 %v885, %v853
  %v902 = vmax.f32 %v886, %v854
  %v903 = vmax.f32 %v887, %v855
  %v904 = vmax.f32 %v888, %v856
  %v905 = vmax.f32 %v889, %v857
  %v906 = vmax.f32 %v890, %v858
  %v907 = vmax.f32 %v891, %v859
  %v908 = vmax.f32 %v892, %v860
  %v909 = vmax.f32 %v893, %v861
  %v910 = vmax.f32 %v894, %v862
  %v911 = vpack.c.bf16 %v895, %v895
  %v912 = vpack.c.bf16 %v896, %v896
  %v913 = vpack.c.bf16 %v897, %v897
  %v914 = vpack.c.bf16 %v898, %v898
  %v915 = vpack.c.bf16 %v899, %v899
  %v916 = vpack.c.bf16 %v900, %v900
  %v917 = vpack.c.bf16 %v901, %v901
  %v918 = vpack.c.bf16 %v902, %v902
  %v919 = vpack.c.bf16 %v903, %v903
  %v920 = vpack.c.bf16 %v904, %v904
  %v921 = vpack.c.bf16 %v905, %v905
  %v922 = vpack.c.bf16 %v906, %v906
  %v923 = vpack.c.bf16 %v907, %v907
  %v924 = vpack.c.bf16 %v908, %v908
  %v925 = vpack.c.bf16 %v909, %v909
  %v926 = vpack.c.bf16 %v910, %v910
  %vm927 = vcmask 3072
  %928 = vst.msk [vmem:[#allocation4] sm:$0xf] %vm927, %v911
  %929 = vst.msk [vmem:[#allocation4 + $0x4] sm:$0xf] %vm927, %v912
  %930 = vst.msk [vmem:[#allocation4 + $0x8] sm:$0xf] %vm927, %v913
  %931 = vst.msk [vmem:[#allocation4 + $0xc] sm:$0xf] %vm927, %v914
  %932 = vst.msk [vmem:[#allocation4 + $0x10] sm:$0xf] %vm927, %v915
  %933 = vst.msk [vmem:[#allocation4 + $0x14] sm:$0xf] %vm927, %v916
  %934 = vst.msk [vmem:[#allocation4 + $0x18] sm:$0xf] %vm927, %v917
  %935 = vst.msk [vmem:[#allocation4 + $0x1c] sm:$0xf] %vm927, %v918
  %936 = vst.msk [vmem:[#allocation4 + $0x20] sm:$0xf] %vm927, %v919
  %937 = vst.msk [vmem:[#allocation4 + $0x24] sm:$0xf] %vm927, %v920
  %938 = vst.msk [vmem:[#allocation4 + $0x28] sm:$0xf] %vm927, %v921
  %939 = vst.msk [vmem:[#allocation4 + $0x2c] sm:$0xf] %vm927, %v922
  %940 = vst.msk [vmem:[#allocation4 + $0x30] sm:$0xf] %vm927, %v923
  %941 = vst.msk [vmem:[#allocation4 + $0x34] sm:$0xf] %vm927, %v924
  %942 = vst.msk [vmem:[#allocation4 + $0x38] sm:$0xf] %vm927, %v925
  %943 = vst.msk [vmem:[#allocation4 + $0x3c] sm:$0xf] %vm927, %v926
  %v944 = vunpack.c.l.bf16 %v911
  %v945 = vunpack.c.l.bf16 %v912
  %v946 = vunpack.c.l.bf16 %v913
  %v947 = vunpack.c.l.bf16 %v914
  %v948 = vunpack.c.l.bf16 %v915
  %v949 = vunpack.c.l.bf16 %v916
  %v950 = vunpack.c.l.bf16 %v917
  %v951 = vunpack.c.l.bf16 %v918
  %v952 = vunpack.c.l.bf16 %v919
  %v953 = vunpack.c.l.bf16 %v920
  %v954 = vunpack.c.l.bf16 %v921
  %v955 = vunpack.c.l.bf16 %v922
  %v956 = vunpack.c.l.bf16 %v923
  %v957 = vunpack.c.l.bf16 %v924
  %v958 = vunpack.c.l.bf16 %v925
  %v959 = vunpack.c.l.bf16 %v926
  %v960 = vsub.f32 %v879, %v944
  %v961 = vsub.f32 %v880, %v945
  %v962 = vsub.f32 %v881, %v946
  %v963 = vsub.f32 %v882, %v947
  %v964 = vsub.f32 %v883, %v948
  %v965 = vsub.f32 %v884, %v949
  %v966 = vsub.f32 %v885, %v950
  %v967 = vsub.f32 %v886, %v951
  %v968 = vsub.f32 %v887, %v952
  %v969 = vsub.f32 %v888, %v953
  %v970 = vsub.f32 %v889, %v954
  %v971 = vsub.f32 %v890, %v955
  %v972 = vsub.f32 %v891, %v956
  %v973 = vsub.f32 %v892, %v957
  %v974 = vsub.f32 %v893, %v958
  %v975 = vsub.f32 %v894, %v959
  %v976 = vmax.f32 %v960, -100.0
  %v977 = vmax.f32 %v961, -100.0
  %v978 = vmax.f32 %v962, -100.0
  %v979 = vmax.f32 %v963, -100.0
  %v980 = vmax.f32 %v964, -100.0
  %v981 = vmax.f32 %v965, -100.0
  %v982 = vmax.f32 %v966, -100.0
  %v983 = vmax.f32 %v967, -100.0
  %v984 = vmax.f32 %v968, -100.0
  %v985 = vmax.f32 %v969, -100.0
  %v986 = vmax.f32 %v970, -100.0
  %v987 = vmax.f32 %v971, -100.0
  %v988 = vmax.f32 %v972, -100.0
  %v989 = vmax.f32 %v973, -100.0
  %v990 = vmax.f32 %v974, -100.0
  %v991 = vmax.f32 %v975, -100.0
  %v992 = vmul.f32 %v976, 1.442695
  %v993 = vpow.pop %v992
  %v994 = vmul.f32 %v977, 1.442695
  %v995 = vpow.pop %v994
  %v996 = vmul.f32 %v978, 1.442695
  %v997 = vpow.pop %v996
  %v998 = vmul.f32 %v979, 1.442695
  %v999 = vpow.pop %v998
  %v1000 = vmul.f32 %v980, 1.442695
  %v1001 = vpow.pop %v1000
  %v1002 = vmul.f32 %v981, 1.442695
  %v1003 = vpow.pop %v1002
  %v1004 = vmul.f32 %v982, 1.442695
  %v1005 = vpow.pop %v1004
  %v1006 = vmul.f32 %v983, 1.442695
  %v1007 = vpow.pop %v1006
  %v1008 = vmul.f32 %v984, 1.442695
  %v1009 = vpow.pop %v1008
  %v1010 = vmul.f32 %v985, 1.442695
  %v1011 = vpow.pop %v1010
  %v1012 = vmul.f32 %v986, 1.442695
  %v1013 = vpow.pop %v1012
  %v1014 = vmul.f32 %v987, 1.442695
  %v1015 = vpow.pop %v1014
  %v1016 = vmul.f32 %v988, 1.442695
  %v1017 = vpow.pop %v1016
  %v1018 = vmul.f32 %v989, 1.442695
  %v1019 = vpow.pop %v1018
  %v1020 = vmul.f32 %v990, 1.442695
  %v1021 = vpow.pop %v1020
  %v1022 = vmul.f32 %v991, 1.442695
  %v1023 = vpow.pop %v1022
  %v1040 = vunpack.c.l.b16 %v911
  %v1041 = vunpack.c.l.b16 %v912
  %v1042 = vunpack.c.l.b16 %v913
  %v1043 = vunpack.c.l.b16 %v914
  %v1044 = vunpack.c.l.b16 %v915
  %v1045 = vunpack.c.l.b16 %v916
  %v1046 = vunpack.c.l.b16 %v917
  %v1047 = vunpack.c.l.b16 %v918
  %v1048 = vunpack.c.l.b16 %v919
  %v1049 = vunpack.c.l.b16 %v920
  %v1050 = vunpack.c.l.b16 %v921
  %v1051 = vunpack.c.l.b16 %v922
  %v1052 = vunpack.c.l.b16 %v923
  %v1053 = vunpack.c.l.b16 %v924
  %v1054 = vunpack.c.l.b16 %v925
  %v1055 = vunpack.c.l.b16 %v926
  %v1056 = vpack.c.b16 %v1041, %v1040
  %v1057 = vpack.c.b16 %v1043, %v1042
  %v1058 = vpack.c.b16 %v1045, %v1044
  %v1059 = vpack.c.b16 %v1047, %v1046
  %v1060 = vpack.c.b16 %v1049, %v1048
  %v1061 = vpack.c.b16 %v1051, %v1050
  %v1062 = vpack.c.b16 %v1053, %v1052
  %v1063 = vpack.c.b16 %v1055, %v1054
  %1072 = vmatpush.bf16.msra.mxu0 %v1063
  %1073 = vmatpush.bf16.msra.mxu0 %v1062
  %1074 = vmatpush.bf16.msra.mxu0 %v1061
  %1075 = vmatpush.bf16.msra.mxu0 %v1060
  %1076 = vmatpush.bf16.msra.mxu0 %v1059
  %1077 = vmatpush.bf16.msra.mxu0 %v1058
  %1078 = vmatpush.bf16.msra.mxu0 %v1057
  %1079 = vmatpush.bf16.msra.mxu0 %v1056
  %1080 = vmatmul.bf16.gmra.mxu0 %v613
  %v1081 = vpop.f32.mrf.mxu0
  %v1082 = vadd.f32 0.0, %v1081
  %v1083 = vpop.f32.mrf.mxu0
  %v1084 = vadd.f32 0.0, %v1083
  %1085 = vmatmul.bf16.gmra.mxu0 %v614
  %v1086 = vpop.f32.mrf.mxu0
  %v1087 = vadd.f32 0.0, %v1086
  %v1088 = vpop.f32.mrf.mxu0
  %v1089 = vadd.f32 0.0, %v1088
  %1090 = vmatmul.bf16.gmra.mxu0 %v615
  %v1091 = vpop.f32.mrf.mxu0
  %v1092 = vadd.f32 0.0, %v1091
  %v1093 = vpop.f32.mrf.mxu0
  %v1094 = vadd.f32 0.0, %v1093
  %1095 = vdwg.mxu0
  %1102 = vrot.lane.b32.xlu0 %v1082, 33
  %v1103 = vpop.permute.xlu0 %1102
  %1104 = vrot.lane.b32.xlu0 %v1084, 33
  %v1105 = vpop.permute.xlu0 %1104
  %1106 = vrot.lane.b32.xlu0 %v1087, 33
  %v1107 = vpop.permute.xlu0 %1106
  %1108 = vrot.lane.b32.xlu0 %v1089, 33
  %v1109 = vpop.permute.xlu0 %1108
  %1110 = vrot.lane.b32.xlu0 %v1092, 33
  %v1111 = vpop.permute.xlu0 %1110
  %1112 = vrot.lane.b32.xlu0 %v1094, 33
  %v1113 = vpop.permute.xlu0 %1112
  %v1120 = vsub.f32 %v766, %v1103
  %v1121 = vsub.f32 %v767, %v1105
  %v1122 = vsub.f32 %v768, %v1107
  %v1123 = vsub.f32 %v769, %v1109
  %v1124 = vsub.f32 %v770, %v1111
  %v1125 = vsub.f32 %v771, %v1113
  %v1126 = vmul.f32 %v1120, 1.442695
  %v1127 = vpow.pop %v1126
  %v1128 = vmul.f32 %v1121, 1.442695
  %v1129 = vpow.pop %v1128
  %v1130 = vmul.f32 %v1122, 1.442695
  %v1131 = vpow.pop %v1130
  %v1132 = vmul.f32 %v1123, 1.442695
  %v1133 = vpow.pop %v1132
  %v1134 = vmul.f32 %v1124, 1.442695
  %v1135 = vpow.pop %v1134
  %v1136 = vmul.f32 %v1125, 1.442695
  %v1137 = vpow.pop %v1136
  %1139 = vset.pattern.permute.xlu0 33
  %1140 = vperm.xlu0 %1139, %v1127
  %v1141 = vpop.permute.xlu0 %1140
  %1144 = vset.pattern.permute.xlu0 33
  %1145 = vperm.xlu0 %1144, %v1129
  %v1146 = vpop.permute.xlu0 %1145
  %1149 = vset.pattern.permute.xlu0 33
  %1150 = vperm.xlu0 %1149, %v1131
  %v1151 = vpop.permute.xlu0 %1150
  %1154 = vset.pattern.permute.xlu0 33
  %1155 = vperm.xlu0 %1154, %v1133
  %v1156 = vpop.permute.xlu0 %1155
  %1159 = vset.pattern.permute.xlu0 33
  %1160 = vperm.xlu0 %1159, %v1135
  %v1161 = vpop.permute.xlu0 %1160
  %1164 = vset.pattern.permute.xlu0 33
  %1165 = vperm.xlu0 %1164, %v1137
  %v1166 = vpop.permute.xlu0 %1165
  %v1168 = vmul.f32 %v1141, %v571
  %v1169 = vmul.f32 %v1146, %v573
  %v1170 = vmul.f32 %v1151, %v576
  %v1171 = vmul.f32 %v1156, %v578
  %v1172 = vmul.f32 %v1161, %v581
  %v1173 = vmul.f32 %v1166, %v583
  %v1174 = vpack.c.bf16 %v1169, %v1168
  %v1175 = vpack.c.bf16 %v1171, %v1170
  %v1176 = vpack.c.bf16 %v1173, %v1172
  %1177 = vxpose.xlu0.c.b16.start [1/8] %v613, 128
  %1178 = vxpose.xlu0.c.b16.cont [2/8] %v614, 128
  %1179 = vxpose.xlu0.c.b16.cont [3/8] %v615, 128
  %1180 = vxpose.xlu0.c.b16.cont [4/8] 0, 128
  %1181 = vxpose.xlu0.c.b16.cont [5/8] 0, 128
  %1182 = vxpose.xlu0.c.b16.cont [6/8] 0, 128
  %1183 = vxpose.xlu0.c.b16.cont [7/8] 0, 128
  %1184 = vxpose.xlu0.c.b16.end [8/8] 0, 128
  %v1185 = vpop.trf.xlu0
  %v1186 = vpop.trf.xlu0
  %v1187 = vpop.trf.xlu0
  %v1188 = vpop.trf.xlu0
  %v1189 = vpop.trf.xlu0
  %v1190 = vpop.trf.xlu0
  %v1191 = vpop.trf.xlu0
  %v1192 = vpop.trf.xlu0
  %vm1193 = vcmask 392192
  %v1195 = vsel %vm1193, %v1185, 0
  %v1198 = vsel %vm1193, %v1186, 0
  %v1201 = vsel %vm1193, %v1187, 0
  %v1204 = vsel %vm1193, %v1188, 0
  %v1207 = vsel %vm1193, %v1189, 0
  %v1210 = vsel %vm1193, %v1190, 0
  %v1213 = vsel %vm1193, %v1191, 0
  %v1216 = vsel %vm1193, %v1192, 0
  %1218 = vmatpush.bf16.msra.mxu0 0
  %1219 = vmatpush.bf16.msra.mxu0 0
  %1220 = vmatpush.bf16.msra.mxu0 0
  %1221 = vmatpush.bf16.msra.mxu0 0
  %1222 = vmatpush.bf16.msra.mxu0 0
  %1223 = vmatpush.bf16.msra.mxu0 %v1176
  %1224 = vmatpush.bf16.msra.mxu0 %v1175
  %1225 = vmatpush.bf16.msra.mxu0 %v1174
  %1226 = vmatmul.bf16.gmra.mxu0 %v1195
  %v1227 = vpop.f32.mrf.mxu0
  %v1228 = vadd.f32 0.0, %v1227
  %v1229 = vpop.f32.mrf.mxu0
  %v1230 = vadd.f32 0.0, %v1229
  %1231 = vmatmul.bf16.gmra.mxu0 %v1198
  %v1232 = vpop.f32.mrf.mxu0
  %v1233 = vadd.f32 0.0, %v1232
  %v1234 = vpop.f32.mrf.mxu0
  %v1235 = vadd.f32 0.0, %v1234
  %1236 = vmatmul.bf16.gmra.mxu0 %v1201
  %v1237 = vpop.f32.mrf.mxu0
  %v1238 = vadd.f32 0.0, %v1237
  %v1239 = vpop.f32.mrf.mxu0
  %v1240 = vadd.f32 0.0, %v1239
  %1241 = vmatmul.bf16.gmra.mxu0 %v1204
  %v1242 = vpop.f32.mrf.mxu0
  %v1243 = vadd.f32 0.0, %v1242
  %v1244 = vpop.f32.mrf.mxu0
  %v1245 = vadd.f32 0.0, %v1244
  %1246 = vmatmul.bf16.gmra.mxu0 %v1207
  %v1247 = vpop.f32.mrf.mxu0
  %v1248 = vadd.f32 0.0, %v1247
  %v1249 = vpop.f32.mrf.mxu0
  %v1250 = vadd.f32 0.0, %v1249
  %1251 = vmatmul.bf16.gmra.mxu0 %v1210
  %v1252 = vpop.f32.mrf.mxu0
  %v1253 = vadd.f32 0.0, %v1252
  %v1254 = vpop.f32.mrf.mxu0
  %v1255 = vadd.f32 0.0, %v1254
  %1256 = vmatmul.bf16.gmra.mxu0 %v1213
  %v1257 = vpop.f32.mrf.mxu0
  %v1258 = vadd.f32 0.0, %v1257
  %v1259 = vpop.f32.mrf.mxu0
  %v1260 = vadd.f32 0.0, %v1259
  %1261 = vmatmul.bf16.gmra.mxu0 %v1216
  %v1262 = vpop.f32.mrf.mxu0
  %v1263 = vadd.f32 0.0, %v1262
  %v1264 = vpop.f32.mrf.mxu0
  %v1265 = vadd.f32 0.0, %v1264
  %1266 = vdwg.mxu0
  %v1267 = vld [vmem:[#allocation5] sm:$0xff]
  %v1268 = vld [vmem:[#allocation5 + $0x8] sm:$0xff]
  %v1269 = vld [vmem:[#allocation5 + $0x10] sm:$0xff]
  %v1270 = vld [vmem:[#allocation5 + $0x18] sm:$0xff]
  %v1271 = vld [vmem:[#allocation5 + $0x20] sm:$0xff]
  %v1272 = vld [vmem:[#allocation5 + $0x28] sm:$0xff]
  %v1273 = vld [vmem:[#allocation5 + $0x30] sm:$0xff]
  %v1274 = vld [vmem:[#allocation5 + $0x38] sm:$0xff]
  %v1275 = vld [vmem:[#allocation5 + $0x40] sm:$0xff]
  %v1276 = vld [vmem:[#allocation5 + $0x48] sm:$0xff]
  %v1277 = vld [vmem:[#allocation5 + $0x50] sm:$0xff]
  %v1278 = vld [vmem:[#allocation5 + $0x58] sm:$0xff]
  %v1279 = vld [vmem:[#allocation5 + $0x60] sm:$0xff]
  %v1280 = vld [vmem:[#allocation5 + $0x68] sm:$0xff]
  %v1281 = vld [vmem:[#allocation5 + $0x70] sm:$0xff]
  %v1282 = vld [vmem:[#allocation5 + $0x78] sm:$0xff]
  %1284 = vset.pattern.permute.xlu0 0
  %1285 = vperm.xlu0 %1284, %v993
  %v1286 = vpop.permute.xlu0 %1285
  %1289 = vset.pattern.permute.xlu0 0
  %1290 = vperm.xlu0 %1289, %v995
  %v1291 = vpop.permute.xlu0 %1290
  %1294 = vset.pattern.permute.xlu0 0
  %1295 = vperm.xlu0 %1294, %v997
  %v1296 = vpop.permute.xlu0 %1295
  %1299 = vset.pattern.permute.xlu0 0
  %1300 = vperm.xlu0 %1299, %v999
  %v1301 = vpop.permute.xlu0 %1300
  %1304 = vset.pattern.permute.xlu0 0
  %1305 = vperm.xlu0 %1304, %v1001
  %v1306 = vpop.permute.xlu0 %1305
  %1309 = vset.pattern.permute.xlu0 0
  %1310 = vperm.xlu0 %1309, %v1003
  %v1311 = vpop.permute.xlu0 %1310
  %1314 = vset.pattern.permute.xlu0 0
  %1315 = vperm.xlu0 %1314, %v1005
  %v1316 = vpop.permute.xlu0 %1315
  %1319 = vset.pattern.permute.xlu0 0
  %1320 = vperm.xlu0 %1319, %v1007
  %v1321 = vpop.permute.xlu0 %1320
  %1324 = vset.pattern.permute.xlu0 0
  %1325 = vperm.xlu0 %1324, %v1009
  %v1326 = vpop.permute.xlu0 %1325
  %1329 = vset.pattern.permute.xlu0 0
  %1330 = vperm.xlu0 %1329, %v1011
  %v1331 = vpop.permute.xlu0 %1330
  %1334 = vset.pattern.permute.xlu0 0
  %1335 = vperm.xlu0 %1334, %v1013
  %v1336 = vpop.permute.xlu0 %1335
  %1339 = vset.pattern.permute.xlu0 0
  %1340 = vperm.xlu0 %1339, %v1015
  %v1341 = vpop.permute.xlu0 %1340
  %1344 = vset.pattern.permute.xlu0 0
  %1345 = vperm.xlu0 %1344, %v1017
  %v1346 = vpop.permute.xlu0 %1345
  %1349 = vset.pattern.permute.xlu0 0
  %1350 = vperm.xlu0 %1349, %v1019
  %v1351 = vpop.permute.xlu0 %1350
  %1354 = vset.pattern.permute.xlu0 0
  %1355 = vperm.xlu0 %1354, %v1021
  %v1356 = vpop.permute.xlu0 %1355
  %1359 = vset.pattern.permute.xlu0 0
  %1360 = vperm.xlu0 %1359, %v1023
  %v1361 = vpop.permute.xlu0 %1360
  %v1363 = vmul.f32 %v1267, %v1286
  %v1364 = vmul.f32 %v1268, %v1291
  %v1365 = vmul.f32 %v1269, %v1296
  %v1366 = vmul.f32 %v1270, %v1301
  %v1367 = vmul.f32 %v1271, %v1306
  %v1368 = vmul.f32 %v1272, %v1311
  %v1369 = vmul.f32 %v1273, %v1316
  %v1370 = vmul.f32 %v1274, %v1321
  %v1371 = vmul.f32 %v1275, %v1326
  %v1372 = vmul.f32 %v1276, %v1331
  %v1373 = vmul.f32 %v1277, %v1336
  %v1374 = vmul.f32 %v1278, %v1341
  %v1375 = vmul.f32 %v1279, %v1346
  %v1376 = vmul.f32 %v1280, %v1351
  %v1377 = vmul.f32 %v1281, %v1356
  %v1378 = vmul.f32 %v1282, %v1361
  %v1379 = vadd.f32 %v1363, %v1228
  %v1380 = vadd.f32 %v1364, %v1230
  %v1381 = vadd.f32 %v1365, %v1233
  %v1382 = vadd.f32 %v1366, %v1235
  %v1383 = vadd.f32 %v1367, %v1238
  %v1384 = vadd.f32 %v1368, %v1240
  %v1385 = vadd.f32 %v1369, %v1243
  %v1386 = vadd.f32 %v1370, %v1245
  %v1387 = vadd.f32 %v1371, %v1248
  %v1388 = vadd.f32 %v1372, %v1250
  %v1389 = vadd.f32 %v1373, %v1253
  %v1390 = vadd.f32 %v1374, %v1255
  %v1391 = vadd.f32 %v1375, %v1258
  %v1392 = vadd.f32 %v1376, %v1260
  %v1393 = vadd.f32 %v1377, %v1263
  %v1394 = vadd.f32 %v1378, %v1265
  %vm1395 = vcmask 269312
  %1396 = vst.msk [vmem:[#allocation5] sm:$0xff] %vm1395, %v1379
  %1397 = vst.msk [vmem:[#allocation5 + $0x8] sm:$0xff] %vm1395, %v1380
  %1398 = vst.msk [vmem:[#allocation5 + $0x10] sm:$0xff] %vm1395, %v1381
  %1399 = vst.msk [vmem:[#allocation5 + $0x18] sm:$0xff] %vm1395, %v1382
  %1400 = vst.msk [vmem:[#allocation5 + $0x20] sm:$0xff] %vm1395, %v1383
  %1401 = vst.msk [vmem:[#allocation5 + $0x28] sm:$0xff] %vm1395, %v1384
  %1402 = vst.msk [vmem:[#allocation5 + $0x30] sm:$0xff] %vm1395, %v1385
  %1403 = vst.msk [vmem:[#allocation5 + $0x38] sm:$0xff] %vm1395, %v1386
  %1404 = vst.msk [vmem:[#allocation5 + $0x40] sm:$0xff] %vm1395, %v1387
  %1405 = vst.msk [vmem:[#allocation5 + $0x48] sm:$0xff] %vm1395, %v1388
  %1406 = vst.msk [vmem:[#allocation5 + $0x50] sm:$0xff] %vm1395, %v1389
  %1407 = vst.msk [vmem:[#allocation5 + $0x58] sm:$0xff] %vm1395, %v1390
  %1408 = vst.msk [vmem:[#allocation5 + $0x60] sm:$0xff] %vm1395, %v1391
  %1409 = vst.msk [vmem:[#allocation5 + $0x68] sm:$0xff] %vm1395, %v1392
  %1410 = vst.msk [vmem:[#allocation5 + $0x70] sm:$0xff] %vm1395, %v1393
  %1411 = vst.msk [vmem:[#allocation5 + $0x78] sm:$0xff] %vm1395, %v1394
  // Predicated region
  $region42: #{gat_model_forward.7} parent=0 // pred_check
    %p1412 = pneg %p37
  $region43: #{gat_model_forward.7} parent=0 // pred_check_branch
    %1414 = sbr.rel (%p1412) target = $region45
  $region44: #{gat_model_forward.7} parent=0 // pred_region
    %v1415 = vld [vmem:[#allocation5] sm:$0xff]
    %v1416 = vld [vmem:[#allocation5 + $0x8] sm:$0xff]
    %v1417 = vld [vmem:[#allocation5 + $0x10] sm:$0xff]
    %v1418 = vld [vmem:[#allocation5 + $0x18] sm:$0xff]
    %v1419 = vld [vmem:[#allocation5 + $0x20] sm:$0xff]
    %v1420 = vld [vmem:[#allocation5 + $0x28] sm:$0xff]
    %v1421 = vld [vmem:[#allocation5 + $0x30] sm:$0xff]
    %v1422 = vld [vmem:[#allocation5 + $0x38] sm:$0xff]
    %v1423 = vld [vmem:[#allocation5 + $0x40] sm:$0xff]
    %v1424 = vld [vmem:[#allocation5 + $0x48] sm:$0xff]
    %v1425 = vld [vmem:[#allocation5 + $0x50] sm:$0xff]
    %v1426 = vld [vmem:[#allocation5 + $0x58] sm:$0xff]
    %v1427 = vld [vmem:[#allocation5 + $0x60] sm:$0xff]
    %v1428 = vld [vmem:[#allocation5 + $0x68] sm:$0xff]
    %v1429 = vld [vmem:[#allocation5 + $0x70] sm:$0xff]
    %v1430 = vld [vmem:[#allocation5 + $0x78] sm:$0xff]
    %v1431 = vadd.f32 %v1415, 1e-09
    %v1432 = vadd.f32 %v1416, 1e-09
    %v1433 = vadd.f32 %v1417, 1e-09
    %v1434 = vadd.f32 %v1418, 1e-09
    %v1435 = vadd.f32 %v1419, 1e-09
    %v1436 = vadd.f32 %v1420, 1e-09
    %v1437 = vadd.f32 %v1421, 1e-09
    %v1438 = vadd.f32 %v1422, 1e-09
    %v1439 = vadd.f32 %v1423, 1e-09
    %v1440 = vadd.f32 %v1424, 1e-09
    %v1441 = vadd.f32 %v1425, 1e-09
    %v1442 = vadd.f32 %v1426, 1e-09
    %v1443 = vadd.f32 %v1427, 1e-09
    %v1444 = vadd.f32 %v1428, 1e-09
    %v1445 = vadd.f32 %v1429, 1e-09
    %v1446 = vadd.f32 %v1430, 1e-09
    %v1447 = vrcp.pop %v1431
    %v1448 = vrcp.pop %v1432
    %v1449 = vrcp.pop %v1433
    %v1450 = vrcp.pop %v1434
    %v1451 = vrcp.pop %v1435
    %v1452 = vrcp.pop %v1436
    %v1453 = vrcp.pop %v1437
    %v1454 = vrcp.pop %v1438
    %v1455 = vrcp.pop %v1439
    %v1456 = vrcp.pop %v1440
    %v1457 = vrcp.pop %v1441
    %v1458 = vrcp.pop %v1442
    %v1459 = vrcp.pop %v1443
    %v1460 = vrcp.pop %v1444
    %v1461 = vrcp.pop %v1445
    %v1462 = vrcp.pop %v1446
    %1464 = vset.pattern.permute.xlu0 32
    %1465 = vperm.xlu0 %1464, %v1447
    %v1466 = vpop.permute.xlu0 %1465
    %1469 = vset.pattern.permute.xlu0 32
    %1470 = vperm.xlu0 %1469, %v1448
    %v1471 = vpop.permute.xlu0 %1470
    %1474 = vset.pattern.permute.xlu0 32
    %1475 = vperm.xlu0 %1474, %v1449
    %v1476 = vpop.permute.xlu0 %1475
    %1479 = vset.pattern.permute.xlu0 32
    %1480 = vperm.xlu0 %1479, %v1450
    %v1481 = vpop.permute.xlu0 %1480
    %1484 = vset.pattern.permute.xlu0 32
    %1485 = vperm.xlu0 %1484, %v1451
    %v1486 = vpop.permute.xlu0 %1485
    %1489 = vset.pattern.permute.xlu0 32
    %1490 = vperm.xlu0 %1489, %v1452
    %v1491 = vpop.permute.xlu0 %1490
    %1494 = vset.pattern.permute.xlu0 32
    %1495 = vperm.xlu0 %1494, %v1453
    %v1496 = vpop.permute.xlu0 %1495
    %1499 = vset.pattern.permute.xlu0 32
    %1500 = vperm.xlu0 %1499, %v1454
    %v1501 = vpop.permute.xlu0 %1500
    %1504 = vset.pattern.permute.xlu0 32
    %1505 = vperm.xlu0 %1504, %v1455
    %v1506 = vpop.permute.xlu0 %1505
    %1509 = vset.pattern.permute.xlu0 32
    %1510 = vperm.xlu0 %1509, %v1456
    %v1511 = vpop.permute.xlu0 %1510
    %1514 = vset.pattern.permute.xlu0 32
    %1515 = vperm.xlu0 %1514, %v1457
    %v1516 = vpop.permute.xlu0 %1515
    %1519 = vset.pattern.permute.xlu0 32
    %1520 = vperm.xlu0 %1519, %v1458
    %v1521 = vpop.permute.xlu0 %1520
    %1524 = vset.pattern.permute.xlu0 32
    %1525 = vperm.xlu0 %1524, %v1459
    %v1526 = vpop.permute.xlu0 %1525
    %1529 = vset.pattern.permute.xlu0 32
    %1530 = vperm.xlu0 %1529, %v1460
    %v1531 = vpop.permute.xlu0 %1530
    %1534 = vset.pattern.permute.xlu0 32
    %1535 = vperm.xlu0 %1534, %v1461
    %v1536 = vpop.permute.xlu0 %1535
    %1539 = vset.pattern.permute.xlu0 32
    %1540 = vperm.xlu0 %1539, %v1462
    %v1541 = vpop.permute.xlu0 %1540
    %v1543 = vmul.f32 %v1415, %v1466
    %v1544 = vmul.f32 %v1416, %v1471
    %v1545 = vmul.f32 %v1417, %v1476
    %v1546 = vmul.f32 %v1418, %v1481
    %v1547 = vmul.f32 %v1419, %v1486
    %v1548 = vmul.f32 %v1420, %v1491
    %v1549 = vmul.f32 %v1421, %v1496
    %v1550 = vmul.f32 %v1422, %v1501
    %v1551 = vmul.f32 %v1423, %v1506
    %v1552 = vmul.f32 %v1424, %v1511
    %v1553 = vmul.f32 %v1425, %v1516
    %v1554 = vmul.f32 %v1426, %v1521
    %v1555 = vmul.f32 %v1427, %v1526
    %v1556 = vmul.f32 %v1428, %v1531
    %v1557 = vmul.f32 %v1429, %v1536
    %v1558 = vmul.f32 %v1430, %v1541
    %v1559 = vld [vmem:[%s0] sm:$0xff]
    %v1560 = vld [vmem:[%s0 + $0x8] sm:$0xff]
    %v1561 = vld [vmem:[%s0 + $0x10] sm:$0xff]
    %v1562 = vld [vmem:[%s0 + $0x18] sm:$0xff]
    %v1563 = vld [vmem:[%s0 + $0x20] sm:$0xff]
    %v1564 = vld [vmem:[%s0 + $0x28] sm:$0xff]
    %v1565 = vld [vmem:[%s0 + $0x30] sm:$0xff]
    %v1566 = vld [vmem:[%s0 + $0x38] sm:$0xff]
    %v1567 = vld [vmem:[%s0 + $0x40] sm:$0xff]
    %v1568 = vld [vmem:[%s0 + $0x48] sm:$0xff]
    %v1569 = vld [vmem:[%s0 + $0x50] sm:$0xff]
    %v1570 = vld [vmem:[%s0 + $0x58] sm:$0xff]
    %v1571 = vld [vmem:[%s0 + $0x60] sm:$0xff]
    %v1572 = vld [vmem:[%s0 + $0x68] sm:$0xff]
    %v1573 = vld [vmem:[%s0 + $0x70] sm:$0xff]
    %v1574 = vld [vmem:[%s0 + $0x78] sm:$0xff]
    %v1575 = vadd.f32 %v1559, %v1543
    %v1576 = vadd.f32 %v1560, %v1544
    %v1577 = vadd.f32 %v1561, %v1545
    %v1578 = vadd.f32 %v1562, %v1546
    %v1579 = vadd.f32 %v1563, %v1547
    %v1580 = vadd.f32 %v1564, %v1548
    %v1581 = vadd.f32 %v1565, %v1549
    %v1582 = vadd.f32 %v1566, %v1550
    %v1583 = vadd.f32 %v1567, %v1551
    %v1584 = vadd.f32 %v1568, %v1552
    %v1585 = vadd.f32 %v1569, %v1553
    %v1586 = vadd.f32 %v1570, %v1554
    %v1587 = vadd.f32 %v1571, %v1555
    %v1588 = vadd.f32 %v1572, %v1556
    %v1589 = vadd.f32 %v1573, %v1557
    %v1590 = vadd.f32 %v1574, %v1558
    %v1591 = vmax.f32 %v1575, 0.0
    %v1592 = vmax.f32 %v1576, 0.0
    %v1593 = vmax.f32 %v1577, 0.0
    %v1594 = vmax.f32 %v1578, 0.0
    %v1595 = vmax.f32 %v1579, 0.0
    %v1596 = vmax.f32 %v1580, 0.0
    %v1597 = vmax.f32 %v1581, 0.0
    %v1598 = vmax.f32 %v1582, 0.0
    %v1599 = vmax.f32 %v1583, 0.0
    %v1600 = vmax.f32 %v1584, 0.0
    %v1601 = vmax.f32 %v1585, 0.0
    %v1602 = vmax.f32 %v1586, 0.0
    %v1603 = vmax.f32 %v1587, 0.0
    %v1604 = vmax.f32 %v1588, 0.0
    %v1605 = vmax.f32 %v1589, 0.0
    %v1606 = vmax.f32 %v1590, 0.0
    %1607 = vst.msk [vmem:[%s9] sm:$0xff] %vm407, %v1591
    %1608 = vst.msk [vmem:[%s9 + $0x8] sm:$0xff] %vm407, %v1592
    %1609 = vst.msk [vmem:[%s9 + $0x10] sm:$0xff] %vm407, %v1593
    %1610 = vst.msk [vmem:[%s9 + $0x18] sm:$0xff] %vm407, %v1594
    %1611 = vst.msk [vmem:[%s9 + $0x20] sm:$0xff] %vm407, %v1595
    %1612 = vst.msk [vmem:[%s9 + $0x28] sm:$0xff] %vm407, %v1596
    %1613 = vst.msk [vmem:[%s9 + $0x30] sm:$0xff] %vm407, %v1597
    %1614 = vst.msk [vmem:[%s9 + $0x38] sm:$0xff] %vm407, %v1598
    %1615 = vst.msk [vmem:[%s9 + $0x40] sm:$0xff] %vm407, %v1599
    %1616 = vst.msk [vmem:[%s9 + $0x48] sm:$0xff] %vm407, %v1600
    %1617 = vst.msk [vmem:[%s9 + $0x50] sm:$0xff] %vm407, %v1601
    %1618 = vst.msk [vmem:[%s9 + $0x58] sm:$0xff] %vm407, %v1602
    %1619 = vst.msk [vmem:[%s9 + $0x60] sm:$0xff] %vm407, %v1603
    %1620 = vst.msk [vmem:[%s9 + $0x68] sm:$0xff] %vm407, %v1604
    %1621 = vst.msk [vmem:[%s9 + $0x70] sm:$0xff] %vm407, %v1605
    %1622 = vst.msk [vmem:[%s9 + $0x78] sm:$0xff] %vm407, %v1606
  $region45: #{gat_model_forward.7} parent=0 // pred_fallthru
    _
  // Predicated region
  $region46: #{gat_model_forward.7} parent=0 // pred_check
    _
  $region47: #{gat_model_forward.7} parent=0 // pred_check_branch
    %1624 = sbr.rel (0) target = $region49
  $region48: #{gat_model_forward.7} parent=0 // pred_region
    _
  $region49: #{gat_model_forward.7} parent=0 // pred_fallthru
    _
  // Predicated region
  $region50: #{gat_model_forward.7} parent=0 // pred_check
    _
  $region51: #{gat_model_forward.7} parent=0 // pred_check_branch
    %1626 = sbr.rel (0) target = $region53
  $region52: #{gat_model_forward.7} parent=0 // pred_region
    _
  $region53: #{gat_model_forward.7} parent=0 // pred_fallthru
    _
  // Predicated region
  $region54: #{gat_model_forward.7} parent=0 // pred_check
    _
  $region55: #{gat_model_forward.7} parent=0 // pred_check_branch
    %1628 = sbr.rel (0) target = $region57
  $region56: #{gat_model_forward.7} parent=0 // pred_region
    _
  $region57: #{gat_model_forward.7} parent=0 // pred_fallthru
    _
  // Predicated region
  $region58: #{gat_model_forward.7} parent=0 // pred_check
    _
  $region59: #{gat_model_forward.7} parent=0 // pred_check_branch
    %1630 = sbr.rel (0) target = $region61
  $region60: #{gat_model_forward.7} parent=0 // pred_region
    _
  $region61: #{gat_model_forward.7} parent=0 // pred_fallthru
    _

</llo_original>
